<compile_context>
chip_gen: v6e
topology: v6e:2x2x1
jax: 0.10.0
libtpu: 0.0.40
codegen_flags: <defaults>
</compile_context>

<pallas_src>
import functools
import numpy as np
import jax
import jax.numpy as jnp
from jax import lax
from jax.experimental import pallas as pl
from jax.experimental.pallas import tpu as pltpu


# ----------------------------------------------------------------------------
# Single fused Pallas kernel (per-batch grid step)
# ----------------------------------------------------------------------------
def _ffm_kernel(xlo_ref, xhi_ref, att_ref,
                ubig_ref, wdw_ref, bdw_ref, w1_ref, b1_ref, w2_ref, b2_ref,
                whr_ref, bhr_ref, wq_ref, wkv_ref, pool_ref, wmask_ref,
                y_ref, out_scr, *, hw, c_hi, c_int):
    f32, bf16 = jnp.float32, jnp.bfloat16
    half = hw // 2

    # ---- lower branch: upsample x4 + zero-pad + depthwise 3x3 folded into ONE
    #      matmul (u_big carries the bilinear + halo structure; w_dw carries the
    #      per-channel depthwise weights, BN scale folded). ----
    xlo = xlo_ref[0]                                        # (16, 128) f32
    x2 = (xlo[None, :, :] * wdw_ref[...])                   # (9, 16, 128) f32
    x2 = x2.reshape(9 * xlo.shape[0], xlo.shape[1])         # (144, 128)
    dw = jnp.dot(ubig_ref[...], x2.astype(bf16),
                 preferred_element_type=f32)                # (HW, 128)
    y = jnp.maximum(dw + bdw_ref[...], 0.0)                 # dw3x3 + BN + ReLU
    y = jnp.maximum(jnp.dot(y.astype(bf16), w1_ref[...],
                            preferred_element_type=f32) + b1_ref[...], 0.0)
    low = jnp.dot(y.astype(bf16), w2_ref[...],
                  preferred_element_type=f32) + b2_ref[...]  # (HW, 64), BN only

    # ---- conv_higher_res + cat([attention_feature, lower]) + residual add ----
    hi = jnp.dot(xhi_ref[0].astype(bf16), whr_ref[...],
                 preferred_element_type=f32) + bhr_ref[...]  # (HW, 128)
    out_scr[:, :c_hi] = hi[:, :c_hi] + att_ref[0]
    out_scr[:, c_hi:] = hi[:, c_hi:] + low

    # ---- non-local block: the NCHW .view(b, c, -1) quirk is folded into pixel
    #      space (top/bottom pixel halves vs even/odd pooled halves).  Pooling
    #      (bias-free 1x1 convs) is commuted in front of W_kv (exact). ----
    out_bf = out_scr[...].astype(bf16)                        # (HW, 128), K=128
    q = jnp.dot(out_bf, wq_ref[...], preferred_element_type=f32)          # (HW, 64)
    out_pool = jnp.dot(pool_ref[...], out_bf, preferred_element_type=f32)  # (64, 128)
    kv_pool = jnp.dot(out_pool.astype(bf16), wkv_ref[...],
                      preferred_element_type=f32)             # (64, 128)
    k_pool, v_pool = kv_pool[:, :c_int], kv_pool[:, c_int:]
    mh = kv_pool.shape[0] // 2                                # 32
    dn = (((1,), (1,)), ((), ()))                             # A @ B.T
    s = (lax.dot_general(q[:half].astype(bf16), k_pool[:mh].astype(bf16), dn,
                         preferred_element_type=f32) +
         lax.dot_general(q[half:].astype(bf16), k_pool[mh:].astype(bf16), dn,
                         preferred_element_type=f32))         # (half, 32)
    s = s - jnp.max(s, axis=0, keepdims=True)                 # softmax(dim=1)
    e = jnp.exp(s)
    prob = (e / jnp.sum(e, axis=0, keepdims=True)).astype(bf16)
    m_top = jnp.dot(prob, v_pool[:mh].astype(bf16), preferred_element_type=f32)
    m_bot = jnp.dot(prob, v_pool[mh:].astype(bf16), preferred_element_type=f32)

    # ---- conv_mask + residual + ReLU (lane-dense 128 stores) ----
    y_top = jnp.dot(m_top.astype(bf16), wmask_ref[...],
                    preferred_element_type=f32) + out_scr[:half, :]
    y_bot = jnp.dot(m_bot.astype(bf16), wmask_ref[...],
                    preferred_element_type=f32) + out_scr[half:, :]
    y_ref[0, :half, :] = jnp.maximum(y_top, 0.0).astype(y_ref.dtype)
    y_ref[0, half:, :] = jnp.maximum(y_bot, 0.0).astype(y_ref.dtype)


# ----------------------------------------------------------------------------
# Host-side structure matrices (upsample+pad+halo and adaptive 8x8 pool)
# ----------------------------------------------------------------------------
def _upsample_matrix(in_size, out_size):
    """Bilinear, align_corners=True (matches F.interpolate in the module)."""
    u = np.zeros((out_size, in_size), np.float32)
    if in_size == 1:
        u[:, 0] = 1.0
        return u
    for i in range(out_size):
        src = i * (in_size - 1) / (out_size - 1)
        f = int(np.floor(src))
        c = min(f + 1, in_size - 1)
        frac = src - f
        u[i, f] += 1.0 - frac
        u[i, c] += frac
    return u


@functools.lru_cache(maxsize=None)
def _structural_mats(h, w, h_lo, w_lo):
    uh = _upsample_matrix(h_lo, h)
    uw = _upsample_matrix(w_lo, w)
    u2 = np.einsum('ab,cd->acbd', uh, uw).reshape(h * w, h_lo * w_lo)
    q = h_lo * w_lo
    ubig = np.zeros((h * w, 9 * q), np.float32)   # taps of padded upsampled image
    for di in range(3):
        for dj in range(3):
            t = 3 * di + dj
            for hh in range(h):
                for ww in range(w):
                    hs, ws = hh + di - 1, ww + dj - 1
                    if 0 <= hs < h and 0 <= ws < w:
                        ubig[hh * w + ww, t * q:(t + 1) * q] = u2[hs * w + ws]
    pool = np.zeros((64, h * w), np.float32)      # AdaptiveAvgPool2d((8, 8))
    for ph in range(8):
        for pw in range(8):
            h0, h1 = (ph * h) // 8, ((ph + 1) * h + 7) // 8
            w0, w1 = (pw * w) // 8, ((pw + 1) * w + 7) // 8
            cnt = (h1 - h0) * (w1 - w0)
            for a in range(h0, h1):
                for b in range(w0, w1):
                    pool[ph * 8 + pw, a * w + b] = 1.0 / cnt
    return ubig, pool


# ----------------------------------------------------------------------------
# Pallas wrapper (single call, grid=(N,), "parallel")
# ----------------------------------------------------------------------------
def ffm_fused(x_low, x_high, att, p):
    n, h, w, c_hi = x_high.shape
    h_lo, w_lo, c_low = x_low.shape[1], x_low.shape[2], x_low.shape[3]
    hw = h * w
    c_out = p['w_hr'].shape[1]
    c_int = c_out // 2
    assert c_hi == c_int and c_low == c_out, "canonical FFM(64,128,128) config"

    ubig_np, pool_np = _structural_mats(h, w, h_lo, w_lo)
    u_big = jnp.asarray(ubig_np, jnp.bfloat16)      # (HW, 9*h_lo*w_lo)
    pool = jnp.asarray(pool_np, jnp.bfloat16)       # (64, HW)

    xlo3 = x_low.reshape(n, h_lo * w_lo, c_low)
    xhi3 = x_high.reshape(n, hw, c_hi)
    att3 = att.reshape(n, hw, c_hi)

    def wspec(a):
        return pl.BlockSpec(a.shape, lambda i, nd=a.ndim: (0,) * nd)

    def bspec(shape):
        return pl.BlockSpec((1,) + shape, lambda i, nd=len(shape): (i,) + (0,) * nd)

    weights = (u_big, p['w_dw'], p['b_dw'], p['w1'], p['b1'], p['w2'], p['b2'],
               p['w_hr'], p['b_hr'], p['w_q'], p['w_kv'], pool, p['w_mask'])

    kernel = functools.partial(_ffm_kernel, hw=hw, c_hi=c_hi, c_int=c_int)
    return pl.pallas_call(
        kernel,
        out_shape=jax.ShapeDtypeStruct((n, hw, c_out), jnp.float32),
        grid=(n,),
        in_specs=[bspec((h_lo * w_lo, c_low)),
                  bspec((hw, c_hi)),
                  bspec((hw, c_hi))] + [wspec(a) for a in weights],
        out_specs=pl.BlockSpec((1, hw, c_out), lambda i: (i, 0, 0)),
        scratch_shapes=[pltpu.VMEM((hw, c_out), jnp.float32)],
        compiler_params=pltpu.CompilerParams(dimension_semantics=("parallel",)),
    )(xlo3, xhi3, att3, *weights)


# ----------------------------------------------------------------------------
# Parameters (deterministic, synthetic; BN folded into conv weights; bf16 MXU wts)
# ----------------------------------------------------------------------------
_EPS = 1e-5


def _bn_fold(key, c):
    k1, k2, k3, k4 = jax.random.split(key, 4)
    gamma = 1.0 + 0.1 * jax.random.normal(k1, (c,), jnp.float32)
    beta = 0.1 * jax.random.normal(k2, (c,), jnp.float32)
    mean = 0.1 * jax.random.normal(k3, (c,), jnp.float32)
    var = 0.5 + 0.1 * jnp.abs(jax.random.normal(k4, (c,), jnp.float32))
    scale = gamma / jnp.sqrt(var + _EPS)
    return scale, beta - mean * scale


def _conv1x1_bn(key, cin, cout, conv_bias=True):
    kw, kb, kbn = jax.random.split(key, 3)
    w = jax.random.normal(kw, (cin, cout), jnp.float32) / np.sqrt(cin)
    b0 = (0.05 * jax.random.normal(kb, (cout,), jnp.float32) if conv_bias
          else jnp.zeros((cout,), jnp.float32))
    scale, shift = _bn_fold(kbn, cout)
    return (w * scale[None, :]).astype(jnp.bfloat16), (scale * b0 + shift).reshape(1, cout)


def make_params(key, c_hi=64, c_lo=128, c_out=128):
    assert c_lo == c_out, "canonical FFM config uses lower_in == out_channels"
    c_int = c_out // 2
    ks = jax.random.split(key, 16)
    # depthwise 3x3 (bias=False) + BN: scale folded into weights, shift kept as bias
    kw, kbn = jax.random.split(ks[0], 2)
    wdw = jax.random.normal(kw, (3, 3, c_out), jnp.float32) / 3.0
    scale, shift = _bn_fold(kbn, c_out)
    w_dw = (wdw * scale[None, None, :]).reshape(9, 1, c_out)     # f32 (VPU path)
    b_dw = shift.reshape(1, c_out)
    w1, b1 = _conv1x1_bn(ks[1], c_out, c_out, True)
    w2, b2 = _conv1x1_bn(ks[2], c_out, c_int, True)
    w_hr, b_hr = _conv1x1_bn(ks[3], c_hi, c_out, True)
    w_q = (jax.random.normal(ks[4], (c_out, c_int), jnp.float32)
           / np.sqrt(c_out)).astype(jnp.bfloat16)
    wk = jax.random.normal(ks[5], (c_out, c_int), jnp.float32) / np.sqrt(c_out)
    wv = jax.random.normal(ks[6], (c_out, c_int), jnp.float32) / np.sqrt(c_out)
    w_kv = jnp.concatenate([wk, wv], axis=1).astype(jnp.bfloat16)
    w_mask = (jax.random.normal(ks[7], (c_int, c_out), jnp.float32)
              / np.sqrt(c_int)).astype(jnp.bfloat16)
    cam = dict(  # fc_MaxPool: Linear(64,32)+ReLU, Linear(32,64)+Sigmoid
        w1=jax.random.normal(ks[8], (c_hi, c_hi // 2), jnp.float32) / np.sqrt(c_hi),
        b1=0.05 * jax.random.normal(ks[9], (c_hi // 2,), jnp.float32),
        w2=jax.random.normal(ks[10], (c_hi // 2, c_hi), jnp.float32) / np.sqrt(c_hi // 2),
        b2=0.05 * jax.random.normal(ks[11], (c_hi,), jnp.float32),
    )
    sam = dict(  # Conv2d(2, 1, 7, padding=3), bias=True
        w=jax.random.normal(ks[12], (1, 2, 7, 7), jnp.float32) / 7.0,
        b=0.05 * jax.random.normal(ks[13], (1,), jnp.float32),
    )
    # NOTE: conv_out1, conv_out2, AvgPool/fc_AvgPool exist in the PyTorch module
    # but are never used in forward() -> not instantiated.
    return dict(w_dw=w_dw, b_dw=b_dw, w1=w1, b1=b1, w2=w2, b2=b2,
                w_hr=w_hr, b_hr=b_hr, w_q=w_q, w_kv=w_kv, w_mask=w_mask,
                cam=cam, sam=sam)


# ----------------------------------------------------------------------------
# Forward pass (CAM/SAM tiny ops stay in XLA glue; everything else in the kernel)
# ----------------------------------------------------------------------------
def feature_fusion_forward(x_high, x_low, p):
    """x_high: (N, H, W, 64) NHWC; x_low: (N, H/4, W/4, 128) NHWC."""
    n, h, w, _ = x_high.shape

    # Channel attention (reference quirk: both branches use MaxPool + fc_MaxPool).
    cam = p['cam']
    chan_max = jnp.max(x_high, axis=(1, 2))                       # (N, 64)
    hmid = jnp.maximum(chan_max @ cam['w1'] + cam['b1'], 0.0)
    s = jax.nn.sigmoid(hmid @ cam['w2'] + cam['b2'])
    mc = jax.nn.sigmoid(s + s)                                    # (N, 64)
    x_cam = x_high * mc[:, None, None, :]

    # Spatial attention.
    # TODO(synk): CAM FCs + SAM 7x7 (2->1 ch) conv stay in XLA glue — too tiny to
    # justify a Pallas launch (per perf review); attention_feature is finished
    # here so the kernel only sees lane-dense inputs.
    sam = p['sam']
    sam_in = jnp.stack([jnp.max(x_cam, axis=-1), jnp.mean(x_cam, axis=-1)], axis=1)
    sam_out = lax.conv_general_dilated(
        sam_in, sam['w'], window_strides=(1, 1), padding=((3, 3), (3, 3)),
        dimension_numbers=('NCHW', 'OIHW', 'NCHW'))               # (N, 1, H, W)
    ms = jax.nn.sigmoid(sam_out + sam['b'])
    att = x_cam * jnp.transpose(ms, (0, 2, 3, 1))                 # (N, H, W, 64)

    y = ffm_fused(x_low, x_high, att, p)                          # (N, HW, 128)
    return y.reshape(n, h, w, -1)


# ----------------------------------------------------------------------------
# Main
# ----------------------------------------------------------------------------
if __name__ == "__main__":
    # Channel sizes forced by the module (AttentionModule hardcodes 64; the
    # residual add forces out_channels = 128): FFM(64, 128, 128).
    N, H, W = 2, 16, 16
    C_HI, C_LO, C_OUT = 64, 128, 128

    key = jax.random.PRNGKey(0)
    k1, k2, k3 = jax.random.split(key, 3)
    # NHWC; PyTorch NCHW equivalents: higher (2,64,16,16), lower (2,128,4,4)
    x_high = jax.random.normal(k1, (N, H, W, C_HI), jnp.float32)
    x_low = jax.random.normal(k2, (N, H // 4, W // 4, C_LO), jnp.float32)
    params = make_params(k3, C_HI, C_LO, C_OUT)

    fwd = jax.jit(lambda a, b: feature_fusion_forward(a, b, params))
    out = jax.block_until_ready(fwd(x_high, x_low))

    assert out.shape == (N, H, W, C_OUT), out.shape
    assert bool(jnp.all(jnp.isfinite(out)))
    print("KERNEL_OK")
</pallas_src>

<mosaic_0001>
module attributes {stable_mosaic.version = 11 : i64} {
  func.func @_ffm_kernel(%arg0: i32, %arg1: memref<1x16x128xf32, #tpu.memory_space<vmem>>, %arg2: memref<1x256x64xf32, #tpu.memory_space<vmem>>, %arg3: memref<1x256x64xf32, #tpu.memory_space<vmem>>, %arg4: memref<256x144xbf16, #tpu.memory_space<vmem>>, %arg5: memref<9x1x128xf32, #tpu.memory_space<vmem>>, %arg6: memref<1x128xf32, #tpu.memory_space<vmem>>, %arg7: memref<128x128xbf16, #tpu.memory_space<vmem>>, %arg8: memref<1x128xf32, #tpu.memory_space<vmem>>, %arg9: memref<128x64xbf16, #tpu.memory_space<vmem>>, %arg10: memref<1x64xf32, #tpu.memory_space<vmem>>, %arg11: memref<64x128xbf16, #tpu.memory_space<vmem>>, %arg12: memref<1x128xf32, #tpu.memory_space<vmem>>, %arg13: memref<128x64xbf16, #tpu.memory_space<vmem>>, %arg14: memref<128x128xbf16, #tpu.memory_space<vmem>>, %arg15: memref<64x256xbf16, #tpu.memory_space<vmem>>, %arg16: memref<64x128xbf16, #tpu.memory_space<vmem>>, %arg17: memref<1x256x128xf32, #tpu.memory_space<vmem>>, %arg18: memref<256x128xf32, #tpu.memory_space<vmem>>) attributes {dimension_semantics = [#tpu.dimension_semantics<parallel>], iteration_bounds = array<i64: 2>, scalar_prefetch = 0 : i64, scratch_operands = 1 : i64, tpu.core_type = #tpu.core_type<tc>, window_params = [{transform_indices = @transform_0, window_bounds = array<i64: 1, 16, 128>}, {transform_indices = @transform_1, window_bounds = array<i64: 1, 256, 64>}, {transform_indices = @transform_2, window_bounds = array<i64: 1, 256, 64>}, {pipeline_mode = #tpu.pipeline_mode<synchronous>, transform_indices = @transform_3, window_bounds = array<i64: 256, 144>}, {pipeline_mode = #tpu.pipeline_mode<synchronous>, transform_indices = @transform_4, window_bounds = array<i64: 9, 1, 128>}, {pipeline_mode = #tpu.pipeline_mode<synchronous>, transform_indices = @transform_5, window_bounds = array<i64: 1, 128>}, {pipeline_mode = #tpu.pipeline_mode<synchronous>, transform_indices = @transform_6, window_bounds = array<i64: 128, 128>}, {pipeline_mode = #tpu.pipeline_mode<synchronous>, transform_indices = @transform_7, window_bounds = array<i64: 1, 128>}, {pipeline_mode = #tpu.pipeline_mode<synchronous>, transform_indices = @transform_8, window_bounds = array<i64: 128, 64>}, {pipeline_mode = #tpu.pipeline_mode<synchronous>, transform_indices = @transform_9, window_bounds = array<i64: 1, 64>}, {pipeline_mode = #tpu.pipeline_mode<synchronous>, transform_indices = @transform_10, window_bounds = array<i64: 64, 128>}, {pipeline_mode = #tpu.pipeline_mode<synchronous>, transform_indices = @transform_11, window_bounds = array<i64: 1, 128>}, {pipeline_mode = #tpu.pipeline_mode<synchronous>, transform_indices = @transform_12, window_bounds = array<i64: 128, 64>}, {pipeline_mode = #tpu.pipeline_mode<synchronous>, transform_indices = @transform_13, window_bounds = array<i64: 128, 128>}, {pipeline_mode = #tpu.pipeline_mode<synchronous>, transform_indices = @transform_14, window_bounds = array<i64: 64, 256>}, {pipeline_mode = #tpu.pipeline_mode<synchronous>, transform_indices = @transform_15, window_bounds = array<i64: 64, 128>}, {transform_indices = @transform_16, window_bounds = array<i64: 1, 256, 128>}]} {
    %c0 = arith.constant 0 : index
    %c0_0 = arith.constant 0 : index
    %c0_1 = arith.constant 0 : index
    %0 = vector.load %arg1[%c0, %c0_0, %c0_1] : memref<1x16x128xf32, #tpu.memory_space<vmem>>, vector<1x16x128xf32>
    %1 = vector.shape_cast %0 : vector<1x16x128xf32> to vector<16x128xf32>
    %2 = vector.shape_cast %1 : vector<16x128xf32> to vector<1x16x128xf32>
    %c0_2 = arith.constant 0 : index
    %c0_3 = arith.constant 0 : index
    %c0_4 = arith.constant 0 : index
    %3 = vector.load %arg5[%c0_2, %c0_3, %c0_4] : memref<9x1x128xf32, #tpu.memory_space<vmem>>, vector<9x1x128xf32>
    %4 = vector.broadcast %2 : vector<1x16x128xf32> to vector<9x16x128xf32>
    %5 = vector.broadcast %3 : vector<9x1x128xf32> to vector<9x16x128xf32>
    %6 = arith.mulf %4, %5 : vector<9x16x128xf32>
    %7 = vector.shape_cast %6 : vector<9x16x128xf32> to vector<144x128xf32>
    %c0_5 = arith.constant 0 : index
    %c0_6 = arith.constant 0 : index
    %8 = vector.load %arg4[%c0_5, %c0_6] : memref<256x144xbf16, #tpu.memory_space<vmem>>, vector<256x144xbf16>
    %9 = arith.truncf %7 : vector<144x128xf32> to vector<144x128xbf16>
    %cst = arith.constant dense<0.000000e+00> : vector<256x128xf32>
    %10 = tpu.matmul %8, %9, %cst {dimension_numbers = #tpu.dot_dimension_numbers<[1], [0], [0], [1], [0, 0, 1, 1], [], []>} : vector<256x144xbf16>, vector<144x128xbf16>, vector<256x128xf32> -> vector<256x128xf32>
    %c0_7 = arith.constant 0 : index
    %c0_8 = arith.constant 0 : index
    %11 = vector.load %arg6[%c0_7, %c0_8] : memref<1x128xf32, #tpu.memory_space<vmem>>, vector<1x128xf32>
    %12 = vector.broadcast %11 : vector<1x128xf32> to vector<256x128xf32>
    %13 = arith.addf %10, %12 : vector<256x128xf32>
    %cst_9 = arith.constant 0.000000e+00 : f32
    %14 = vector.broadcast %cst_9 : f32 to vector<256x128xf32>
    %15 = arith.maximumf %13, %14 : vector<256x128xf32>
    %16 = arith.truncf %15 : vector<256x128xf32> to vector<256x128xbf16>
    %c0_10 = arith.constant 0 : index
    %c0_11 = arith.constant 0 : index
    %17 = vector.load %arg7[%c0_10, %c0_11] : memref<128x128xbf16, #tpu.memory_space<vmem>>, vector<128x128xbf16>
    %cst_12 = arith.constant dense<0.000000e+00> : vector<256x128xf32>
    %18 = tpu.matmul %16, %17, %cst_12 {dimension_numbers = #tpu.dot_dimension_numbers<[1], [0], [0], [1], [0, 0, 1, 1], [], []>} : vector<256x128xbf16>, vector<128x128xbf16>, vector<256x128xf32> -> vector<256x128xf32>
    %c0_13 = arith.constant 0 : index
    %c0_14 = arith.constant 0 : index
    %19 = vector.load %arg8[%c0_13, %c0_14] : memref<1x128xf32, #tpu.memory_space<vmem>>, vector<1x128xf32>
    %20 = vector.broadcast %19 : vector<1x128xf32> to vector<256x128xf32>
    %21 = arith.addf %18, %20 : vector<256x128xf32>
    %cst_15 = arith.constant 0.000000e+00 : f32
    %22 = vector.broadcast %cst_15 : f32 to vector<256x128xf32>
    %23 = arith.maximumf %21, %22 : vector<256x128xf32>
    %24 = arith.truncf %23 : vector<256x128xf32> to vector<256x128xbf16>
    %c0_16 = arith.constant 0 : index
    %c0_17 = arith.constant 0 : index
    %25 = vector.load %arg9[%c0_16, %c0_17] : memref<128x64xbf16, #tpu.memory_space<vmem>>, vector<128x64xbf16>
    %cst_18 = arith.constant dense<0.000000e+00> : vector<256x64xf32>
    %26 = tpu.matmul %24, %25, %cst_18 {dimension_numbers = #tpu.dot_dimension_numbers<[1], [0], [0], [1], [0, 0, 1, 1], [], []>} : vector<256x128xbf16>, vector<128x64xbf16>, vector<256x64xf32> -> vector<256x64xf32>
    %c0_19 = arith.constant 0 : index
    %c0_20 = arith.constant 0 : index
    %27 = vector.load %arg10[%c0_19, %c0_20] : memref<1x64xf32, #tpu.memory_space<vmem>>, vector<1x64xf32>
    %28 = vector.broadcast %27 : vector<1x64xf32> to vector<256x64xf32>
    %29 = arith.addf %26, %28 : vector<256x64xf32>
    %c0_21 = arith.constant 0 : index
    %c0_22 = arith.constant 0 : index
    %c0_23 = arith.constant 0 : index
    %30 = vector.load %arg2[%c0_21, %c0_22, %c0_23] : memref<1x256x64xf32, #tpu.memory_space<vmem>>, vector<1x256x64xf32>
    %31 = vector.shape_cast %30 : vector<1x256x64xf32> to vector<256x64xf32>
    %32 = arith.truncf %31 : vector<256x64xf32> to vector<256x64xbf16>
    %c0_24 = arith.constant 0 : index
    %c0_25 = arith.constant 0 : index
    %33 = vector.load %arg11[%c0_24, %c0_25] : memref<64x128xbf16, #tpu.memory_space<vmem>>, vector<64x128xbf16>
    %cst_26 = arith.constant dense<0.000000e+00> : vector<256x128xf32>
    %34 = tpu.matmul %32, %33, %cst_26 {dimension_numbers = #tpu.dot_dimension_numbers<[1], [0], [0], [1], [0, 0, 1, 1], [], []>} : vector<256x64xbf16>, vector<64x128xbf16>, vector<256x128xf32> -> vector<256x128xf32>
    %c0_27 = arith.constant 0 : index
    %c0_28 = arith.constant 0 : index
    %35 = vector.load %arg12[%c0_27, %c0_28] : memref<1x128xf32, #tpu.memory_space<vmem>>, vector<1x128xf32>
    %36 = vector.broadcast %35 : vector<1x128xf32> to vector<256x128xf32>
    %37 = arith.addf %34, %36 : vector<256x128xf32>
    %38 = vector.extract_strided_slice %37 {offsets = [0, 0], sizes = [256, 64], strides = [1, 1]} : vector<256x128xf32> to vector<256x64xf32>
    %c0_29 = arith.constant 0 : index
    %c0_30 = arith.constant 0 : index
    %c0_31 = arith.constant 0 : index
    %39 = vector.load %arg3[%c0_29, %c0_30, %c0_31] : memref<1x256x64xf32, #tpu.memory_space<vmem>>, vector<1x256x64xf32>
    %40 = vector.shape_cast %39 : vector<1x256x64xf32> to vector<256x64xf32>
    %41 = arith.addf %38, %40 : vector<256x64xf32>
    %c0_32 = arith.constant 0 : index
    %c0_33 = arith.constant 0 : index
    %42 = vector.load %arg18[%c0_32, %c0_33] : memref<256x128xf32, #tpu.memory_space<vmem>>, vector<256x64xf32>
    tpu.vector_store %arg18[%c0_32, %c0_33], %41 {strides = array<i32>} : memref<256x128xf32, #tpu.memory_space<vmem>>, vector<256x64xf32>,
    %43 = vector.extract_strided_slice %37 {offsets = [0, 64], sizes = [256, 64], strides = [1, 1]} : vector<256x128xf32> to vector<256x64xf32>
    %44 = arith.addf %43, %29 : vector<256x64xf32>
    %c0_34 = arith.constant 0 : index
    %c64 = arith.constant 64 : index
    %45 = vector.load %arg18[%c0_34, %c64] : memref<256x128xf32, #tpu.memory_space<vmem>>, vector<256x64xf32>
    tpu.vector_store %arg18[%c0_34, %c64], %44 {strides = array<i32>} : memref<256x128xf32, #tpu.memory_space<vmem>>, vector<256x64xf32>,
    %c0_35 = arith.constant 0 : index
    %c0_36 = arith.constant 0 : index
    %46 = vector.load %arg18[%c0_35, %c0_36] : memref<256x128xf32, #tpu.memory_space<vmem>>, vector<256x128xf32>
    %47 = arith.truncf %46 : vector<256x128xf32> to vector<256x128xbf16>
    %c0_37 = arith.constant 0 : index
    %c0_38 = arith.constant 0 : index
    %48 = vector.load %arg13[%c0_37, %c0_38] : memref<128x64xbf16, #tpu.memory_space<vmem>>, vector<128x64xbf16>
    %cst_39 = arith.constant dense<0.000000e+00> : vector<256x64xf32>
    %49 = tpu.matmul %47, %48, %cst_39 {dimension_numbers = #tpu.dot_dimension_numbers<[1], [0], [0], [1], [0, 0, 1, 1], [], []>} : vector<256x128xbf16>, vector<128x64xbf16>, vector<256x64xf32> -> vector<256x64xf32>
    %c0_40 = arith.constant 0 : index
    %c0_41 = arith.constant 0 : index
    %50 = vector.load %arg15[%c0_40, %c0_41] : memref<64x256xbf16, #tpu.memory_space<vmem>>, vector<64x256xbf16>
    %cst_42 = arith.constant dense<0.000000e+00> : vector<64x128xf32>
    %51 = tpu.matmul %50, %47, %cst_42 {dimension_numbers = #tpu.dot_dimension_numbers<[1], [0], [0], [1], [0, 0, 1, 1], [], []>} : vector<64x256xbf16>, vector<256x128xbf16>, vector<64x128xf32> -> vector<64x128xf32>
    %52 = arith.truncf %51 : vector<64x128xf32> to vector<64x128xbf16>
    %c0_43 = arith.constant 0 : index
    %c0_44 = arith.constant 0 : index
    %53 = vector.load %arg14[%c0_43, %c0_44] : memref<128x128xbf16, #tpu.memory_space<vmem>>, vector<128x128xbf16>
    %cst_45 = arith.constant dense<0.000000e+00> : vector<64x128xf32>
    %54 = tpu.matmul %52, %53, %cst_45 {dimension_numbers = #tpu.dot_dimension_numbers<[1], [0], [0], [1], [0, 0, 1, 1], [], []>} : vector<64x128xbf16>, vector<128x128xbf16>, vector<64x128xf32> -> vector<64x128xf32>
    %55 = vector.extract_strided_slice %54 {offsets = [0, 0], sizes = [64, 64], strides = [1, 1]} : vector<64x128xf32> to vector<64x64xf32>
    %56 = vector.extract_strided_slice %54 {offsets = [0, 64], sizes = [64, 64], strides = [1, 1]} : vector<64x128xf32> to vector<64x64xf32>
    %57 = vector.extract_strided_slice %49 {offsets = [0, 0], sizes = [128, 64], strides = [1, 1]} : vector<256x64xf32> to vector<128x64xf32>
    %58 = arith.truncf %57 : vector<128x64xf32> to vector<128x64xbf16>
    %59 = vector.extract_strided_slice %55 {offsets = [0, 0], sizes = [32, 64], strides = [1, 1]} : vector<64x64xf32> to vector<32x64xf32>
    %60 = arith.truncf %59 : vector<32x64xf32> to vector<32x64xbf16>
    %cst_46 = arith.constant dense<0.000000e+00> : vector<128x32xf32>
    %61 = tpu.matmul %58, %60, %cst_46 {dimension_numbers = #tpu.dot_dimension_numbers<[1], [1], [0], [0], [0, 0, 1, 0], [], []>} : vector<128x64xbf16>, vector<32x64xbf16>, vector<128x32xf32> -> vector<128x32xf32>
    %62 = vector.extract_strided_slice %49 {offsets = [128, 0], sizes = [128, 64], strides = [1, 1]} : vector<256x64xf32> to vector<128x64xf32>
    %63 = arith.truncf %62 : vector<128x64xf32> to vector<128x64xbf16>
    %64 = vector.extract_strided_slice %55 {offsets = [32, 0], sizes = [32, 64], strides = [1, 1]} : vector<64x64xf32> to vector<32x64xf32>
    %65 = arith.truncf %64 : vector<32x64xf32> to vector<32x64xbf16>
    %cst_47 = arith.constant dense<0.000000e+00> : vector<128x32xf32>
    %66 = tpu.matmul %63, %65, %cst_47 {dimension_numbers = #tpu.dot_dimension_numbers<[1], [1], [0], [0], [0, 0, 1, 0], [], []>} : vector<128x64xbf16>, vector<32x64xbf16>, vector<128x32xf32> -> vector<128x32xf32>
    %67 = arith.addf %61, %66 : vector<128x32xf32>
    %cst_48 = arith.constant dense<0xFF800000> : vector<32xf32>
    %68 = vector.multi_reduction <maximumf>, %67, %cst_48 [0] : vector<128x32xf32> to vector<32xf32>
    %69 = vector.shape_cast %68 : vector<32xf32> to vector<1x32xf32>
    %70 = vector.broadcast %69 : vector<1x32xf32> to vector<128x32xf32>
    %71 = arith.subf %67, %70 : vector<128x32xf32>
    %72 = math.exp %71 : vector<128x32xf32>
    %cst_49 = arith.constant dense<0.000000e+00> : vector<32xf32>
    %73 = vector.multi_reduction <add>, %72, %cst_49 [0] : vector<128x32xf32> to vector<32xf32>
    %74 = vector.shape_cast %73 : vector<32xf32> to vector<1x32xf32>
    %75 = vector.broadcast %74 : vector<1x32xf32> to vector<128x32xf32>
    %76 = arith.divf %72, %75 : vector<128x32xf32>
    %77 = arith.truncf %76 : vector<128x32xf32> to vector<128x32xbf16>
    %78 = vector.extract_strided_slice %56 {offsets = [0, 0], sizes = [32, 64], strides = [1, 1]} : vector<64x64xf32> to vector<32x64xf32>
    %79 = arith.truncf %78 : vector<32x64xf32> to vector<32x64xbf16>
    %cst_50 = arith.constant dense<0.000000e+00> : vector<128x64xf32>
    %80 = tpu.matmul %77, %79, %cst_50 {dimension_numbers = #tpu.dot_dimension_numbers<[1], [0], [0], [1], [0, 0, 1, 1], [], []>} : vector<128x32xbf16>, vector<32x64xbf16>, vector<128x64xf32> -> vector<128x64xf32>
    %81 = vector.extract_strided_slice %56 {offsets = [32, 0], sizes = [32, 64], strides = [1, 1]} : vector<64x64xf32> to vector<32x64xf32>
    %82 = arith.truncf %81 : vector<32x64xf32> to vector<32x64xbf16>
    %cst_51 = arith.constant dense<0.000000e+00> : vector<128x64xf32>
    %83 = tpu.matmul %77, %82, %cst_51 {dimension_numbers = #tpu.dot_dimension_numbers<[1], [0], [0], [1], [0, 0, 1, 1], [], []>} : vector<128x32xbf16>, vector<32x64xbf16>, vector<128x64xf32> -> vector<128x64xf32>
    %84 = arith.truncf %80 : vector<128x64xf32> to vector<128x64xbf16>
    %c0_52 = arith.constant 0 : index
    %c0_53 = arith.constant 0 : index
    %85 = vector.load %arg16[%c0_52, %c0_53] : memref<64x128xbf16, #tpu.memory_space<vmem>>, vector<64x128xbf16>
    %cst_54 = arith.constant dense<0.000000e+00> : vector<128x128xf32>
    %86 = tpu.matmul %84, %85, %cst_54 {dimension_numbers = #tpu.dot_dimension_numbers<[1], [0], [0], [1], [0, 0, 1, 1], [], []>} : vector<128x64xbf16>, vector<64x128xbf16>, vector<128x128xf32> -> vector<128x128xf32>
    %c0_55 = arith.constant 0 : index
    %c0_56 = arith.constant 0 : index
    %87 = vector.load %arg18[%c0_55, %c0_56] : memref<256x128xf32, #tpu.memory_space<vmem>>, vector<128x128xf32>
    %88 = arith.addf %86, %87 : vector<128x128xf32>
    %89 = arith.truncf %83 : vector<128x64xf32> to vector<128x64xbf16>
    %c0_57 = arith.constant 0 : index
    %c0_58 = arith.constant 0 : index
    %90 = vector.load %arg16[%c0_57, %c0_58] : memref<64x128xbf16, #tpu.memory_space<vmem>>, vector<64x128xbf16>
    %cst_59 = arith.constant dense<0.000000e+00> : vector<128x128xf32>
    %91 = tpu.matmul %89, %90, %cst_59 {dimension_numbers = #tpu.dot_dimension_numbers<[1], [0], [0], [1], [0, 0, 1, 1], [], []>} : vector<128x64xbf16>, vector<64x128xbf16>, vector<128x128xf32> -> vector<128x128xf32>
    %c128 = arith.constant 128 : index
    %c0_60 = arith.constant 0 : index
    %92 = vector.load %arg18[%c128, %c0_60] : memref<256x128xf32, #tpu.memory_space<vmem>>, vector<128x128xf32>
    %93 = arith.addf %91, %92 : vector<128x128xf32>
    %cst_61 = arith.constant 0.000000e+00 : f32
    %94 = vector.broadcast %cst_61 : f32 to vector<128x128xf32>
    %95 = arith.maximumf %88, %94 : vector<128x128xf32>
    %c0_62 = arith.constant 0 : index
    %c0_63 = arith.constant 0 : index
    %c0_64 = arith.constant 0 : index
    %96 = vector.load %arg17[%c0_62, %c0_63, %c0_64] : memref<1x256x128xf32, #tpu.memory_space<vmem>>, vector<1x128x128xf32>
    %97 = vector.shape_cast %96 : vector<1x128x128xf32> to vector<128x128xf32>
    %98 = vector.shape_cast %95 : vector<128x128xf32> to vector<1x128x128xf32>
    tpu.vector_store %arg17[%c0_62, %c0_63, %c0_64], %98 {strides = array<i32>} : memref<1x256x128xf32, #tpu.memory_space<vmem>>, vector<1x128x128xf32>,
    %cst_65 = arith.constant 0.000000e+00 : f32
    %99 = vector.broadcast %cst_65 : f32 to vector<128x128xf32>
    %100 = arith.maximumf %93, %99 : vector<128x128xf32>
    %c0_66 = arith.constant 0 : index
    %c128_67 = arith.constant 128 : index
    %c0_68 = arith.constant 0 : index
    %101 = vector.load %arg17[%c0_66, %c128_67, %c0_68] : memref<1x256x128xf32, #tpu.memory_space<vmem>>, vector<1x128x128xf32>
    %102 = vector.shape_cast %101 : vector<1x128x128xf32> to vector<128x128xf32>
    %103 = vector.shape_cast %100 : vector<128x128xf32> to vector<1x128x128xf32>
    tpu.vector_store %arg17[%c0_66, %c128_67, %c0_68], %103 {strides = array<i32>} : memref<1x256x128xf32, #tpu.memory_space<vmem>>, vector<1x128x128xf32>,
    return
  }
  func.func @transform_0(%arg0: i32) -> (i32, i32, i32) {
    %c0_i32 = arith.constant 0 : i32
    %c0_i32_0 = arith.constant 0 : i32
    %c0_i32_1 = arith.constant 0 : i32
    return %arg0, %c0_i32, %c0_i32_0 : i32, i32, i32
  }
  func.func @transform_1(%arg0: i32) -> (i32, i32, i32) {
    %c0_i32 = arith.constant 0 : i32
    %c0_i32_0 = arith.constant 0 : i32
    %c0_i32_1 = arith.constant 0 : i32
    return %arg0, %c0_i32, %c0_i32_0 : i32, i32, i32
  }
  func.func @transform_2(%arg0: i32) -> (i32, i32, i32) {
    %c0_i32 = arith.constant 0 : i32
    %c0_i32_0 = arith.constant 0 : i32
    %c0_i32_1 = arith.constant 0 : i32
    return %arg0, %c0_i32, %c0_i32_0 : i32, i32, i32
  }
  func.func @transform_3(%arg0: i32) -> (i32, i32) {
    %c0_i32 = arith.constant 0 : i32
    %c0_i32_0 = arith.constant 0 : i32
    %c0_i32_1 = arith.constant 0 : i32
    return %c0_i32, %c0_i32_0 : i32, i32
  }
  func.func @transform_4(%arg0: i32) -> (i32, i32, i32) {
    %c0_i32 = arith.constant 0 : i32
    %c0_i32_0 = arith.constant 0 : i32
    %c0_i32_1 = arith.constant 0 : i32
    %c0_i32_2 = arith.constant 0 : i32
    return %c0_i32, %c0_i32_0, %c0_i32_1 : i32, i32, i32
  }
  func.func @transform_5(%arg0: i32) -> (i32, i32) {
    %c0_i32 = arith.constant 0 : i32
    %c0_i32_0 = arith.constant 0 : i32
    %c0_i32_1 = arith.constant 0 : i32
    return %c0_i32, %c0_i32_0 : i32, i32
  }
  func.func @transform_6(%arg0: i32) -> (i32, i32) {
    %c0_i32 = arith.constant 0 : i32
    %c0_i32_0 = arith.constant 0 : i32
    %c0_i32_1 = arith.constant 0 : i32
    return %c0_i32, %c0_i32_0 : i32, i32
  }
  func.func @transform_7(%arg0: i32) -> (i32, i32) {
    %c0_i32 = arith.constant 0 : i32
    %c0_i32_0 = arith.constant 0 : i32
    %c0_i32_1 = arith.constant 0 : i32
    return %c0_i32, %c0_i32_0 : i32, i32
  }
  func.func @transform_8(%arg0: i32) -> (i32, i32) {
    %c0_i32 = arith.constant 0 : i32
    %c0_i32_0 = arith.constant 0 : i32
    %c0_i32_1 = arith.constant 0 : i32
    return %c0_i32, %c0_i32_0 : i32, i32
  }
  func.func @transform_9(%arg0: i32) -> (i32, i32) {
    %c0_i32 = arith.constant 0 : i32
    %c0_i32_0 = arith.constant 0 : i32
    %c0_i32_1 = arith.constant 0 : i32
    return %c0_i32, %c0_i32_0 : i32, i32
  }
  func.func @transform_10(%arg0: i32) -> (i32, i32) {
    %c0_i32 = arith.constant 0 : i32
    %c0_i32_0 = arith.constant 0 : i32
    %c0_i32_1 = arith.constant 0 : i32
    return %c0_i32, %c0_i32_0 : i32, i32
  }
  func.func @transform_11(%arg0: i32) -> (i32, i32) {
    %c0_i32 = arith.constant 0 : i32
    %c0_i32_0 = arith.constant 0 : i32
    %c0_i32_1 = arith.constant 0 : i32
    return %c0_i32, %c0_i32_0 : i32, i32
  }
  func.func @transform_12(%arg0: i32) -> (i32, i32) {
    %c0_i32 = arith.constant 0 : i32
    %c0_i32_0 = arith.constant 0 : i32
    %c0_i32_1 = arith.constant 0 : i32
    return %c0_i32, %c0_i32_0 : i32, i32
  }
  func.func @transform_13(%arg0: i32) -> (i32, i32) {
    %c0_i32 = arith.constant 0 : i32
    %c0_i32_0 = arith.constant 0 : i32
    %c0_i32_1 = arith.constant 0 : i32
    return %c0_i32, %c0_i32_0 : i32, i32
  }
  func.func @transform_14(%arg0: i32) -> (i32, i32) {
    %c0_i32 = arith.constant 0 : i32
    %c0_i32_0 = arith.constant 0 : i32
    %c0_i32_1 = arith.constant 0 : i32
    return %c0_i32, %c0_i32_0 : i32, i32
  }
  func.func @transform_15(%arg0: i32) -> (i32, i32) {
    %c0_i32 = arith.constant 0 : i32
    %c0_i32_0 = arith.constant 0 : i32
    %c0_i32_1 = arith.constant 0 : i32
    return %c0_i32, %c0_i32_0 : i32, i32
  }
  func.func @transform_16(%arg0: i32) -> (i32, i32, i32) {
    %c0_i32 = arith.constant 0 : i32
    %c0_i32_0 = arith.constant 0 : i32
    %c0_i32_1 = arith.constant 0 : i32
    return %arg0, %c0_i32, %c0_i32_0 : i32, i32, i32
  }
}

</mosaic_0001>

<llo_original>
// kernel: _lambda_.1
$region0: #{_lambda_.1}
  #allocation0 [shape = 'u32[]', space=smem, size = 0x4, offset = 0x4, fixed_abs, tag = 'smem constant byte address 0x4 - core index']
  #allocation1 [shape = 'u32[144,128]{1,0:T(1,128)}', space=vmem, size = 0x12000, scoped, tag = 'internal scratch']
  #allocation2 [shape = 'f32[256,128]{1,0:T(8,128)}', space=vmem, size = 0x20000, scoped, tag = 'scratch operand']
  %s0 = inlined_call_operand.vmem [shape: f32[2,16,128], index: 0, kind: input, shape index: {}]
  %s1 = inlined_call_operand.vmem [shape: f32[2,256,64], index: 1, kind: input, shape index: {}]
  %s2 = inlined_call_operand.vmem [shape: f32[2,256,64], index: 2, kind: input, shape index: {}]
  %s3 = inlined_call_operand.vmem [shape: bf16[256,144], index: 3, kind: input, shape index: {}]
  %s4 = inlined_call_operand.vmem [shape: f32[9,1,128], index: 4, kind: input, shape index: {}]
  %s5 = inlined_call_operand.vmem [shape: f32[1,128], index: 5, kind: input, shape index: {}]
  %s6 = inlined_call_operand.vmem [shape: bf16[128,128], index: 6, kind: input, shape index: {}]
  %s7 = inlined_call_operand.vmem [shape: f32[1,128], index: 7, kind: input, shape index: {}]
  %s8 = inlined_call_operand.vmem [shape: bf16[128,64], index: 8, kind: input, shape index: {}]
  %s9 = inlined_call_operand.vmem [shape: f32[1,64], index: 9, kind: input, shape index: {}]
  %s10 = inlined_call_operand.vmem [shape: bf16[64,128], index: 10, kind: input, shape index: {}]
  %s11 = inlined_call_operand.vmem [shape: f32[1,128], index: 11, kind: input, shape index: {}]
  %s12 = inlined_call_operand.vmem [shape: bf16[128,64], index: 12, kind: input, shape index: {}]
  %s13 = inlined_call_operand.vmem [shape: bf16[128,128], index: 13, kind: input, shape index: {}]
  %s14 = inlined_call_operand.vmem [shape: bf16[64,256], index: 14, kind: input, shape index: {}]
  %s15 = inlined_call_operand.vmem [shape: bf16[64,128], index: 15, kind: input, shape index: {}]
  %s16 = inlined_call_operand.hbm [shape: f32[2,256,128], index: 16, kind: output, shape index: {}]
  %s17 = sld [smem:[#allocation0]]
  $region97: #{_lambda_.1} parent=0
    _
  %s19 = ssub.s32 1, %s17
  %s20 = scalar_select 0, %s19, %s17
  $region1: #{_lambda_.1} parent=0
    #allocation3 [shape = 'u8[262144]{0}', space=vmem, size = 0x40000, scoped, tag = 'output window, operand 0']
    #allocation4 [shape = 's32[2]{0}', space=sflag, size = 0x8, scoped, tag = 'scoped memory for _lambda_.1']
    %21 = vsyncpa [#allocation4], 0
    %s22 = scalar_lea.sflag [#allocation4], 1
    %23 = vsyncpa %s22, 0
    loop: start=0, step=1, limit=4
    $region2: #{_lambda_.1} parent=1 // loop_pre_header
      _
    $region3: #{_lambda_.1} parent=1 // loop_header
      %s25 = sphi 0, %s29
      %p26 = scmp.ge.s32.totalorder %s25, 4
      %s35 = sphi 0, %s37
      %s38 = sphi 0, %s35
      %s39 = sphi 0, %s38
      %s55 = sphi 0, %s39
      %s61 = sphi 0, %s63
      %s64 = sphi 0, %s61
      %s65 = sphi 0, %s64
      %s81 = sphi 0, %s65
      %s87 = sphi 0, %s89
      %s90 = sphi 0, %s87
      %s91 = sphi 0, %s90
      %s107 = sphi 0, %s91
      %s111 = sphi 0, %s111
      %s113 = sphi 0, %s111
      %s114 = sphi 0, %s113
      %s128 = sphi 0, %s114
      %s132 = sphi 0, %s132
      %s134 = sphi 0, %s132
      %s135 = sphi 0, %s134
      %s149 = sphi 0, %s135
      %s153 = sphi 0, %s153
      %s155 = sphi 0, %s153
      %s156 = sphi 0, %s155
      %s170 = sphi 0, %s156
      %s174 = sphi 0, %s174
      %s176 = sphi 0, %s174
      %s177 = sphi 0, %s176
      %s191 = sphi 0, %s177
      %s195 = sphi 0, %s195
      %s197 = sphi 0, %s195
      %s198 = sphi 0, %s197
      %s212 = sphi 0, %s198
      %s216 = sphi 0, %s216
      %s218 = sphi 0, %s216
      %s219 = sphi 0, %s218
      %s233 = sphi 0, %s219
      %s237 = sphi 0, %s237
      %s239 = sphi 0, %s237
      %s240 = sphi 0, %s239
      %s254 = sphi 0, %s240
      %s258 = sphi 0, %s258
      %s260 = sphi 0, %s258
      %s261 = sphi 0, %s260
      %s275 = sphi 0, %s261
      %s279 = sphi 0, %s279
      %s281 = sphi 0, %s279
      %s282 = sphi 0, %s281
      %s296 = sphi 0, %s282
      %s300 = sphi 0, %s300
      %s302 = sphi 0, %s300
      %s303 = sphi 0, %s302
      %s317 = sphi 0, %s303
      %s321 = sphi 0, %s321
      %s323 = sphi 0, %s321
      %s324 = sphi 0, %s323
      %s338 = sphi 0, %s324
      %s342 = sphi 0, %s342
      %s344 = sphi 0, %s342
      %s345 = sphi 0, %s344
      %s359 = sphi 0, %s345
      %s363 = sphi 0, %s363
      %s365 = sphi 0, %s363
      %s366 = sphi 0, %s365
      %s380 = sphi 0, %s366
      %s386 = sphi 0, %s388
      %s389 = sphi 0, %s386
      %s390 = sphi 0, %s389
      %s406 = sphi 0, %s390
    $region4: #{_lambda_.1} parent=1 // loop_header_branch
      %28 = sbr.rel (%p26) target = $region8
    $region5: #{_lambda_.1} parent=1 // loop_body
      %s30 = ssub.s32 %s25, 1
      %s31 = ssub.s32 %s25, 2
      %s32 = sadd.s32 %s25, 1
      %s33 = ssub.s32 %s25, %s32
      %p34 = scmp.eq.s32.totalorder %s33, 0
      %s36 = sadd.s32 %s35, 1
      %s37 = scalar_select %p34, %s35, %s36
      %p40 = pneg %p34
      %p41 = scmp.eq.s32.totalorder %s25, 1
      %p42 = por %p40, %p41
      %p43 = scmp.ne.s32.totalorder %s35, %s38
      %p44 = scmp.eq.s32.totalorder %s25, 0
      %p45 = por %p43, %p44
      %p46 = scmp.ne.s32.totalorder %s35, %s38
      %p47 = scmp.eq.s32.totalorder %s30, 1
      %p48 = por %p46, %p47
      %p49 = scmp.ne.s32.totalorder %s38, %s39
      %p50 = scmp.eq.s32.totalorder %s30, 0
      %p51 = por %p49, %p50
      %p52 = scmp.ne.s32.totalorder %s38, %s39
      %p53 = scmp.eq.s32.totalorder %s31, 1
      %p54 = por %p52, %p53
      %p56 = scmp.ne.s32.totalorder %s39, %s55
      %p57 = scmp.eq.s32.totalorder %s31, 0
      %p58 = por %p56, %p57
      %s59 = ssub.s32 %s25, %s32
      %p60 = scmp.eq.s32.totalorder %s59, 0
      %s62 = sadd.s32 %s61, 1
      %s63 = scalar_select %p60, %s61, %s62
      %p66 = pneg %p60
      %p67 = scmp.eq.s32.totalorder %s25, 1
      %p68 = por %p66, %p67
      %p69 = scmp.ne.s32.totalorder %s61, %s64
      %p70 = scmp.eq.s32.totalorder %s25, 0
      %p71 = por %p69, %p70
      %p72 = scmp.ne.s32.totalorder %s61, %s64
      %p73 = scmp.eq.s32.totalorder %s30, 1
      %p74 = por %p72, %p73
      %p75 = scmp.ne.s32.totalorder %s64, %s65
      %p76 = scmp.eq.s32.totalorder %s30, 0
      %p77 = por %p75, %p76
      %p78 = scmp.ne.s32.totalorder %s64, %s65
      %p79 = scmp.eq.s32.totalorder %s31, 1
      %p80 = por %p78, %p79
      %p82 = scmp.ne.s32.totalorder %s65, %s81
      %p83 = scmp.eq.s32.totalorder %s31, 0
      %p84 = por %p82, %p83
      %s85 = ssub.s32 %s25, %s32
      %p86 = scmp.eq.s32.totalorder %s85, 0
      %s88 = sadd.s32 %s87, 1
      %s89 = scalar_select %p86, %s87, %s88
      %p92 = pneg %p86
      %p93 = scmp.eq.s32.totalorder %s25, 1
      %p94 = por %p92, %p93
      %p95 = scmp.ne.s32.totalorder %s87, %s90
      %p96 = scmp.eq.s32.totalorder %s25, 0
      %p97 = por %p95, %p96
      %p98 = scmp.ne.s32.totalorder %s87, %s90
      %p99 = scmp.eq.s32.totalorder %s30, 1
      %p100 = por %p98, %p99
      %p101 = scmp.ne.s32.totalorder %s90, %s91
      %p102 = scmp.eq.s32.totalorder %s30, 0
      %p103 = por %p101, %p102
      %p104 = scmp.ne.s32.totalorder %s90, %s91
      %p105 = scmp.eq.s32.totalorder %s31, 1
      %p106 = por %p104, %p105
      %p108 = scmp.ne.s32.totalorder %s91, %s107
      %p109 = scmp.eq.s32.totalorder %s31, 0
      %p110 = por %p108, %p109
      %s112 = sadd.s32 %s111, 1
      %p115 = scmp.eq.s32.totalorder %s25, 1
      %p116 = scmp.ne.s32.totalorder %s111, %s113
      %p117 = scmp.eq.s32.totalorder %s25, 0
      %p118 = por %p116, %p117
      %p119 = scmp.ne.s32.totalorder %s111, %s113
      %p120 = scmp.eq.s32.totalorder %s30, 1
      %p121 = por %p119, %p120
      %p122 = scmp.ne.s32.totalorder %s113, %s114
      %p123 = scmp.eq.s32.totalorder %s30, 0
      %p124 = por %p122, %p123
      %p125 = scmp.ne.s32.totalorder %s113, %s114
      %p126 = scmp.eq.s32.totalorder %s31, 1
      %p127 = por %p125, %p126
      %p129 = scmp.ne.s32.totalorder %s114, %s128
      %p130 = scmp.eq.s32.totalorder %s31, 0
      %p131 = por %p129, %p130
      %s133 = sadd.s32 %s132, 1
      %p136 = scmp.eq.s32.totalorder %s25, 1
      %p137 = scmp.ne.s32.totalorder %s132, %s134
      %p138 = scmp.eq.s32.totalorder %s25, 0
      %p139 = por %p137, %p138
      %p140 = scmp.ne.s32.totalorder %s132, %s134
      %p141 = scmp.eq.s32.totalorder %s30, 1
      %p142 = por %p140, %p141
      %p143 = scmp.ne.s32.totalorder %s134, %s135
      %p144 = scmp.eq.s32.totalorder %s30, 0
      %p145 = por %p143, %p144
      %p146 = scmp.ne.s32.totalorder %s134, %s135
      %p147 = scmp.eq.s32.totalorder %s31, 1
      %p148 = por %p146, %p147
      %p150 = scmp.ne.s32.totalorder %s135, %s149
      %p151 = scmp.eq.s32.totalorder %s31, 0
      %p152 = por %p150, %p151
      %s154 = sadd.s32 %s153, 1
      %p157 = scmp.eq.s32.totalorder %s25, 1
      %p158 = scmp.ne.s32.totalorder %s153, %s155
      %p159 = scmp.eq.s32.totalorder %s25, 0
      %p160 = por %p158, %p159
      %p161 = scmp.ne.s32.totalorder %s153, %s155
      %p162 = scmp.eq.s32.totalorder %s30, 1
      %p163 = por %p161, %p162
      %p164 = scmp.ne.s32.totalorder %s155, %s156
      %p165 = scmp.eq.s32.totalorder %s30, 0
      %p166 = por %p164, %p165
      %p167 = scmp.ne.s32.totalorder %s155, %s156
      %p168 = scmp.eq.s32.totalorder %s31, 1
      %p169 = por %p167, %p168
      %p171 = scmp.ne.s32.totalorder %s156, %s170
      %p172 = scmp.eq.s32.totalorder %s31, 0
      %p173 = por %p171, %p172
      %s175 = sadd.s32 %s174, 1
      %p178 = scmp.eq.s32.totalorder %s25, 1
      %p179 = scmp.ne.s32.totalorder %s174, %s176
      %p180 = scmp.eq.s32.totalorder %s25, 0
      %p181 = por %p179, %p180
      %p182 = scmp.ne.s32.totalorder %s174, %s176
      %p183 = scmp.eq.s32.totalorder %s30, 1
      %p184 = por %p182, %p183
      %p185 = scmp.ne.s32.totalorder %s176, %s177
      %p186 = scmp.eq.s32.totalorder %s30, 0
      %p187 = por %p185, %p186
      %p188 = scmp.ne.s32.totalorder %s176, %s177
      %p189 = scmp.eq.s32.totalorder %s31, 1
      %p190 = por %p188, %p189
      %p192 = scmp.ne.s32.totalorder %s177, %s191
      %p193 = scmp.eq.s32.totalorder %s31, 0
      %p194 = por %p192, %p193
      %s196 = sadd.s32 %s195, 1
      %p199 = scmp.eq.s32.totalorder %s25, 1
      %p200 = scmp.ne.s32.totalorder %s195, %s197
      %p201 = scmp.eq.s32.totalorder %s25, 0
      %p202 = por %p200, %p201
      %p203 = scmp.ne.s32.totalorder %s195, %s197
      %p204 = scmp.eq.s32.totalorder %s30, 1
      %p205 = por %p203, %p204
      %p206 = scmp.ne.s32.totalorder %s197, %s198
      %p207 = scmp.eq.s32.totalorder %s30, 0
      %p208 = por %p206, %p207
      %p209 = scmp.ne.s32.totalorder %s197, %s198
      %p210 = scmp.eq.s32.totalorder %s31, 1
      %p211 = por %p209, %p210
      %p213 = scmp.ne.s32.totalorder %s198, %s212
      %p214 = scmp.eq.s32.totalorder %s31, 0
      %p215 = por %p213, %p214
      %s217 = sadd.s32 %s216, 1
      %p220 = scmp.eq.s32.totalorder %s25, 1
      %p221 = scmp.ne.s32.totalorder %s216, %s218
      %p222 = scmp.eq.s32.totalorder %s25, 0
      %p223 = por %p221, %p222
      %p224 = scmp.ne.s32.totalorder %s216, %s218
      %p225 = scmp.eq.s32.totalorder %s30, 1
      %p226 = por %p224, %p225
      %p227 = scmp.ne.s32.totalorder %s218, %s219
      %p228 = scmp.eq.s32.totalorder %s30, 0
      %p229 = por %p227, %p228
      %p230 = scmp.ne.s32.totalorder %s218, %s219
      %p231 = scmp.eq.s32.totalorder %s31, 1
      %p232 = por %p230, %p231
      %p234 = scmp.ne.s32.totalorder %s219, %s233
      %p235 = scmp.eq.s32.totalorder %s31, 0
      %p236 = por %p234, %p235
      %s238 = sadd.s32 %s237, 1
      %p241 = scmp.eq.s32.totalorder %s25, 1
      %p242 = scmp.ne.s32.totalorder %s237, %s239
      %p243 = scmp.eq.s32.totalorder %s25, 0
      %p244 = por %p242, %p243
      %p245 = scmp.ne.s32.totalorder %s237, %s239
      %p246 = scmp.eq.s32.totalorder %s30, 1
      %p247 = por %p245, %p246
      %p248 = scmp.ne.s32.totalorder %s239, %s240
      %p249 = scmp.eq.s32.totalorder %s30, 0
      %p250 = por %p248, %p249
      %p251 = scmp.ne.s32.totalorder %s239, %s240
      %p252 = scmp.eq.s32.totalorder %s31, 1
      %p253 = por %p251, %p252
      %p255 = scmp.ne.s32.totalorder %s240, %s254
      %p256 = scmp.eq.s32.totalorder %s31, 0
      %p257 = por %p255, %p256
      %s259 = sadd.s32 %s258, 1
      %p262 = scmp.eq.s32.totalorder %s25, 1
      %p263 = scmp.ne.s32.totalorder %s258, %s260
      %p264 = scmp.eq.s32.totalorder %s25, 0
      %p265 = por %p263, %p264
      %p266 = scmp.ne.s32.totalorder %s258, %s260
      %p267 = scmp.eq.s32.totalorder %s30, 1
      %p268 = por %p266, %p267
      %p269 = scmp.ne.s32.totalorder %s260, %s261
      %p270 = scmp.eq.s32.totalorder %s30, 0
      %p271 = por %p269, %p270
      %p272 = scmp.ne.s32.totalorder %s260, %s261
      %p273 = scmp.eq.s32.totalorder %s31, 1
      %p274 = por %p272, %p273
      %p276 = scmp.ne.s32.totalorder %s261, %s275
      %p277 = scmp.eq.s32.totalorder %s31, 0
      %p278 = por %p276, %p277
      %s280 = sadd.s32 %s279, 1
      %p283 = scmp.eq.s32.totalorder %s25, 1
      %p284 = scmp.ne.s32.totalorder %s279, %s281
      %p285 = scmp.eq.s32.totalorder %s25, 0
      %p286 = por %p284, %p285
      %p287 = scmp.ne.s32.totalorder %s279, %s281
      %p288 = scmp.eq.s32.totalorder %s30, 1
      %p289 = por %p287, %p288
      %p290 = scmp.ne.s32.totalorder %s281, %s282
      %p291 = scmp.eq.s32.totalorder %s30, 0
      %p292 = por %p290, %p291
      %p293 = scmp.ne.s32.totalorder %s281, %s282
      %p294 = scmp.eq.s32.totalorder %s31, 1
      %p295 = por %p293, %p294
      %p297 = scmp.ne.s32.totalorder %s282, %s296
      %p298 = scmp.eq.s32.totalorder %s31, 0
      %p299 = por %p297, %p298
      %s301 = sadd.s32 %s300, 1
      %p304 = scmp.eq.s32.totalorder %s25, 1
      %p305 = scmp.ne.s32.totalorder %s300, %s302
      %p306 = scmp.eq.s32.totalorder %s25, 0
      %p307 = por %p305, %p306
      %p308 = scmp.ne.s32.totalorder %s300, %s302
      %p309 = scmp.eq.s32.totalorder %s30, 1
      %p310 = por %p308, %p309
      %p311 = scmp.ne.s32.totalorder %s302, %s303
      %p312 = scmp.eq.s32.totalorder %s30, 0
      %p313 = por %p311, %p312
      %p314 = scmp.ne.s32.totalorder %s302, %s303
      %p315 = scmp.eq.s32.totalorder %s31, 1
      %p316 = por %p314, %p315
      %p318 = scmp.ne.s32.totalorder %s303, %s317
      %p319 = scmp.eq.s32.totalorder %s31, 0
      %p320 = por %p318, %p319
      %s322 = sadd.s32 %s321, 1
      %p325 = scmp.eq.s32.totalorder %s25, 1
      %p326 = scmp.ne.s32.totalorder %s321, %s323
      %p327 = scmp.eq.s32.totalorder %s25, 0
      %p328 = por %p326, %p327
      %p329 = scmp.ne.s32.totalorder %s321, %s323
      %p330 = scmp.eq.s32.totalorder %s30, 1
      %p331 = por %p329, %p330
      %p332 = scmp.ne.s32.totalorder %s323, %s324
      %p333 = scmp.eq.s32.totalorder %s30, 0
      %p334 = por %p332, %p333
      %p335 = scmp.ne.s32.totalorder %s323, %s324
      %p336 = scmp.eq.s32.totalorder %s31, 1
      %p337 = por %p335, %p336
      %p339 = scmp.ne.s32.totalorder %s324, %s338
      %p340 = scmp.eq.s32.totalorder %s31, 0
      %p341 = por %p339, %p340
      %s343 = sadd.s32 %s342, 1
      %p346 = scmp.eq.s32.totalorder %s25, 1
      %p347 = scmp.ne.s32.totalorder %s342, %s344
      %p348 = scmp.eq.s32.totalorder %s25, 0
      %p349 = por %p347, %p348
      %p350 = scmp.ne.s32.totalorder %s342, %s344
      %p351 = scmp.eq.s32.totalorder %s30, 1
      %p352 = por %p350, %p351
      %p353 = scmp.ne.s32.totalorder %s344, %s345
      %p354 = scmp.eq.s32.totalorder %s30, 0
      %p355 = por %p353, %p354
      %p356 = scmp.ne.s32.totalorder %s344, %s345
      %p357 = scmp.eq.s32.totalorder %s31, 1
      %p358 = por %p356, %p357
      %p360 = scmp.ne.s32.totalorder %s345, %s359
      %p361 = scmp.eq.s32.totalorder %s31, 0
      %p362 = por %p360, %p361
      %s364 = sadd.s32 %s363, 1
      %p367 = scmp.eq.s32.totalorder %s25, 1
      %p368 = scmp.ne.s32.totalorder %s363, %s365
      %p369 = scmp.eq.s32.totalorder %s25, 0
      %p370 = por %p368, %p369
      %p371 = scmp.ne.s32.totalorder %s363, %s365
      %p372 = scmp.eq.s32.totalorder %s30, 1
      %p373 = por %p371, %p372
      %p374 = scmp.ne.s32.totalorder %s365, %s366
      %p375 = scmp.eq.s32.totalorder %s30, 0
      %p376 = por %p374, %p375
      %p377 = scmp.ne.s32.totalorder %s365, %s366
      %p378 = scmp.eq.s32.totalorder %s31, 1
      %p379 = por %p377, %p378
      %p381 = scmp.ne.s32.totalorder %s366, %s380
      %p382 = scmp.eq.s32.totalorder %s31, 0
      %p383 = por %p381, %p382
      %s384 = ssub.s32 %s25, %s32
      %p385 = scmp.eq.s32.totalorder %s384, 0
      %s387 = sadd.s32 %s386, 1
      %s388 = scalar_select %p385, %s386, %s387
      %p391 = pneg %p385
      %p392 = scmp.eq.s32.totalorder %s25, 1
      %p393 = por %p391, %p392
      %p394 = scmp.ne.s32.totalorder %s386, %s389
      %p395 = scmp.eq.s32.totalorder %s25, 0
      %p396 = por %p394, %p395
      %p397 = scmp.ne.s32.totalorder %s386, %s389
      %p398 = scmp.eq.s32.totalorder %s30, 1
      %p399 = por %p397, %p398
      %p400 = scmp.ne.s32.totalorder %s389, %s390
      %p401 = scmp.eq.s32.totalorder %s30, 0
      %p402 = por %p400, %p401
      %p403 = scmp.ne.s32.totalorder %s389, %s390
      %p404 = scmp.eq.s32.totalorder %s31, 1
      %p405 = por %p403, %p404
      %p407 = scmp.ne.s32.totalorder %s390, %s406
      %p408 = scmp.eq.s32.totalorder %s31, 0
      %p409 = por %p407, %p408
      %p410 = scmp.le.s32.totalorder 1, %s25
      %p411 = scmp.lt.s32.totalorder %s25, 3
      %p412 = pnand %p410, %p411
      %p413 = pneg %p412
      // Predicated region
      $region9: #{_lambda_.1} parent=5 // pred_check
        _
      $region10: #{_lambda_.1} parent=5 // pred_check_branch
        %415 = sbr.rel (%p412) target = $region12
      $region11: #{_lambda_.1} parent=5 // pred_region
        %s416 = ssub.s32 %s25, 1
        // Predicated region
        $region13: #{_lambda_.1} parent=11 // pred_check
          %p417 = pneg %p124
        $region14: #{_lambda_.1} parent=11 // pred_check_branch
          %419 = sbr.rel (%p417) target = $region16
        $region15: #{_lambda_.1} parent=11 // pred_region
          _
        $region16: #{_lambda_.1} parent=11 // pred_fallthru
          _
        // Predicated region
        $region17: #{_lambda_.1} parent=11 // pred_check
          %p420 = pneg %p145
        $region18: #{_lambda_.1} parent=11 // pred_check_branch
          %422 = sbr.rel (%p420) target = $region20
        $region19: #{_lambda_.1} parent=11 // pred_region
          _
        $region20: #{_lambda_.1} parent=11 // pred_fallthru
          _
        // Predicated region
        $region21: #{_lambda_.1} parent=11 // pred_check
          %p423 = pneg %p166
        $region22: #{_lambda_.1} parent=11 // pred_check_branch
          %425 = sbr.rel (%p423) target = $region24
        $region23: #{_lambda_.1} parent=11 // pred_region
          _
        $region24: #{_lambda_.1} parent=11 // pred_fallthru
          _
        // Predicated region
        $region25: #{_lambda_.1} parent=11 // pred_check
          %p426 = pneg %p187
        $region26: #{_lambda_.1} parent=11 // pred_check_branch
          %428 = sbr.rel (%p426) target = $region28
        $region27: #{_lambda_.1} parent=11 // pred_region
          _
        $region28: #{_lambda_.1} parent=11 // pred_fallthru
          _
        // Predicated region
        $region29: #{_lambda_.1} parent=11 // pred_check
          %p429 = pneg %p208
        $region30: #{_lambda_.1} parent=11 // pred_check_branch
          %431 = sbr.rel (%p429) target = $region32
        $region31: #{_lambda_.1} parent=11 // pred_region
          _
        $region32: #{_lambda_.1} parent=11 // pred_fallthru
          _
        // Predicated region
        $region33: #{_lambda_.1} parent=11 // pred_check
          %p432 = pneg %p229
        $region34: #{_lambda_.1} parent=11 // pred_check_branch
          %434 = sbr.rel (%p432) target = $region36
        $region35: #{_lambda_.1} parent=11 // pred_region
          _
        $region36: #{_lambda_.1} parent=11 // pred_fallthru
          _
        // Predicated region
        $region37: #{_lambda_.1} parent=11 // pred_check
          %p435 = pneg %p250
        $region38: #{_lambda_.1} parent=11 // pred_check_branch
          %437 = sbr.rel (%p435) target = $region40
        $region39: #{_lambda_.1} parent=11 // pred_region
          _
        $region40: #{_lambda_.1} parent=11 // pred_fallthru
          _
        // Predicated region
        $region41: #{_lambda_.1} parent=11 // pred_check
          %p438 = pneg %p271
        $region42: #{_lambda_.1} parent=11 // pred_check_branch
          %440 = sbr.rel (%p438) target = $region44
        $region43: #{_lambda_.1} parent=11 // pred_region
          _
        $region44: #{_lambda_.1} parent=11 // pred_fallthru
          _
        // Predicated region
        $region45: #{_lambda_.1} parent=11 // pred_check
          %p441 = pneg %p292
        $region46: #{_lambda_.1} parent=11 // pred_check_branch
          %443 = sbr.rel (%p441) target = $region48
        $region47: #{_lambda_.1} parent=11 // pred_region
          _
        $region48: #{_lambda_.1} parent=11 // pred_fallthru
          _
        // Predicated region
        $region49: #{_lambda_.1} parent=11 // pred_check
          %p444 = pneg %p313
        $region50: #{_lambda_.1} parent=11 // pred_check_branch
          %446 = sbr.rel (%p444) target = $region52
        $region51: #{_lambda_.1} parent=11 // pred_region
          _
        $region52: #{_lambda_.1} parent=11 // pred_fallthru
          _
        // Predicated region
        $region53: #{_lambda_.1} parent=11 // pred_check
          %p447 = pneg %p334
        $region54: #{_lambda_.1} parent=11 // pred_check_branch
          %449 = sbr.rel (%p447) target = $region56
        $region55: #{_lambda_.1} parent=11 // pred_region
          _
        $region56: #{_lambda_.1} parent=11 // pred_fallthru
          _
        // Predicated region
        $region57: #{_lambda_.1} parent=11 // pred_check
          %p450 = pneg %p355
        $region58: #{_lambda_.1} parent=11 // pred_check_branch
          %452 = sbr.rel (%p450) target = $region60
        $region59: #{_lambda_.1} parent=11 // pred_region
          _
        $region60: #{_lambda_.1} parent=11 // pred_fallthru
          _
        // Predicated region
        $region61: #{_lambda_.1} parent=11 // pred_check
          %p453 = pneg %p376
        $region62: #{_lambda_.1} parent=11 // pred_check_branch
          %455 = sbr.rel (%p453) target = $region64
        $region63: #{_lambda_.1} parent=11 // pred_region
          _
        $region64: #{_lambda_.1} parent=11 // pred_fallthru
          _
      $region12: #{_lambda_.1} parent=5 // pred_fallthru
        _
      %p456 = scmp.lt.s32.totalorder %s25, 2
      // Predicated region
      $region65: #{_lambda_.1} parent=5 // pred_check
        %p457 = pneg %p456
      $region66: #{_lambda_.1} parent=5 // pred_check_branch
        %459 = sbr.rel (%p457) target = $region68
      $region67: #{_lambda_.1} parent=5 // pred_region
        // Predicated region
        $region69: #{_lambda_.1} parent=67 // pred_check
          %p460 = pneg %p45
        $region70: #{_lambda_.1} parent=67 // pred_check_branch
          %462 = sbr.rel (%p460) target = $region72
        $region71: #{_lambda_.1} parent=67 // pred_region
          %p463 = scmp.lt.s32.totalorder %s25, 1
          %s464 = scalar_select %p463, %s25, 1
          %s465 = smul.addr %s464, 2
          %s466 = smul.addr %s465, 8
          %s467 = scalar_lea.vmem %s0, %s466
        $region72: #{_lambda_.1} parent=67 // pred_fallthru
          _
        // Predicated region
        $region73: #{_lambda_.1} parent=67 // pred_check
          %p468 = pneg %p71
        $region74: #{_lambda_.1} parent=67 // pred_check_branch
          %470 = sbr.rel (%p468) target = $region76
        $region75: #{_lambda_.1} parent=67 // pred_region
          %p471 = scmp.lt.s32.totalorder %s25, 1
          %s472 = scalar_select %p471, %s25, 1
          %s473 = smul.addr %s472, 32
          %s474 = smul.addr %s473, 8
          %s475 = scalar_lea.vmem %s1, %s474
        $region76: #{_lambda_.1} parent=67 // pred_fallthru
          _
        // Predicated region
        $region77: #{_lambda_.1} parent=67 // pred_check
          %p476 = pneg %p97
        $region78: #{_lambda_.1} parent=67 // pred_check_branch
          %478 = sbr.rel (%p476) target = $region80
        $region79: #{_lambda_.1} parent=67 // pred_region
          %p479 = scmp.lt.s32.totalorder %s25, 1
          %s480 = scalar_select %p479, %s25, 1
          %s481 = smul.addr %s480, 32
          %s482 = smul.addr %s481, 8
          %s483 = scalar_lea.vmem %s2, %s482
        $region80: #{_lambda_.1} parent=67 // pred_fallthru
          _
      $region68: #{_lambda_.1} parent=5 // pred_fallthru
        _
      %p484 = scmp.le.s32.totalorder 1, %s25
      %p485 = scmp.lt.s32.totalorder %s25, 3
      %p486 = pnand %p484, %p485
      %p487 = pneg %p486
      // Predicated region
      $region81: #{_lambda_.1} parent=5 // pred_check
        _
      $region82: #{_lambda_.1} parent=5 // pred_check_branch
        %489 = sbr.rel (%p486) target = $region84
      $region83: #{_lambda_.1} parent=5 // pred_region
        %s490 = ssub.s32 %s25, 1
        %p491 = scmp.lt.s32.totalorder %s30, 1
        %s492 = scalar_select %p491, %s30, 1
        %s493 = smul.addr %s492, 2
        %s494 = smul.addr %s493, 8
        %s495 = scalar_lea.vmem %s0, %s494
        %p496 = pneg %p51
        %p497 = pneg %p48
        %p498 = scmp.lt.s32.totalorder %s30, 1
        %s499 = scalar_select %p498, %s30, 1
        %s500 = smul.addr %s499, 32
        %s501 = smul.addr %s500, 8
        %s502 = scalar_lea.vmem %s1, %s501
        %p503 = pneg %p77
        %p504 = pneg %p74
        %p505 = scmp.lt.s32.totalorder %s30, 1
        %s506 = scalar_select %p505, %s30, 1
        %s507 = smul.addr %s506, 32
        %s508 = smul.addr %s507, 8
        %s509 = scalar_lea.vmem %s2, %s508
        %p510 = pneg %p103
        %p511 = pneg %p100
        %p512 = pneg %p124
        %p513 = pneg %p121
        %p514 = pneg %p145
        %p515 = pneg %p142
        %p516 = pneg %p166
        %p517 = pneg %p163
        %p518 = pneg %p187
        %p519 = pneg %p184
        %p520 = pneg %p208
        %p521 = pneg %p205
        %p522 = pneg %p229
        %p523 = pneg %p226
        %p524 = pneg %p250
        %p525 = pneg %p247
        %p526 = pneg %p271
        %p527 = pneg %p268
        %p528 = pneg %p292
        %p529 = pneg %p289
        %p530 = pneg %p313
        %p531 = pneg %p310
        %p532 = pneg %p334
        %p533 = pneg %p331
        %p534 = pneg %p355
        %p535 = pneg %p352
        %p536 = pneg %p376
        %p537 = pneg %p373
        %p538 = pneg %p402
        %p539 = pneg %p399
        %s540 = sand.u32 %s389, 1
        %s541 = scalar_lea.sflag [#allocation4], %s540
        %s542 = sand.u32 %s389, 1
        %s543 = smul.addr %s542, 256
        %s544 = scalar_lea.vmem [#allocation3], %s543
        %p545 = scmp.lt.s32.totalorder %s30, 1
        %s546 = scalar_select %p545, %s30, 1
        %s547 = smul.addr %s546, 2
        %s548 = smul.addr %s547, 8
        %s549 = scalar_lea.vmem %s0, %s548
        %p550 = scmp.lt.s32.totalorder %s30, 1
        %s551 = scalar_select %p550, %s30, 1
        %s552 = smul.addr %s551, 32
        %s553 = smul.addr %s552, 8
        %s554 = scalar_lea.vmem %s1, %s553
        %p555 = scmp.lt.s32.totalorder %s30, 1
        %s556 = scalar_select %p555, %s30, 1
        %s557 = smul.addr %s556, 32
        %s558 = smul.addr %s557, 8
        %s559 = scalar_lea.vmem %s2, %s558
        %v561 = vld [vmem:[%s549] sm:$0xff]
        %v562 = vld [vmem:[%s549 + $0x8] sm:$0xff]
        %v563 = vld [vmem:[%s4] sm:$0x1]
        %v564 = vld [vmem:[%s4 + $0x1] sm:$0x1]
        %v565 = vld [vmem:[%s4 + $0x2] sm:$0x1]
        %v566 = vld [vmem:[%s4 + $0x3] sm:$0x1]
        %v567 = vld [vmem:[%s4 + $0x4] sm:$0x1]
        %v568 = vld [vmem:[%s4 + $0x5] sm:$0x1]
        %v569 = vld [vmem:[%s4 + $0x6] sm:$0x1]
        %v570 = vld [vmem:[%s4 + $0x7] sm:$0x1]
        %v571 = vld [vmem:[%s4 + $0x8] sm:$0x1]
        %v581 = vlaneseq
        %v582 = vshrl.u32 %v581, 7
        %v583 = vsub.s32 0, %v582
        %v584 = vrot.slane %v563, %v583
        %v585 = vlaneseq
        %v586 = vshrl.u32 %v585, 7
        %v587 = vsub.s32 0, %v586
        %v588 = vrot.slane %v564, %v587
        %v589 = vlaneseq
        %v590 = vshrl.u32 %v589, 7
        %v591 = vsub.s32 0, %v590
        %v592 = vrot.slane %v565, %v591
        %v593 = vlaneseq
        %v594 = vshrl.u32 %v593, 7
        %v595 = vsub.s32 0, %v594
        %v596 = vrot.slane %v566, %v595
        %v597 = vlaneseq
        %v598 = vshrl.u32 %v597, 7
        %v599 = vsub.s32 0, %v598
        %v600 = vrot.slane %v567, %v599
        %v601 = vlaneseq
        %v602 = vshrl.u32 %v601, 7
        %v603 = vsub.s32 0, %v602
        %v604 = vrot.slane %v568, %v603
        %v605 = vlaneseq
        %v606 = vshrl.u32 %v605, 7
        %v607 = vsub.s32 0, %v606
        %v608 = vrot.slane %v569, %v607
        %v609 = vlaneseq
        %v610 = vshrl.u32 %v609, 7
        %v611 = vsub.s32 0, %v610
        %v612 = vrot.slane %v570, %v611
        %v613 = vlaneseq
        %v614 = vshrl.u32 %v613, 7
        %v615 = vsub.s32 0, %v614
        %v616 = vrot.slane %v571, %v615
        %v626 = vmul.f32 %v561, %v584
        %v627 = vmul.f32 %v562, %v584
        %v628 = vmul.f32 %v561, %v588
        %v629 = vmul.f32 %v562, %v588
        %v630 = vmul.f32 %v561, %v592
        %v631 = vmul.f32 %v562, %v592
        %v632 = vmul.f32 %v561, %v596
        %v633 = vmul.f32 %v562, %v596
        %v634 = vmul.f32 %v561, %v600
        %v635 = vmul.f32 %v562, %v600
        %v636 = vmul.f32 %v561, %v604
        %v637 = vmul.f32 %v562, %v604
        %v638 = vmul.f32 %v561, %v608
        %v639 = vmul.f32 %v562, %v608
        %v640 = vmul.f32 %v561, %v612
        %v641 = vmul.f32 %v562, %v612
        %v642 = vmul.f32 %v561, %v616
        %v643 = vmul.f32 %v562, %v616
        %v644 = vld [vmem:[%s3] sm:$0xff]
        %v645 = vld [vmem:[%s3 + $0x8] sm:$0xff]
        %v646 = vld [vmem:[%s3 + $0x10] sm:$0xff]
        %v647 = vld [vmem:[%s3 + $0x18] sm:$0xff]
        %v648 = vld [vmem:[%s3 + $0x20] sm:$0xff]
        %v649 = vld [vmem:[%s3 + $0x28] sm:$0xff]
        %v650 = vld [vmem:[%s3 + $0x30] sm:$0xff]
        %v651 = vld [vmem:[%s3 + $0x38] sm:$0xff]
        %v652 = vld [vmem:[%s3 + $0x40] sm:$0xff]
        %v653 = vld [vmem:[%s3 + $0x48] sm:$0xff]
        %v654 = vld [vmem:[%s3 + $0x50] sm:$0xff]
        %v655 = vld [vmem:[%s3 + $0x58] sm:$0xff]
        %v656 = vld [vmem:[%s3 + $0x60] sm:$0xff]
        %v657 = vld [vmem:[%s3 + $0x68] sm:$0xff]
        %v658 = vld [vmem:[%s3 + $0x70] sm:$0xff]
        %v659 = vld [vmem:[%s3 + $0x78] sm:$0xff]
        %v660 = vld [vmem:[%s3 + $0x80] sm:$0xff]
        %v661 = vld [vmem:[%s3 + $0x88] sm:$0xff]
        %v662 = vld [vmem:[%s3 + $0x90] sm:$0xff]
        %v663 = vld [vmem:[%s3 + $0x98] sm:$0xff]
        %v664 = vld [vmem:[%s3 + $0xa0] sm:$0xff]
        %v665 = vld [vmem:[%s3 + $0xa8] sm:$0xff]
        %v666 = vld [vmem:[%s3 + $0xb0] sm:$0xff]
        %v667 = vld [vmem:[%s3 + $0xb8] sm:$0xff]
        %v668 = vld [vmem:[%s3 + $0xc0] sm:$0xff]
        %v669 = vld [vmem:[%s3 + $0xc8] sm:$0xff]
        %v670 = vld [vmem:[%s3 + $0xd0] sm:$0xff]
        %v671 = vld [vmem:[%s3 + $0xd8] sm:$0xff]
        %v672 = vld [vmem:[%s3 + $0xe0] sm:$0xff]
        %v673 = vld [vmem:[%s3 + $0xe8] sm:$0xff]
        %v674 = vld [vmem:[%s3 + $0xf0] sm:$0xff]
        %v675 = vld [vmem:[%s3 + $0xf8] sm:$0xff]
        %v676 = vpack.c.bf16 %v627, %v626
        %v677 = vpack.c.bf16 %v629, %v628
        %v678 = vpack.c.bf16 %v631, %v630
        %v679 = vpack.c.bf16 %v633, %v632
        %v680 = vpack.c.bf16 %v635, %v634
        %v681 = vpack.c.bf16 %v637, %v636
        %v682 = vpack.c.bf16 %v639, %v638
        %v683 = vpack.c.bf16 %v641, %v640
        %v684 = vpack.c.bf16 %v643, %v642
        %v685 = vld [vmem:[%s5] sm:$0x1]
        %v687 = vlaneseq
        %v688 = vshrl.u32 %v687, 7
        %v689 = vsub.s32 0, %v688
        %v690 = vrot.slane %v685, %v689
        %v724 = vunpack.c.l.b16 %v644
        %v725 = vunpack.c.h.b16 %v644
        %v726 = vunpack.c.l.b16 %v645
        %v727 = vunpack.c.h.b16 %v645
        %v728 = vunpack.c.l.b16 %v646
        %v729 = vunpack.c.h.b16 %v646
        %v730 = vunpack.c.l.b16 %v647
        %v731 = vunpack.c.h.b16 %v647
        %v732 = vunpack.c.l.b16 %v648
        %v733 = vunpack.c.h.b16 %v648
        %v734 = vunpack.c.l.b16 %v649
        %v735 = vunpack.c.h.b16 %v649
        %v736 = vunpack.c.l.b16 %v650
        %v737 = vunpack.c.h.b16 %v650
        %v738 = vunpack.c.l.b16 %v651
        %v739 = vunpack.c.h.b16 %v651
        %v740 = vunpack.c.l.b16 %v652
        %v741 = vunpack.c.h.b16 %v652
        %v742 = vunpack.c.l.b16 %v653
        %v743 = vunpack.c.h.b16 %v653
        %v744 = vunpack.c.l.b16 %v654
        %v745 = vunpack.c.h.b16 %v654
        %v746 = vunpack.c.l.b16 %v655
        %v747 = vunpack.c.h.b16 %v655
        %v748 = vunpack.c.l.b16 %v656
        %v749 = vunpack.c.h.b16 %v656
        %v750 = vunpack.c.l.b16 %v657
        %v751 = vunpack.c.h.b16 %v657
        %v752 = vunpack.c.l.b16 %v658
        %v753 = vunpack.c.h.b16 %v658
        %v754 = vunpack.c.l.b16 %v659
        %v755 = vunpack.c.h.b16 %v659
        %v756 = vunpack.c.l.b16 %v660
        %v757 = vunpack.c.h.b16 %v660
        %v758 = vunpack.c.l.b16 %v661
        %v759 = vunpack.c.h.b16 %v661
        %v760 = vunpack.c.l.b16 %v662
        %v761 = vunpack.c.h.b16 %v662
        %v762 = vunpack.c.l.b16 %v663
        %v763 = vunpack.c.h.b16 %v663
        %v764 = vunpack.c.l.b16 %v664
        %v765 = vunpack.c.h.b16 %v664
        %v766 = vunpack.c.l.b16 %v665
        %v767 = vunpack.c.h.b16 %v665
        %v768 = vunpack.c.l.b16 %v666
        %v769 = vunpack.c.h.b16 %v666
        %v770 = vunpack.c.l.b16 %v667
        %v771 = vunpack.c.h.b16 %v667
        %v772 = vunpack.c.l.b16 %v668
        %v773 = vunpack.c.h.b16 %v668
        %v774 = vunpack.c.l.b16 %v669
        %v775 = vunpack.c.h.b16 %v669
        %v776 = vunpack.c.l.b16 %v670
        %v777 = vunpack.c.h.b16 %v670
        %v778 = vunpack.c.l.b16 %v671
        %v779 = vunpack.c.h.b16 %v671
        %v780 = vunpack.c.l.b16 %v672
        %v781 = vunpack.c.h.b16 %v672
        %v782 = vunpack.c.l.b16 %v673
        %v783 = vunpack.c.h.b16 %v673
        %v784 = vunpack.c.l.b16 %v674
        %v785 = vunpack.c.h.b16 %v674
        %v786 = vunpack.c.l.b16 %v675
        %v787 = vunpack.c.h.b16 %v675
        %v788 = vpack.c.b16 %v726, %v724
        %v789 = vpack.c.b16 %v727, %v725
        %v790 = vpack.c.b16 %v730, %v728
        %v791 = vpack.c.b16 %v731, %v729
        %v792 = vpack.c.b16 %v734, %v732
        %v793 = vpack.c.b16 %v735, %v733
        %v794 = vpack.c.b16 %v738, %v736
        %v795 = vpack.c.b16 %v739, %v737
        %v796 = vpack.c.b16 %v742, %v740
        %v797 = vpack.c.b16 %v743, %v741
        %v798 = vpack.c.b16 %v746, %v744
        %v799 = vpack.c.b16 %v747, %v745
        %v800 = vpack.c.b16 %v750, %v748
        %v801 = vpack.c.b16 %v751, %v749
        %v802 = vpack.c.b16 %v754, %v752
        %v803 = vpack.c.b16 %v755, %v753
        %v804 = vpack.c.b16 %v758, %v756
        %v805 = vpack.c.b16 %v759, %v757
        %v806 = vpack.c.b16 %v762, %v760
        %v807 = vpack.c.b16 %v763, %v761
        %v808 = vpack.c.b16 %v766, %v764
        %v809 = vpack.c.b16 %v767, %v765
        %v810 = vpack.c.b16 %v770, %v768
        %v811 = vpack.c.b16 %v771, %v769
        %v812 = vpack.c.b16 %v774, %v772
        %v813 = vpack.c.b16 %v775, %v773
        %v814 = vpack.c.b16 %v778, %v776
        %v815 = vpack.c.b16 %v779, %v777
        %v816 = vpack.c.b16 %v782, %v780
        %v817 = vpack.c.b16 %v783, %v781
        %v818 = vpack.c.b16 %v786, %v784
        %v819 = vpack.c.b16 %v787, %v785
        %vm836 = vcmask 130048
        %v838 = vsel %vm836, %v789, 0
        %v841 = vsel %vm836, %v791, 0
        %v844 = vsel %vm836, %v793, 0
        %v847 = vsel %vm836, %v795, 0
        %v850 = vsel %vm836, %v797, 0
        %v853 = vsel %vm836, %v799, 0
        %v856 = vsel %vm836, %v801, 0
        %v859 = vsel %vm836, %v803, 0
        %v862 = vsel %vm836, %v805, 0
        %v865 = vsel %vm836, %v807, 0
        %v868 = vsel %vm836, %v809, 0
        %v871 = vsel %vm836, %v811, 0
        %v874 = vsel %vm836, %v813, 0
        %v877 = vsel %vm836, %v815, 0
        %v880 = vsel %vm836, %v817, 0
        %v883 = vsel %vm836, %v819, 0
        %885 = vmatprep.subr.bf16.mxu0 0
        %886 = vmatpush1.bf16.msra.mxu0 %v683
        %887 = vmatprep.subr.bf16.mxu0 0
        %888 = vmatpush1.bf16.msra.mxu0 %v682
        %889 = vmatprep.subr.bf16.mxu0 0
        %890 = vmatpush1.bf16.msra.mxu0 %v681
        %891 = vmatprep.subr.bf16.mxu0 0
        %892 = vmatpush1.bf16.msra.mxu0 %v680
        %893 = vmatprep.subr.bf16.mxu0 0
        %894 = vmatpush1.bf16.msra.mxu0 %v679
        %895 = vmatprep.subr.bf16.mxu0 0
        %896 = vmatpush1.bf16.msra.mxu0 %v678
        %897 = vmatprep.subr.bf16.mxu0 0
        %898 = vmatpush1.bf16.msra.mxu0 %v677
        %899 = vmatprep.subr.bf16.mxu0 0
        %900 = vmatpush1.bf16.msra.mxu0 %v676
        %901 = vmatprep.subr.bf16.mxu0 0
        %902 = vmatpush2.bf16.msra.mxu0 0
        %903 = vmatprep.subr.bf16.mxu0 0
        %904 = vmatpush2.bf16.msra.mxu0 0
        %905 = vmatprep.subr.bf16.mxu0 0
        %906 = vmatpush2.bf16.msra.mxu0 0
        %907 = vmatprep.subr.bf16.mxu0 0
        %908 = vmatpush2.bf16.msra.mxu0 0
        %909 = vmatprep.subr.bf16.mxu0 0
        %910 = vmatpush2.bf16.msra.mxu0 0
        %911 = vmatprep.subr.bf16.mxu0 0
        %912 = vmatpush2.bf16.msra.mxu0 0
        %913 = vmatprep.subr.bf16.mxu0 0
        %914 = vmatpush2.bf16.msra.mxu0 0
        %915 = vmatprep.subr.bf16.mxu0 0
        %916 = vmatpush2.bf16.msra.mxu0 %v684
        %917 = vmatprep.mubr.bf16.mxu0 %v838
        %918 = vmatmul.mubr.bf16.gmra.mxu0 %v788
        %v919 = vpop.f32.mrf.mxu0
        %v920 = vadd.f32 %v690, %v919
        %v921 = vpop.f32.mrf.mxu0
        %v922 = vpop.f32.mrf.mxu0
        %v923 = vadd.f32 %v690, %v922
        %v924 = vpop.f32.mrf.mxu0
        %925 = vmatprep.mubr.bf16.mxu0 %v841
        %926 = vmatmul.mubr.bf16.gmra.mxu0 %v790
        %v927 = vpop.f32.mrf.mxu0
        %v928 = vadd.f32 %v690, %v927
        %v929 = vpop.f32.mrf.mxu0
        %v930 = vpop.f32.mrf.mxu0
        %v931 = vadd.f32 %v690, %v930
        %v932 = vpop.f32.mrf.mxu0
        %933 = vmatprep.mubr.bf16.mxu0 %v844
        %934 = vmatmul.mubr.bf16.gmra.mxu0 %v792
        %v935 = vpop.f32.mrf.mxu0
        %v936 = vadd.f32 %v690, %v935
        %v937 = vpop.f32.mrf.mxu0
        %v938 = vpop.f32.mrf.mxu0
        %v939 = vadd.f32 %v690, %v938
        %v940 = vpop.f32.mrf.mxu0
        %941 = vmatprep.mubr.bf16.mxu0 %v847
        %942 = vmatmul.mubr.bf16.gmra.mxu0 %v794
        %v943 = vpop.f32.mrf.mxu0
        %v944 = vadd.f32 %v690, %v943
        %v945 = vpop.f32.mrf.mxu0
        %v946 = vpop.f32.mrf.mxu0
        %v947 = vadd.f32 %v690, %v946
        %v948 = vpop.f32.mrf.mxu0
        %949 = vmatprep.mubr.bf16.mxu0 %v850
        %950 = vmatmul.mubr.bf16.gmra.mxu0 %v796
        %v951 = vpop.f32.mrf.mxu0
        %v952 = vadd.f32 %v690, %v951
        %v953 = vpop.f32.mrf.mxu0
        %v954 = vpop.f32.mrf.mxu0
        %v955 = vadd.f32 %v690, %v954
        %v956 = vpop.f32.mrf.mxu0
        %957 = vmatprep.mubr.bf16.mxu0 %v853
        %958 = vmatmul.mubr.bf16.gmra.mxu0 %v798
        %v959 = vpop.f32.mrf.mxu0
        %v960 = vadd.f32 %v690, %v959
        %v961 = vpop.f32.mrf.mxu0
        %v962 = vpop.f32.mrf.mxu0
        %v963 = vadd.f32 %v690, %v962
        %v964 = vpop.f32.mrf.mxu0
        %965 = vmatprep.mubr.bf16.mxu0 %v856
        %966 = vmatmul.mubr.bf16.gmra.mxu0 %v800
        %v967 = vpop.f32.mrf.mxu0
        %v968 = vadd.f32 %v690, %v967
        %v969 = vpop.f32.mrf.mxu0
        %v970 = vpop.f32.mrf.mxu0
        %v971 = vadd.f32 %v690, %v970
        %v972 = vpop.f32.mrf.mxu0
        %973 = vmatprep.mubr.bf16.mxu0 %v859
        %974 = vmatmul.mubr.bf16.gmra.mxu0 %v802
        %v975 = vpop.f32.mrf.mxu0
        %v976 = vadd.f32 %v690, %v975
        %v977 = vpop.f32.mrf.mxu0
        %v978 = vpop.f32.mrf.mxu0
        %v979 = vadd.f32 %v690, %v978
        %v980 = vpop.f32.mrf.mxu0
        %981 = vmatprep.mubr.bf16.mxu0 %v862
        %982 = vmatmul.mubr.bf16.gmra.mxu0 %v804
        %v983 = vpop.f32.mrf.mxu0
        %v984 = vadd.f32 %v690, %v983
        %v985 = vpop.f32.mrf.mxu0
        %v986 = vpop.f32.mrf.mxu0
        %v987 = vadd.f32 %v690, %v986
        %v988 = vpop.f32.mrf.mxu0
        %989 = vmatprep.mubr.bf16.mxu0 %v865
        %990 = vmatmul.mubr.bf16.gmra.mxu0 %v806
        %v991 = vpop.f32.mrf.mxu0
        %v992 = vadd.f32 %v690, %v991
        %v993 = vpop.f32.mrf.mxu0
        %v994 = vpop.f32.mrf.mxu0
        %v995 = vadd.f32 %v690, %v994
        %v996 = vpop.f32.mrf.mxu0
        %997 = vmatprep.mubr.bf16.mxu0 %v868
        %998 = vmatmul.mubr.bf16.gmra.mxu0 %v808
        %v999 = vpop.f32.mrf.mxu0
        %v1000 = vadd.f32 %v690, %v999
        %v1001 = vpop.f32.mrf.mxu0
        %v1002 = vpop.f32.mrf.mxu0
        %v1003 = vadd.f32 %v690, %v1002
        %v1004 = vpop.f32.mrf.mxu0
        %1005 = vmatprep.mubr.bf16.mxu0 %v871
        %1006 = vmatmul.mubr.bf16.gmra.mxu0 %v810
        %v1007 = vpop.f32.mrf.mxu0
        %v1008 = vadd.f32 %v690, %v1007
        %v1009 = vpop.f32.mrf.mxu0
        %v1010 = vpop.f32.mrf.mxu0
        %v1011 = vadd.f32 %v690, %v1010
        %v1012 = vpop.f32.mrf.mxu0
        %1013 = vmatprep.mubr.bf16.mxu0 %v874
        %1014 = vmatmul.mubr.bf16.gmra.mxu0 %v812
        %v1015 = vpop.f32.mrf.mxu0
        %v1016 = vadd.f32 %v690, %v1015
        %v1017 = vpop.f32.mrf.mxu0
        %v1018 = vpop.f32.mrf.mxu0
        %v1019 = vadd.f32 %v690, %v1018
        %v1020 = vpop.f32.mrf.mxu0
        %1021 = vmatprep.mubr.bf16.mxu0 %v877
        %1022 = vmatmul.mubr.bf16.gmra.mxu0 %v814
        %v1023 = vpop.f32.mrf.mxu0
        %v1024 = vadd.f32 %v690, %v1023
        %v1025 = vpop.f32.mrf.mxu0
        %v1026 = vpop.f32.mrf.mxu0
        %v1027 = vadd.f32 %v690, %v1026
        %v1028 = vpop.f32.mrf.mxu0
        %1029 = vmatprep.mubr.bf16.mxu0 %v880
        %1030 = vmatmul.mubr.bf16.gmra.mxu0 %v816
        %v1031 = vpop.f32.mrf.mxu0
        %v1032 = vadd.f32 %v690, %v1031
        %v1033 = vpop.f32.mrf.mxu0
        %v1034 = vpop.f32.mrf.mxu0
        %v1035 = vadd.f32 %v690, %v1034
        %v1036 = vpop.f32.mrf.mxu0
        %1037 = vmatprep.mubr.bf16.mxu0 %v883
        %1038 = vmatmul.mubr.bf16.gmra.mxu0 %v818
        %v1039 = vpop.f32.mrf.mxu0
        %v1040 = vadd.f32 %v690, %v1039
        %v1041 = vpop.f32.mrf.mxu0
        %v1042 = vpop.f32.mrf.mxu0
        %v1043 = vadd.f32 %v690, %v1042
        %v1044 = vpop.f32.mrf.mxu0
        %1045 = vdwg.mxu0
        %v1046 = vmax.f32 %v920, 0.0
        %v1047 = vmax.f32 %v923, 0.0
        %v1048 = vmax.f32 %v928, 0.0
        %v1049 = vmax.f32 %v931, 0.0
        %v1050 = vmax.f32 %v936, 0.0
        %v1051 = vmax.f32 %v939, 0.0
        %v1052 = vmax.f32 %v944, 0.0
        %v1053 = vmax.f32 %v947, 0.0
        %v1054 = vmax.f32 %v952, 0.0
        %v1055 = vmax.f32 %v955, 0.0
        %v1056 = vmax.f32 %v960, 0.0
        %v1057 = vmax.f32 %v963, 0.0
        %v1058 = vmax.f32 %v968, 0.0
        %v1059 = vmax.f32 %v971, 0.0
        %v1060 = vmax.f32 %v976, 0.0
        %v1061 = vmax.f32 %v979, 0.0
        %v1062 = vmax.f32 %v984, 0.0
        %v1063 = vmax.f32 %v987, 0.0
        %v1064 = vmax.f32 %v992, 0.0
        %v1065 = vmax.f32 %v995, 0.0
        %v1066 = vmax.f32 %v1000, 0.0
        %v1067 = vmax.f32 %v1003, 0.0
        %v1068 = vmax.f32 %v1008, 0.0
        %v1069 = vmax.f32 %v1011, 0.0
        %v1070 = vmax.f32 %v1016, 0.0
        %v1071 = vmax.f32 %v1019, 0.0
        %v1072 = vmax.f32 %v1024, 0.0
        %v1073 = vmax.f32 %v1027, 0.0
        %v1074 = vmax.f32 %v1032, 0.0
        %v1075 = vmax.f32 %v1035, 0.0
        %v1076 = vmax.f32 %v1040, 0.0
        %v1077 = vmax.f32 %v1043, 0.0
        %v1078 = vpack.c.bf16 %v1047, %v1046
        %v1079 = vpack.c.bf16 %v1049, %v1048
        %v1080 = vpack.c.bf16 %v1051, %v1050
        %v1081 = vpack.c.bf16 %v1053, %v1052
        %v1082 = vpack.c.bf16 %v1055, %v1054
        %v1083 = vpack.c.bf16 %v1057, %v1056
        %v1084 = vpack.c.bf16 %v1059, %v1058
        %v1085 = vpack.c.bf16 %v1061, %v1060
        %v1086 = vpack.c.bf16 %v1063, %v1062
        %v1087 = vpack.c.bf16 %v1065, %v1064
        %v1088 = vpack.c.bf16 %v1067, %v1066
        %v1089 = vpack.c.bf16 %v1069, %v1068
        %v1090 = vpack.c.bf16 %v1071, %v1070
        %v1091 = vpack.c.bf16 %v1073, %v1072
        %v1092 = vpack.c.bf16 %v1075, %v1074
        %v1093 = vpack.c.bf16 %v1077, %v1076
        %v1094 = vld [vmem:[%s6] sm:$0xf]
        %v1095 = vld [vmem:[%s6 + $0x4] sm:$0xf]
        %v1096 = vld [vmem:[%s6 + $0x8] sm:$0xf]
        %v1097 = vld [vmem:[%s6 + $0xc] sm:$0xf]
        %v1098 = vld [vmem:[%s6 + $0x10] sm:$0xf]
        %v1099 = vld [vmem:[%s6 + $0x14] sm:$0xf]
        %v1100 = vld [vmem:[%s6 + $0x18] sm:$0xf]
        %v1101 = vld [vmem:[%s6 + $0x1c] sm:$0xf]
        %v1102 = vld [vmem:[%s6 + $0x20] sm:$0xf]
        %v1103 = vld [vmem:[%s6 + $0x24] sm:$0xf]
        %v1104 = vld [vmem:[%s6 + $0x28] sm:$0xf]
        %v1105 = vld [vmem:[%s6 + $0x2c] sm:$0xf]
        %v1106 = vld [vmem:[%s6 + $0x30] sm:$0xf]
        %v1107 = vld [vmem:[%s6 + $0x34] sm:$0xf]
        %v1108 = vld [vmem:[%s6 + $0x38] sm:$0xf]
        %v1109 = vld [vmem:[%s6 + $0x3c] sm:$0xf]
        %v1110 = vld [vmem:[%s7] sm:$0x1]
        %v1112 = vlaneseq
        %v1113 = vshrl.u32 %v1112, 7
        %v1114 = vsub.s32 0, %v1113
        %v1115 = vrot.slane %v1110, %v1114
        %v1133 = vunpack.c.l.b16 %v1094
        %v1134 = vunpack.c.l.b16 %v1095
        %v1135 = vunpack.c.l.b16 %v1096
        %v1136 = vunpack.c.l.b16 %v1097
        %v1137 = vunpack.c.l.b16 %v1098
        %v1138 = vunpack.c.l.b16 %v1099
        %v1139 = vunpack.c.l.b16 %v1100
        %v1140 = vunpack.c.l.b16 %v1101
        %v1141 = vunpack.c.l.b16 %v1102
        %v1142 = vunpack.c.l.b16 %v1103
        %v1143 = vunpack.c.l.b16 %v1104
        %v1144 = vunpack.c.l.b16 %v1105
        %v1145 = vunpack.c.l.b16 %v1106
        %v1146 = vunpack.c.l.b16 %v1107
        %v1147 = vunpack.c.l.b16 %v1108
        %v1148 = vunpack.c.l.b16 %v1109
        %v1149 = vpack.c.b16 %v1134, %v1133
        %v1150 = vpack.c.b16 %v1136, %v1135
        %v1151 = vpack.c.b16 %v1138, %v1137
        %v1152 = vpack.c.b16 %v1140, %v1139
        %v1153 = vpack.c.b16 %v1142, %v1141
        %v1154 = vpack.c.b16 %v1144, %v1143
        %v1155 = vpack.c.b16 %v1146, %v1145
        %v1156 = vpack.c.b16 %v1148, %v1147
        %1165 = vmatprep.subr.bf16.mxu0 0
        %1166 = vmatpush1.bf16.msra.mxu0 %v1156
        %1167 = vmatprep.subr.bf16.mxu0 0
        %1168 = vmatpush1.bf16.msra.mxu0 %v1155
        %1169 = vmatprep.subr.bf16.mxu0 0
        %1170 = vmatpush1.bf16.msra.mxu0 %v1154
        %1171 = vmatprep.subr.bf16.mxu0 0
        %1172 = vmatpush1.bf16.msra.mxu0 %v1153
        %1173 = vmatprep.subr.bf16.mxu0 0
        %1174 = vmatpush1.bf16.msra.mxu0 %v1152
        %1175 = vmatprep.subr.bf16.mxu0 0
        %1176 = vmatpush1.bf16.msra.mxu0 %v1151
        %1177 = vmatprep.subr.bf16.mxu0 0
        %1178 = vmatpush1.bf16.msra.mxu0 %v1150
        %1179 = vmatprep.subr.bf16.mxu0 0
        %1180 = vmatpush1.bf16.msra.mxu0 %v1149
        %1181 = vmatprep.subr.bf16.mxu0 0
        %1182 = vmatpush2.bf16.msra.mxu0 0
        %1183 = vmatprep.subr.bf16.mxu0 0
        %1184 = vmatpush2.bf16.msra.mxu0 0
        %1185 = vmatprep.subr.bf16.mxu0 0
        %1186 = vmatpush2.bf16.msra.mxu0 0
        %1187 = vmatprep.subr.bf16.mxu0 0
        %1188 = vmatpush2.bf16.msra.mxu0 0
        %1189 = vmatprep.subr.bf16.mxu0 0
        %1190 = vmatpush2.bf16.msra.mxu0 0
        %1191 = vmatprep.subr.bf16.mxu0 0
        %1192 = vmatpush2.bf16.msra.mxu0 0
        %1193 = vmatprep.subr.bf16.mxu0 0
        %1194 = vmatpush2.bf16.msra.mxu0 0
        %1195 = vmatprep.subr.bf16.mxu0 0
        %1196 = vmatpush2.bf16.msra.mxu0 0
        %1197 = vmatprep.mubr.bf16.mxu0 0
        %1198 = vmatmul.mubr.bf16.gmra.mxu0 %v1078
        %v1199 = vpop.f32.mrf.mxu0
        %v1200 = vadd.f32 %v1115, %v1199
        %v1201 = vpop.f32.mrf.mxu0
        %v1202 = vpop.f32.mrf.mxu0
        %v1203 = vadd.f32 %v1115, %v1202
        %v1204 = vpop.f32.mrf.mxu0
        %1205 = vmatprep.mubr.bf16.mxu0 0
        %1206 = vmatmul.mubr.bf16.gmra.mxu0 %v1079
        %v1207 = vpop.f32.mrf.mxu0
        %v1208 = vadd.f32 %v1115, %v1207
        %v1209 = vpop.f32.mrf.mxu0
        %v1210 = vpop.f32.mrf.mxu0
        %v1211 = vadd.f32 %v1115, %v1210
        %v1212 = vpop.f32.mrf.mxu0
        %1213 = vmatprep.mubr.bf16.mxu0 0
        %1214 = vmatmul.mubr.bf16.gmra.mxu0 %v1080
        %v1215 = vpop.f32.mrf.mxu0
        %v1216 = vadd.f32 %v1115, %v1215
        %v1217 = vpop.f32.mrf.mxu0
        %v1218 = vpop.f32.mrf.mxu0
        %v1219 = vadd.f32 %v1115, %v1218
        %v1220 = vpop.f32.mrf.mxu0
        %1221 = vmatprep.mubr.bf16.mxu0 0
        %1222 = vmatmul.mubr.bf16.gmra.mxu0 %v1081
        %v1223 = vpop.f32.mrf.mxu0
        %v1224 = vadd.f32 %v1115, %v1223
        %v1225 = vpop.f32.mrf.mxu0
        %v1226 = vpop.f32.mrf.mxu0
        %v1227 = vadd.f32 %v1115, %v1226
        %v1228 = vpop.f32.mrf.mxu0
        %1229 = vmatprep.mubr.bf16.mxu0 0
        %1230 = vmatmul.mubr.bf16.gmra.mxu0 %v1082
        %v1231 = vpop.f32.mrf.mxu0
        %v1232 = vadd.f32 %v1115, %v1231
        %v1233 = vpop.f32.mrf.mxu0
        %v1234 = vpop.f32.mrf.mxu0
        %v1235 = vadd.f32 %v1115, %v1234
        %v1236 = vpop.f32.mrf.mxu0
        %1237 = vmatprep.mubr.bf16.mxu0 0
        %1238 = vmatmul.mubr.bf16.gmra.mxu0 %v1083
        %v1239 = vpop.f32.mrf.mxu0
        %v1240 = vadd.f32 %v1115, %v1239
        %v1241 = vpop.f32.mrf.mxu0
        %v1242 = vpop.f32.mrf.mxu0
        %v1243 = vadd.f32 %v1115, %v1242
        %v1244 = vpop.f32.mrf.mxu0
        %1245 = vmatprep.mubr.bf16.mxu0 0
        %1246 = vmatmul.mubr.bf16.gmra.mxu0 %v1084
        %v1247 = vpop.f32.mrf.mxu0
        %v1248 = vadd.f32 %v1115, %v1247
        %v1249 = vpop.f32.mrf.mxu0
        %v1250 = vpop.f32.mrf.mxu0
        %v1251 = vadd.f32 %v1115, %v1250
        %v1252 = vpop.f32.mrf.mxu0
        %1253 = vmatprep.mubr.bf16.mxu0 0
        %1254 = vmatmul.mubr.bf16.gmra.mxu0 %v1085
        %v1255 = vpop.f32.mrf.mxu0
        %v1256 = vadd.f32 %v1115, %v1255
        %v1257 = vpop.f32.mrf.mxu0
        %v1258 = vpop.f32.mrf.mxu0
        %v1259 = vadd.f32 %v1115, %v1258
        %v1260 = vpop.f32.mrf.mxu0
        %1261 = vmatprep.mubr.bf16.mxu0 0
        %1262 = vmatmul.mubr.bf16.gmra.mxu0 %v1086
        %v1263 = vpop.f32.mrf.mxu0
        %v1264 = vadd.f32 %v1115, %v1263
        %v1265 = vpop.f32.mrf.mxu0
        %v1266 = vpop.f32.mrf.mxu0
        %v1267 = vadd.f32 %v1115, %v1266
        %v1268 = vpop.f32.mrf.mxu0
        %1269 = vmatprep.mubr.bf16.mxu0 0
        %1270 = vmatmul.mubr.bf16.gmra.mxu0 %v1087
        %v1271 = vpop.f32.mrf.mxu0
        %v1272 = vadd.f32 %v1115, %v1271
        %v1273 = vpop.f32.mrf.mxu0
        %v1274 = vpop.f32.mrf.mxu0
        %v1275 = vadd.f32 %v1115, %v1274
        %v1276 = vpop.f32.mrf.mxu0
        %1277 = vmatprep.mubr.bf16.mxu0 0
        %1278 = vmatmul.mubr.bf16.gmra.mxu0 %v1088
        %v1279 = vpop.f32.mrf.mxu0
        %v1280 = vadd.f32 %v1115, %v1279
        %v1281 = vpop.f32.mrf.mxu0
        %v1282 = vpop.f32.mrf.mxu0
        %v1283 = vadd.f32 %v1115, %v1282
        %v1284 = vpop.f32.mrf.mxu0
        %1285 = vmatprep.mubr.bf16.mxu0 0
        %1286 = vmatmul.mubr.bf16.gmra.mxu0 %v1089
        %v1287 = vpop.f32.mrf.mxu0
        %v1288 = vadd.f32 %v1115, %v1287
        %v1289 = vpop.f32.mrf.mxu0
        %v1290 = vpop.f32.mrf.mxu0
        %v1291 = vadd.f32 %v1115, %v1290
        %v1292 = vpop.f32.mrf.mxu0
        %1293 = vmatprep.mubr.bf16.mxu0 0
        %1294 = vmatmul.mubr.bf16.gmra.mxu0 %v1090
        %v1295 = vpop.f32.mrf.mxu0
        %v1296 = vadd.f32 %v1115, %v1295
        %v1297 = vpop.f32.mrf.mxu0
        %v1298 = vpop.f32.mrf.mxu0
        %v1299 = vadd.f32 %v1115, %v1298
        %v1300 = vpop.f32.mrf.mxu0
        %1301 = vmatprep.mubr.bf16.mxu0 0
        %1302 = vmatmul.mubr.bf16.gmra.mxu0 %v1091
        %v1303 = vpop.f32.mrf.mxu0
        %v1304 = vadd.f32 %v1115, %v1303
        %v1305 = vpop.f32.mrf.mxu0
        %v1306 = vpop.f32.mrf.mxu0
        %v1307 = vadd.f32 %v1115, %v1306
        %v1308 = vpop.f32.mrf.mxu0
        %1309 = vmatprep.mubr.bf16.mxu0 0
        %1310 = vmatmul.mubr.bf16.gmra.mxu0 %v1092
        %v1311 = vpop.f32.mrf.mxu0
        %v1312 = vadd.f32 %v1115, %v1311
        %v1313 = vpop.f32.mrf.mxu0
        %v1314 = vpop.f32.mrf.mxu0
        %v1315 = vadd.f32 %v1115, %v1314
        %v1316 = vpop.f32.mrf.mxu0
        %1317 = vmatprep.mubr.bf16.mxu0 0
        %1318 = vmatmul.mubr.bf16.gmra.mxu0 %v1093
        %v1319 = vpop.f32.mrf.mxu0
        %v1320 = vadd.f32 %v1115, %v1319
        %v1321 = vpop.f32.mrf.mxu0
        %v1322 = vpop.f32.mrf.mxu0
        %v1323 = vadd.f32 %v1115, %v1322
        %v1324 = vpop.f32.mrf.mxu0
        %1325 = vdwg.mxu0
        %v1326 = vmax.f32 %v1200, 0.0
        %v1327 = vmax.f32 %v1203, 0.0
        %v1328 = vmax.f32 %v1208, 0.0
        %v1329 = vmax.f32 %v1211, 0.0
        %v1330 = vmax.f32 %v1216, 0.0
        %v1331 = vmax.f32 %v1219, 0.0
        %v1332 = vmax.f32 %v1224, 0.0
        %v1333 = vmax.f32 %v1227, 0.0
        %v1334 = vmax.f32 %v1232, 0.0
        %v1335 = vmax.f32 %v1235, 0.0
        %v1336 = vmax.f32 %v1240, 0.0
        %v1337 = vmax.f32 %v1243, 0.0
        %v1338 = vmax.f32 %v1248, 0.0
        %v1339 = vmax.f32 %v1251, 0.0
        %v1340 = vmax.f32 %v1256, 0.0
        %v1341 = vmax.f32 %v1259, 0.0
        %v1342 = vmax.f32 %v1264, 0.0
        %v1343 = vmax.f32 %v1267, 0.0
        %v1344 = vmax.f32 %v1272, 0.0
        %v1345 = vmax.f32 %v1275, 0.0
        %v1346 = vmax.f32 %v1280, 0.0
        %v1347 = vmax.f32 %v1283, 0.0
        %v1348 = vmax.f32 %v1288, 0.0
        %v1349 = vmax.f32 %v1291, 0.0
        %v1350 = vmax.f32 %v1296, 0.0
        %v1351 = vmax.f32 %v1299, 0.0
        %v1352 = vmax.f32 %v1304, 0.0
        %v1353 = vmax.f32 %v1307, 0.0
        %v1354 = vmax.f32 %v1312, 0.0
        %v1355 = vmax.f32 %v1315, 0.0
        %v1356 = vmax.f32 %v1320, 0.0
        %v1357 = vmax.f32 %v1323, 0.0
        %v1358 = vpack.c.bf16 %v1327, %v1326
        %v1359 = vpack.c.bf16 %v1329, %v1328
        %v1360 = vpack.c.bf16 %v1331, %v1330
        %v1361 = vpack.c.bf16 %v1333, %v1332
        %v1362 = vpack.c.bf16 %v1335, %v1334
        %v1363 = vpack.c.bf16 %v1337, %v1336
        %v1364 = vpack.c.bf16 %v1339, %v1338
        %v1365 = vpack.c.bf16 %v1341, %v1340
        %v1366 = vpack.c.bf16 %v1343, %v1342
        %v1367 = vpack.c.bf16 %v1345, %v1344
        %v1368 = vpack.c.bf16 %v1347, %v1346
        %v1369 = vpack.c.bf16 %v1349, %v1348
        %v1370 = vpack.c.bf16 %v1351, %v1350
        %v1371 = vpack.c.bf16 %v1353, %v1352
        %v1372 = vpack.c.bf16 %v1355, %v1354
        %v1373 = vpack.c.bf16 %v1357, %v1356
        %v1374 = vld [vmem:[%s8] sm:$0xf]
        %v1375 = vld [vmem:[%s8 + $0x4] sm:$0xf]
        %v1376 = vld [vmem:[%s8 + $0x8] sm:$0xf]
        %v1377 = vld [vmem:[%s8 + $0xc] sm:$0xf]
        %v1378 = vld [vmem:[%s8 + $0x10] sm:$0xf]
        %v1379 = vld [vmem:[%s8 + $0x14] sm:$0xf]
        %v1380 = vld [vmem:[%s8 + $0x18] sm:$0xf]
        %v1381 = vld [vmem:[%s8 + $0x1c] sm:$0xf]
        %v1382 = vld [vmem:[%s8 + $0x20] sm:$0xf]
        %v1383 = vld [vmem:[%s8 + $0x24] sm:$0xf]
        %v1384 = vld [vmem:[%s8 + $0x28] sm:$0xf]
        %v1385 = vld [vmem:[%s8 + $0x2c] sm:$0xf]
        %v1386 = vld [vmem:[%s8 + $0x30] sm:$0xf]
        %v1387 = vld [vmem:[%s8 + $0x34] sm:$0xf]
        %v1388 = vld [vmem:[%s8 + $0x38] sm:$0xf]
        %v1389 = vld [vmem:[%s8 + $0x3c] sm:$0xf]
        %v1390 = vld [vmem:[%s9] sm:$0x1]
        %v1392 = vlaneseq
        %v1393 = vshrl.u32 %v1392, 7
        %v1394 = vsub.s32 0, %v1393
        %v1395 = vrot.slane %v1390, %v1394
        %v1413 = vunpack.c.l.b16 %v1374
        %v1414 = vunpack.c.l.b16 %v1375
        %v1415 = vunpack.c.l.b16 %v1376
        %v1416 = vunpack.c.l.b16 %v1377
        %v1417 = vunpack.c.l.b16 %v1378
        %v1418 = vunpack.c.l.b16 %v1379
        %v1419 = vunpack.c.l.b16 %v1380
        %v1420 = vunpack.c.l.b16 %v1381
        %v1421 = vunpack.c.l.b16 %v1382
        %v1422 = vunpack.c.l.b16 %v1383
        %v1423 = vunpack.c.l.b16 %v1384
        %v1424 = vunpack.c.l.b16 %v1385
        %v1425 = vunpack.c.l.b16 %v1386
        %v1426 = vunpack.c.l.b16 %v1387
        %v1427 = vunpack.c.l.b16 %v1388
        %v1428 = vunpack.c.l.b16 %v1389
        %v1429 = vpack.c.b16 %v1414, %v1413
        %v1430 = vpack.c.b16 %v1416, %v1415
        %v1431 = vpack.c.b16 %v1418, %v1417
        %v1432 = vpack.c.b16 %v1420, %v1419
        %v1433 = vpack.c.b16 %v1422, %v1421
        %v1434 = vpack.c.b16 %v1424, %v1423
        %v1435 = vpack.c.b16 %v1426, %v1425
        %v1436 = vpack.c.b16 %v1428, %v1427
        %1445 = vmatprep.subr.bf16.mxu0 0
        %1446 = vmatpush1.bf16.msra.mxu0 %v1436
        %1447 = vmatprep.subr.bf16.mxu0 0
        %1448 = vmatpush1.bf16.msra.mxu0 %v1435
        %1449 = vmatprep.subr.bf16.mxu0 0
        %1450 = vmatpush1.bf16.msra.mxu0 %v1434
        %1451 = vmatprep.subr.bf16.mxu0 0
        %1452 = vmatpush1.bf16.msra.mxu0 %v1433
        %1453 = vmatprep.subr.bf16.mxu0 0
        %1454 = vmatpush1.bf16.msra.mxu0 %v1432
        %1455 = vmatprep.subr.bf16.mxu0 0
        %1456 = vmatpush1.bf16.msra.mxu0 %v1431
        %1457 = vmatprep.subr.bf16.mxu0 0
        %1458 = vmatpush1.bf16.msra.mxu0 %v1430
        %1459 = vmatprep.subr.bf16.mxu0 0
        %1460 = vmatpush1.bf16.msra.mxu0 %v1429
        %1461 = vmatprep.subr.bf16.mxu0 0
        %1462 = vmatpush2.bf16.msra.mxu0 0
        %1463 = vmatprep.subr.bf16.mxu0 0
        %1464 = vmatpush2.bf16.msra.mxu0 0
        %1465 = vmatprep.subr.bf16.mxu0 0
        %1466 = vmatpush2.bf16.msra.mxu0 0
        %1467 = vmatprep.subr.bf16.mxu0 0
        %1468 = vmatpush2.bf16.msra.mxu0 0
        %1469 = vmatprep.subr.bf16.mxu0 0
        %1470 = vmatpush2.bf16.msra.mxu0 0
        %1471 = vmatprep.subr.bf16.mxu0 0
        %1472 = vmatpush2.bf16.msra.mxu0 0
        %1473 = vmatprep.subr.bf16.mxu0 0
        %1474 = vmatpush2.bf16.msra.mxu0 0
        %1475 = vmatprep.subr.bf16.mxu0 0
        %1476 = vmatpush2.bf16.msra.mxu0 0
        %1477 = vmatprep.mubr.bf16.mxu0 0
        %1478 = vmatmul.mubr.bf16.gmra.mxu0 %v1358
        %v1479 = vpop.f32.mrf.mxu0
        %v1480 = vadd.f32 %v1395, %v1479
        %v1481 = vpop.f32.mrf.mxu0
        %v1482 = vpop.f32.mrf.mxu0
        %v1483 = vadd.f32 %v1395, %v1482
        %v1484 = vpop.f32.mrf.mxu0
        %1485 = vmatprep.mubr.bf16.mxu0 0
        %1486 = vmatmul.mubr.bf16.gmra.mxu0 %v1359
        %v1487 = vpop.f32.mrf.mxu0
        %v1488 = vadd.f32 %v1395, %v1487
        %v1489 = vpop.f32.mrf.mxu0
        %v1490 = vpop.f32.mrf.mxu0
        %v1491 = vadd.f32 %v1395, %v1490
        %v1492 = vpop.f32.mrf.mxu0
        %1493 = vmatprep.mubr.bf16.mxu0 0
        %1494 = vmatmul.mubr.bf16.gmra.mxu0 %v1360
        %v1495 = vpop.f32.mrf.mxu0
        %v1496 = vadd.f32 %v1395, %v1495
        %v1497 = vpop.f32.mrf.mxu0
        %v1498 = vpop.f32.mrf.mxu0
        %v1499 = vadd.f32 %v1395, %v1498
        %v1500 = vpop.f32.mrf.mxu0
        %1501 = vmatprep.mubr.bf16.mxu0 0
        %1502 = vmatmul.mubr.bf16.gmra.mxu0 %v1361
        %v1503 = vpop.f32.mrf.mxu0
        %v1504 = vadd.f32 %v1395, %v1503
        %v1505 = vpop.f32.mrf.mxu0
        %v1506 = vpop.f32.mrf.mxu0
        %v1507 = vadd.f32 %v1395, %v1506
        %v1508 = vpop.f32.mrf.mxu0
        %1509 = vmatprep.mubr.bf16.mxu0 0
        %1510 = vmatmul.mubr.bf16.gmra.mxu0 %v1362
        %v1511 = vpop.f32.mrf.mxu0
        %v1512 = vadd.f32 %v1395, %v1511
        %v1513 = vpop.f32.mrf.mxu0
        %v1514 = vpop.f32.mrf.mxu0
        %v1515 = vadd.f32 %v1395, %v1514
        %v1516 = vpop.f32.mrf.mxu0
        %1517 = vmatprep.mubr.bf16.mxu0 0
        %1518 = vmatmul.mubr.bf16.gmra.mxu0 %v1363
        %v1519 = vpop.f32.mrf.mxu0
        %v1520 = vadd.f32 %v1395, %v1519
        %v1521 = vpop.f32.mrf.mxu0
        %v1522 = vpop.f32.mrf.mxu0
        %v1523 = vadd.f32 %v1395, %v1522
        %v1524 = vpop.f32.mrf.mxu0
        %1525 = vmatprep.mubr.bf16.mxu0 0
        %1526 = vmatmul.mubr.bf16.gmra.mxu0 %v1364
        %v1527 = vpop.f32.mrf.mxu0
        %v1528 = vadd.f32 %v1395, %v1527
        %v1529 = vpop.f32.mrf.mxu0
        %v1530 = vpop.f32.mrf.mxu0
        %v1531 = vadd.f32 %v1395, %v1530
        %v1532 = vpop.f32.mrf.mxu0
        %1533 = vmatprep.mubr.bf16.mxu0 0
        %1534 = vmatmul.mubr.bf16.gmra.mxu0 %v1365
        %v1535 = vpop.f32.mrf.mxu0
        %v1536 = vadd.f32 %v1395, %v1535
        %v1537 = vpop.f32.mrf.mxu0
        %v1538 = vpop.f32.mrf.mxu0
        %v1539 = vadd.f32 %v1395, %v1538
        %v1540 = vpop.f32.mrf.mxu0
        %1541 = vmatprep.mubr.bf16.mxu0 0
        %1542 = vmatmul.mubr.bf16.gmra.mxu0 %v1366
        %v1543 = vpop.f32.mrf.mxu0
        %v1544 = vadd.f32 %v1395, %v1543
        %v1545 = vpop.f32.mrf.mxu0
        %v1546 = vpop.f32.mrf.mxu0
        %v1547 = vadd.f32 %v1395, %v1546
        %v1548 = vpop.f32.mrf.mxu0
        %1549 = vmatprep.mubr.bf16.mxu0 0
        %1550 = vmatmul.mubr.bf16.gmra.mxu0 %v1367
        %v1551 = vpop.f32.mrf.mxu0
        %v1552 = vadd.f32 %v1395, %v1551
        %v1553 = vpop.f32.mrf.mxu0
        %v1554 = vpop.f32.mrf.mxu0
        %v1555 = vadd.f32 %v1395, %v1554
        %v1556 = vpop.f32.mrf.mxu0
        %1557 = vmatprep.mubr.bf16.mxu0 0
        %1558 = vmatmul.mubr.bf16.gmra.mxu0 %v1368
        %v1559 = vpop.f32.mrf.mxu0
        %v1560 = vadd.f32 %v1395, %v1559
        %v1561 = vpop.f32.mrf.mxu0
        %v1562 = vpop.f32.mrf.mxu0
        %v1563 = vadd.f32 %v1395, %v1562
        %v1564 = vpop.f32.mrf.mxu0
        %1565 = vmatprep.mubr.bf16.mxu0 0
        %1566 = vmatmul.mubr.bf16.gmra.mxu0 %v1369
        %v1567 = vpop.f32.mrf.mxu0
        %v1568 = vadd.f32 %v1395, %v1567
        %v1569 = vpop.f32.mrf.mxu0
        %v1570 = vpop.f32.mrf.mxu0
        %v1571 = vadd.f32 %v1395, %v1570
        %v1572 = vpop.f32.mrf.mxu0
        %1573 = vmatprep.mubr.bf16.mxu0 0
        %1574 = vmatmul.mubr.bf16.gmra.mxu0 %v1370
        %v1575 = vpop.f32.mrf.mxu0
        %v1576 = vadd.f32 %v1395, %v1575
        %v1577 = vpop.f32.mrf.mxu0
        %v1578 = vpop.f32.mrf.mxu0
        %v1579 = vadd.f32 %v1395, %v1578
        %v1580 = vpop.f32.mrf.mxu0
        %1581 = vmatprep.mubr.bf16.mxu0 0
        %1582 = vmatmul.mubr.bf16.gmra.mxu0 %v1371
        %v1583 = vpop.f32.mrf.mxu0
        %v1584 = vadd.f32 %v1395, %v1583
        %v1585 = vpop.f32.mrf.mxu0
        %v1586 = vpop.f32.mrf.mxu0
        %v1587 = vadd.f32 %v1395, %v1586
        %v1588 = vpop.f32.mrf.mxu0
        %1589 = vmatprep.mubr.bf16.mxu0 0
        %1590 = vmatmul.mubr.bf16.gmra.mxu0 %v1372
        %v1591 = vpop.f32.mrf.mxu0
        %v1592 = vadd.f32 %v1395, %v1591
        %v1593 = vpop.f32.mrf.mxu0
        %v1594 = vpop.f32.mrf.mxu0
        %v1595 = vadd.f32 %v1395, %v1594
        %v1596 = vpop.f32.mrf.mxu0
        %1597 = vmatprep.mubr.bf16.mxu0 0
        %1598 = vmatmul.mubr.bf16.gmra.mxu0 %v1373
        %v1599 = vpop.f32.mrf.mxu0
        %v1600 = vadd.f32 %v1395, %v1599
        %v1601 = vpop.f32.mrf.mxu0
        %v1602 = vpop.f32.mrf.mxu0
        %v1603 = vadd.f32 %v1395, %v1602
        %v1604 = vpop.f32.mrf.mxu0
        %1605 = vdwg.mxu0
        %v1606 = vld [vmem:[%s554] sm:$0xff]
        %v1607 = vld [vmem:[%s554 + $0x8] sm:$0xff]
        %v1608 = vld [vmem:[%s554 + $0x10] sm:$0xff]
        %v1609 = vld [vmem:[%s554 + $0x18] sm:$0xff]
        %v1610 = vld [vmem:[%s554 + $0x20] sm:$0xff]
        %v1611 = vld [vmem:[%s554 + $0x28] sm:$0xff]
        %v1612 = vld [vmem:[%s554 + $0x30] sm:$0xff]
        %v1613 = vld [vmem:[%s554 + $0x38] sm:$0xff]
        %v1614 = vld [vmem:[%s554 + $0x40] sm:$0xff]
        %v1615 = vld [vmem:[%s554 + $0x48] sm:$0xff]
        %v1616 = vld [vmem:[%s554 + $0x50] sm:$0xff]
        %v1617 = vld [vmem:[%s554 + $0x58] sm:$0xff]
        %v1618 = vld [vmem:[%s554 + $0x60] sm:$0xff]
        %v1619 = vld [vmem:[%s554 + $0x68] sm:$0xff]
        %v1620 = vld [vmem:[%s554 + $0x70] sm:$0xff]
        %v1621 = vld [vmem:[%s554 + $0x78] sm:$0xff]
        %v1622 = vld [vmem:[%s554 + $0x80] sm:$0xff]
        %v1623 = vld [vmem:[%s554 + $0x88] sm:$0xff]
        %v1624 = vld [vmem:[%s554 + $0x90] sm:$0xff]
        %v1625 = vld [vmem:[%s554 + $0x98] sm:$0xff]
        %v1626 = vld [vmem:[%s554 + $0xa0] sm:$0xff]
        %v1627 = vld [vmem:[%s554 + $0xa8] sm:$0xff]
        %v1628 = vld [vmem:[%s554 + $0xb0] sm:$0xff]
        %v1629 = vld [vmem:[%s554 + $0xb8] sm:$0xff]
        %v1630 = vld [vmem:[%s554 + $0xc0] sm:$0xff]
        %v1631 = vld [vmem:[%s554 + $0xc8] sm:$0xff]
        %v1632 = vld [vmem:[%s554 + $0xd0] sm:$0xff]
        %v1633 = vld [vmem:[%s554 + $0xd8] sm:$0xff]
        %v1634 = vld [vmem:[%s554 + $0xe0] sm:$0xff]
        %v1635 = vld [vmem:[%s554 + $0xe8] sm:$0xff]
        %v1636 = vld [vmem:[%s554 + $0xf0] sm:$0xff]
        %v1637 = vld [vmem:[%s554 + $0xf8] sm:$0xff]
        %v1638 = vpack.c.bf16 %v1607, %v1606
        %v1639 = vpack.c.bf16 %v1609, %v1608
        %v1640 = vpack.c.bf16 %v1611, %v1610
        %v1641 = vpack.c.bf16 %v1613, %v1612
        %v1642 = vpack.c.bf16 %v1615, %v1614
        %v1643 = vpack.c.bf16 %v1617, %v1616
        %v1644 = vpack.c.bf16 %v1619, %v1618
        %v1645 = vpack.c.bf16 %v1621, %v1620
        %v1646 = vpack.c.bf16 %v1623, %v1622
        %v1647 = vpack.c.bf16 %v1625, %v1624
        %v1648 = vpack.c.bf16 %v1627, %v1626
        %v1649 = vpack.c.bf16 %v1629, %v1628
        %v1650 = vpack.c.bf16 %v1631, %v1630
        %v1651 = vpack.c.bf16 %v1633, %v1632
        %v1652 = vpack.c.bf16 %v1635, %v1634
        %v1653 = vpack.c.bf16 %v1637, %v1636
        %v1654 = vld [vmem:[%s10] sm:$0xf]
        %v1655 = vld [vmem:[%s10 + $0x4] sm:$0xf]
        %v1656 = vld [vmem:[%s10 + $0x8] sm:$0xf]
        %v1657 = vld [vmem:[%s10 + $0xc] sm:$0xf]
        %v1658 = vld [vmem:[%s10 + $0x10] sm:$0xf]
        %v1659 = vld [vmem:[%s10 + $0x14] sm:$0xf]
        %v1660 = vld [vmem:[%s10 + $0x18] sm:$0xf]
        %v1661 = vld [vmem:[%s10 + $0x1c] sm:$0xf]
        %v1662 = vld [vmem:[%s11] sm:$0x1]
        %v1664 = vlaneseq
        %v1665 = vshrl.u32 %v1664, 7
        %v1666 = vsub.s32 0, %v1665
        %v1667 = vrot.slane %v1662, %v1666
        %v1677 = vunpack.c.l.b16 %v1654
        %v1678 = vunpack.c.l.b16 %v1655
        %v1679 = vunpack.c.l.b16 %v1656
        %v1680 = vunpack.c.l.b16 %v1657
        %v1681 = vunpack.c.l.b16 %v1658
        %v1682 = vunpack.c.l.b16 %v1659
        %v1683 = vunpack.c.l.b16 %v1660
        %v1684 = vunpack.c.l.b16 %v1661
        %v1685 = vpack.c.b16 %v1678, %v1677
        %v1686 = vpack.c.b16 %v1680, %v1679
        %v1687 = vpack.c.b16 %v1682, %v1681
        %v1688 = vpack.c.b16 %v1684, %v1683
        %vm1693 = vcmask 523264
        %v1695 = vsel %vm1693, %v1638, 0
        %v1698 = vsel %vm1693, %v1639, 0
        %v1701 = vsel %vm1693, %v1640, 0
        %v1704 = vsel %vm1693, %v1641, 0
        %v1707 = vsel %vm1693, %v1642, 0
        %v1710 = vsel %vm1693, %v1643, 0
        %v1713 = vsel %vm1693, %v1644, 0
        %v1716 = vsel %vm1693, %v1645, 0
        %v1719 = vsel %vm1693, %v1646, 0
        %v1722 = vsel %vm1693, %v1647, 0
        %v1725 = vsel %vm1693, %v1648, 0
        %v1728 = vsel %vm1693, %v1649, 0
        %v1731 = vsel %vm1693, %v1650, 0
        %v1734 = vsel %vm1693, %v1651, 0
        %v1737 = vsel %vm1693, %v1652, 0
        %v1740 = vsel %vm1693, %v1653, 0
        %1742 = vmatprep.subr.bf16.mxu0 0
        %1743 = vmatpush1.bf16.msra.mxu0 0
        %1744 = vmatprep.subr.bf16.mxu0 0
        %1745 = vmatpush1.bf16.msra.mxu0 0
        %1746 = vmatprep.subr.bf16.mxu0 0
        %1747 = vmatpush1.bf16.msra.mxu0 0
        %1748 = vmatprep.subr.bf16.mxu0 0
        %1749 = vmatpush1.bf16.msra.mxu0 0
        %1750 = vmatprep.subr.bf16.mxu0 0
        %1751 = vmatpush1.bf16.msra.mxu0 %v1688
        %1752 = vmatprep.subr.bf16.mxu0 0
        %1753 = vmatpush1.bf16.msra.mxu0 %v1687
        %1754 = vmatprep.subr.bf16.mxu0 0
        %1755 = vmatpush1.bf16.msra.mxu0 %v1686
        %1756 = vmatprep.subr.bf16.mxu0 0
        %1757 = vmatpush1.bf16.msra.mxu0 %v1685
        %1758 = vmatprep.subr.bf16.mxu0 0
        %1759 = vmatpush2.bf16.msra.mxu0 0
        %1760 = vmatprep.subr.bf16.mxu0 0
        %1761 = vmatpush2.bf16.msra.mxu0 0
        %1762 = vmatprep.subr.bf16.mxu0 0
        %1763 = vmatpush2.bf16.msra.mxu0 0
        %1764 = vmatprep.subr.bf16.mxu0 0
        %1765 = vmatpush2.bf16.msra.mxu0 0
        %1766 = vmatprep.subr.bf16.mxu0 0
        %1767 = vmatpush2.bf16.msra.mxu0 0
        %1768 = vmatprep.subr.bf16.mxu0 0
        %1769 = vmatpush2.bf16.msra.mxu0 0
        %1770 = vmatprep.subr.bf16.mxu0 0
        %1771 = vmatpush2.bf16.msra.mxu0 0
        %1772 = vmatprep.subr.bf16.mxu0 0
        %1773 = vmatpush2.bf16.msra.mxu0 0
        %1774 = vmatprep.mubr.bf16.mxu0 0
        %1775 = vmatmul.mubr.bf16.gmra.mxu0 %v1695
        %v1776 = vpop.f32.mrf.mxu0
        %v1777 = vadd.f32 %v1667, %v1776
        %v1778 = vpop.f32.mrf.mxu0
        %v1779 = vpop.f32.mrf.mxu0
        %v1780 = vadd.f32 %v1667, %v1779
        %v1781 = vpop.f32.mrf.mxu0
        %1782 = vmatprep.mubr.bf16.mxu0 0
        %1783 = vmatmul.mubr.bf16.gmra.mxu0 %v1698
        %v1784 = vpop.f32.mrf.mxu0
        %v1785 = vadd.f32 %v1667, %v1784
        %v1786 = vpop.f32.mrf.mxu0
        %v1787 = vpop.f32.mrf.mxu0
        %v1788 = vadd.f32 %v1667, %v1787
        %v1789 = vpop.f32.mrf.mxu0
        %1790 = vmatprep.mubr.bf16.mxu0 0
        %1791 = vmatmul.mubr.bf16.gmra.mxu0 %v1701
        %v1792 = vpop.f32.mrf.mxu0
        %v1793 = vadd.f32 %v1667, %v1792
        %v1794 = vpop.f32.mrf.mxu0
        %v1795 = vpop.f32.mrf.mxu0
        %v1796 = vadd.f32 %v1667, %v1795
        %v1797 = vpop.f32.mrf.mxu0
        %1798 = vmatprep.mubr.bf16.mxu0 0
        %1799 = vmatmul.mubr.bf16.gmra.mxu0 %v1704
        %v1800 = vpop.f32.mrf.mxu0
        %v1801 = vadd.f32 %v1667, %v1800
        %v1802 = vpop.f32.mrf.mxu0
        %v1803 = vpop.f32.mrf.mxu0
        %v1804 = vadd.f32 %v1667, %v1803
        %v1805 = vpop.f32.mrf.mxu0
        %1806 = vmatprep.mubr.bf16.mxu0 0
        %1807 = vmatmul.mubr.bf16.gmra.mxu0 %v1707
        %v1808 = vpop.f32.mrf.mxu0
        %v1809 = vadd.f32 %v1667, %v1808
        %v1810 = vpop.f32.mrf.mxu0
        %v1811 = vpop.f32.mrf.mxu0
        %v1812 = vadd.f32 %v1667, %v1811
        %v1813 = vpop.f32.mrf.mxu0
        %1814 = vmatprep.mubr.bf16.mxu0 0
        %1815 = vmatmul.mubr.bf16.gmra.mxu0 %v1710
        %v1816 = vpop.f32.mrf.mxu0
        %v1817 = vadd.f32 %v1667, %v1816
        %v1818 = vpop.f32.mrf.mxu0
        %v1819 = vpop.f32.mrf.mxu0
        %v1820 = vadd.f32 %v1667, %v1819
        %v1821 = vpop.f32.mrf.mxu0
        %1822 = vmatprep.mubr.bf16.mxu0 0
        %1823 = vmatmul.mubr.bf16.gmra.mxu0 %v1713
        %v1824 = vpop.f32.mrf.mxu0
        %v1825 = vadd.f32 %v1667, %v1824
        %v1826 = vpop.f32.mrf.mxu0
        %v1827 = vpop.f32.mrf.mxu0
        %v1828 = vadd.f32 %v1667, %v1827
        %v1829 = vpop.f32.mrf.mxu0
        %1830 = vmatprep.mubr.bf16.mxu0 0
        %1831 = vmatmul.mubr.bf16.gmra.mxu0 %v1716
        %v1832 = vpop.f32.mrf.mxu0
        %v1833 = vadd.f32 %v1667, %v1832
        %v1834 = vpop.f32.mrf.mxu0
        %v1835 = vpop.f32.mrf.mxu0
        %v1836 = vadd.f32 %v1667, %v1835
        %v1837 = vpop.f32.mrf.mxu0
        %1838 = vmatprep.mubr.bf16.mxu0 0
        %1839 = vmatmul.mubr.bf16.gmra.mxu0 %v1719
        %v1840 = vpop.f32.mrf.mxu0
        %v1841 = vadd.f32 %v1667, %v1840
        %v1842 = vpop.f32.mrf.mxu0
        %v1843 = vpop.f32.mrf.mxu0
        %v1844 = vadd.f32 %v1667, %v1843
        %v1845 = vpop.f32.mrf.mxu0
        %1846 = vmatprep.mubr.bf16.mxu0 0
        %1847 = vmatmul.mubr.bf16.gmra.mxu0 %v1722
        %v1848 = vpop.f32.mrf.mxu0
        %v1849 = vadd.f32 %v1667, %v1848
        %v1850 = vpop.f32.mrf.mxu0
        %v1851 = vpop.f32.mrf.mxu0
        %v1852 = vadd.f32 %v1667, %v1851
        %v1853 = vpop.f32.mrf.mxu0
        %1854 = vmatprep.mubr.bf16.mxu0 0
        %1855 = vmatmul.mubr.bf16.gmra.mxu0 %v1725
        %v1856 = vpop.f32.mrf.mxu0
        %v1857 = vadd.f32 %v1667, %v1856
        %v1858 = vpop.f32.mrf.mxu0
        %v1859 = vpop.f32.mrf.mxu0
        %v1860 = vadd.f32 %v1667, %v1859
        %v1861 = vpop.f32.mrf.mxu0
        %1862 = vmatprep.mubr.bf16.mxu0 0
        %1863 = vmatmul.mubr.bf16.gmra.mxu0 %v1728
        %v1864 = vpop.f32.mrf.mxu0
        %v1865 = vadd.f32 %v1667, %v1864
        %v1866 = vpop.f32.mrf.mxu0
        %v1867 = vpop.f32.mrf.mxu0
        %v1868 = vadd.f32 %v1667, %v1867
        %v1869 = vpop.f32.mrf.mxu0
        %1870 = vmatprep.mubr.bf16.mxu0 0
        %1871 = vmatmul.mubr.bf16.gmra.mxu0 %v1731
        %v1872 = vpop.f32.mrf.mxu0
        %v1873 = vadd.f32 %v1667, %v1872
        %v1874 = vpop.f32.mrf.mxu0
        %v1875 = vpop.f32.mrf.mxu0
        %v1876 = vadd.f32 %v1667, %v1875
        %v1877 = vpop.f32.mrf.mxu0
        %1878 = vmatprep.mubr.bf16.mxu0 0
        %1879 = vmatmul.mubr.bf16.gmra.mxu0 %v1734
        %v1880 = vpop.f32.mrf.mxu0
        %v1881 = vadd.f32 %v1667, %v1880
        %v1882 = vpop.f32.mrf.mxu0
        %v1883 = vpop.f32.mrf.mxu0
        %v1884 = vadd.f32 %v1667, %v1883
        %v1885 = vpop.f32.mrf.mxu0
        %1886 = vmatprep.mubr.bf16.mxu0 0
        %1887 = vmatmul.mubr.bf16.gmra.mxu0 %v1737
        %v1888 = vpop.f32.mrf.mxu0
        %v1889 = vadd.f32 %v1667, %v1888
        %v1890 = vpop.f32.mrf.mxu0
        %v1891 = vpop.f32.mrf.mxu0
        %v1892 = vadd.f32 %v1667, %v1891
        %v1893 = vpop.f32.mrf.mxu0
        %1894 = vmatprep.mubr.bf16.mxu0 0
        %1895 = vmatmul.mubr.bf16.gmra.mxu0 %v1740
        %v1896 = vpop.f32.mrf.mxu0
        %v1897 = vadd.f32 %v1667, %v1896
        %v1898 = vpop.f32.mrf.mxu0
        %v1899 = vpop.f32.mrf.mxu0
        %v1900 = vadd.f32 %v1667, %v1899
        %v1901 = vpop.f32.mrf.mxu0
        %1902 = vdwg.mxu0
        %v1903 = vld [vmem:[%s559] sm:$0xff]
        %v1904 = vld [vmem:[%s559 + $0x8] sm:$0xff]
        %v1905 = vld [vmem:[%s559 + $0x10] sm:$0xff]
        %v1906 = vld [vmem:[%s559 + $0x18] sm:$0xff]
        %v1907 = vld [vmem:[%s559 + $0x20] sm:$0xff]
        %v1908 = vld [vmem:[%s559 + $0x28] sm:$0xff]
        %v1909 = vld [vmem:[%s559 + $0x30] sm:$0xff]
        %v1910 = vld [vmem:[%s559 + $0x38] sm:$0xff]
        %v1911 = vld [vmem:[%s559 + $0x40] sm:$0xff]
        %v1912 = vld [vmem:[%s559 + $0x48] sm:$0xff]
        %v1913 = vld [vmem:[%s559 + $0x50] sm:$0xff]
        %v1914 = vld [vmem:[%s559 + $0x58] sm:$0xff]
        %v1915 = vld [vmem:[%s559 + $0x60] sm:$0xff]
        %v1916 = vld [vmem:[%s559 + $0x68] sm:$0xff]
        %v1917 = vld [vmem:[%s559 + $0x70] sm:$0xff]
        %v1918 = vld [vmem:[%s559 + $0x78] sm:$0xff]
        %v1919 = vld [vmem:[%s559 + $0x80] sm:$0xff]
        %v1920 = vld [vmem:[%s559 + $0x88] sm:$0xff]
        %v1921 = vld [vmem:[%s559 + $0x90] sm:$0xff]
        %v1922 = vld [vmem:[%s559 + $0x98] sm:$0xff]
        %v1923 = vld [vmem:[%s559 + $0xa0] sm:$0xff]
        %v1924 = vld [vmem:[%s559 + $0xa8] sm:$0xff]
        %v1925 = vld [vmem:[%s559 + $0xb0] sm:$0xff]
        %v1926 = vld [vmem:[%s559 + $0xb8] sm:$0xff]
        %v1927 = vld [vmem:[%s559 + $0xc0] sm:$0xff]
        %v1928 = vld [vmem:[%s559 + $0xc8] sm:$0xff]
        %v1929 = vld [vmem:[%s559 + $0xd0] sm:$0xff]
        %v1930 = vld [vmem:[%s559 + $0xd8] sm:$0xff]
        %v1931 = vld [vmem:[%s559 + $0xe0] sm:$0xff]
        %v1932 = vld [vmem:[%s559 + $0xe8] sm:$0xff]
        %v1933 = vld [vmem:[%s559 + $0xf0] sm:$0xff]
        %v1934 = vld [vmem:[%s559 + $0xf8] sm:$0xff]
        %v1935 = vadd.f32 %v1777, %v1903
        %v1936 = vadd.f32 %v1780, %v1904
        %v1937 = vadd.f32 %v1785, %v1905
        %v1938 = vadd.f32 %v1788, %v1906
        %v1939 = vadd.f32 %v1793, %v1907
        %v1940 = vadd.f32 %v1796, %v1908
        %v1941 = vadd.f32 %v1801, %v1909
        %v1942 = vadd.f32 %v1804, %v1910
        %v1943 = vadd.f32 %v1809, %v1911
        %v1944 = vadd.f32 %v1812, %v1912
        %v1945 = vadd.f32 %v1817, %v1913
        %v1946 = vadd.f32 %v1820, %v1914
        %v1947 = vadd.f32 %v1825, %v1915
        %v1948 = vadd.f32 %v1828, %v1916
        %v1949 = vadd.f32 %v1833, %v1917
        %v1950 = vadd.f32 %v1836, %v1918
        %v1951 = vadd.f32 %v1841, %v1919
        %v1952 = vadd.f32 %v1844, %v1920
        %v1953 = vadd.f32 %v1849, %v1921
        %v1954 = vadd.f32 %v1852, %v1922
        %v1955 = vadd.f32 %v1857, %v1923
        %v1956 = vadd.f32 %v1860, %v1924
        %v1957 = vadd.f32 %v1865, %v1925
        %v1958 = vadd.f32 %v1868, %v1926
        %v1959 = vadd.f32 %v1873, %v1927
        %v1960 = vadd.f32 %v1876, %v1928
        %v1961 = vadd.f32 %v1881, %v1929
        %v1962 = vadd.f32 %v1884, %v1930
        %v1963 = vadd.f32 %v1889, %v1931
        %v1964 = vadd.f32 %v1892, %v1932
        %v1965 = vadd.f32 %v1897, %v1933
        %v1966 = vadd.f32 %v1900, %v1934
        %1967 = vst.msk [vmem:[#allocation2] sm:$0xff] %vm1693, %v1935
        %1968 = vst.msk [vmem:[#allocation2 + $0x8] sm:$0xff] %vm1693, %v1936
        %1969 = vst.msk [vmem:[#allocation2 + $0x10] sm:$0xff] %vm1693, %v1937
        %1970 = vst.msk [vmem:[#allocation2 + $0x18] sm:$0xff] %vm1693, %v1938
        %1971 = vst.msk [vmem:[#allocation2 + $0x20] sm:$0xff] %vm1693, %v1939
        %1972 = vst.msk [vmem:[#allocation2 + $0x28] sm:$0xff] %vm1693, %v1940
        %1973 = vst.msk [vmem:[#allocation2 + $0x30] sm:$0xff] %vm1693, %v1941
        %1974 = vst.msk [vmem:[#allocation2 + $0x38] sm:$0xff] %vm1693, %v1942
        %1975 = vst.msk [vmem:[#allocation2 + $0x40] sm:$0xff] %vm1693, %v1943
        %1976 = vst.msk [vmem:[#allocation2 + $0x48] sm:$0xff] %vm1693, %v1944
        %1977 = vst.msk [vmem:[#allocation2 + $0x50] sm:$0xff] %vm1693, %v1945
        %1978 = vst.msk [vmem:[#allocation2 + $0x58] sm:$0xff] %vm1693, %v1946
        %1979 = vst.msk [vmem:[#allocation2 + $0x60] sm:$0xff] %vm1693, %v1947
        %1980 = vst.msk [vmem:[#allocation2 + $0x68] sm:$0xff] %vm1693, %v1948
        %1981 = vst.msk [vmem:[#allocation2 + $0x70] sm:$0xff] %vm1693, %v1949
        %1982 = vst.msk [vmem:[#allocation2 + $0x78] sm:$0xff] %vm1693, %v1950
        %1983 = vst.msk [vmem:[#allocation2 + $0x80] sm:$0xff] %vm1693, %v1951
        %1984 = vst.msk [vmem:[#allocation2 + $0x88] sm:$0xff] %vm1693, %v1952
        %1985 = vst.msk [vmem:[#allocation2 + $0x90] sm:$0xff] %vm1693, %v1953
        %1986 = vst.msk [vmem:[#allocation2 + $0x98] sm:$0xff] %vm1693, %v1954
        %1987 = vst.msk [vmem:[#allocation2 + $0xa0] sm:$0xff] %vm1693, %v1955
        %1988 = vst.msk [vmem:[#allocation2 + $0xa8] sm:$0xff] %vm1693, %v1956
        %1989 = vst.msk [vmem:[#allocation2 + $0xb0] sm:$0xff] %vm1693, %v1957
        %1990 = vst.msk [vmem:[#allocation2 + $0xb8] sm:$0xff] %vm1693, %v1958
        %1991 = vst.msk [vmem:[#allocation2 + $0xc0] sm:$0xff] %vm1693, %v1959
        %1992 = vst.msk [vmem:[#allocation2 + $0xc8] sm:$0xff] %vm1693, %v1960
        %1993 = vst.msk [vmem:[#allocation2 + $0xd0] sm:$0xff] %vm1693, %v1961
        %1994 = vst.msk [vmem:[#allocation2 + $0xd8] sm:$0xff] %vm1693, %v1962
        %1995 = vst.msk [vmem:[#allocation2 + $0xe0] sm:$0xff] %vm1693, %v1963
        %1996 = vst.msk [vmem:[#allocation2 + $0xe8] sm:$0xff] %vm1693, %v1964
        %1997 = vst.msk [vmem:[#allocation2 + $0xf0] sm:$0xff] %vm1693, %v1965
        %1998 = vst.msk [vmem:[#allocation2 + $0xf8] sm:$0xff] %vm1693, %v1966
        %2031 = vrot.lane.b32.xlu0 %v1480, 64
        %v2032 = vpop.permute.xlu0 %2031
        %2033 = vrot.lane.b32.xlu0 %v1483, 64
        %v2034 = vpop.permute.xlu0 %2033
        %2035 = vrot.lane.b32.xlu0 %v1488, 64
        %v2036 = vpop.permute.xlu0 %2035
        %2037 = vrot.lane.b32.xlu0 %v1491, 64
        %v2038 = vpop.permute.xlu0 %2037
        %2039 = vrot.lane.b32.xlu0 %v1496, 64
        %v2040 = vpop.permute.xlu0 %2039
        %2041 = vrot.lane.b32.xlu0 %v1499, 64
        %v2042 = vpop.permute.xlu0 %2041
        %2043 = vrot.lane.b32.xlu0 %v1504, 64
        %v2044 = vpop.permute.xlu0 %2043
        %2045 = vrot.lane.b32.xlu0 %v1507, 64
        %v2046 = vpop.permute.xlu0 %2045
        %2047 = vrot.lane.b32.xlu0 %v1512, 64
        %v2048 = vpop.permute.xlu0 %2047
        %2049 = vrot.lane.b32.xlu0 %v1515, 64
        %v2050 = vpop.permute.xlu0 %2049
        %2051 = vrot.lane.b32.xlu0 %v1520, 64
        %v2052 = vpop.permute.xlu0 %2051
        %2053 = vrot.lane.b32.xlu0 %v1523, 64
        %v2054 = vpop.permute.xlu0 %2053
        %2055 = vrot.lane.b32.xlu0 %v1528, 64
        %v2056 = vpop.permute.xlu0 %2055
        %2057 = vrot.lane.b32.xlu0 %v1531, 64
        %v2058 = vpop.permute.xlu0 %2057
        %2059 = vrot.lane.b32.xlu0 %v1536, 64
        %v2060 = vpop.permute.xlu0 %2059
        %2061 = vrot.lane.b32.xlu0 %v1539, 64
        %v2062 = vpop.permute.xlu0 %2061
        %2063 = vrot.lane.b32.xlu0 %v1544, 64
        %v2064 = vpop.permute.xlu0 %2063
        %2065 = vrot.lane.b32.xlu0 %v1547, 64
        %v2066 = vpop.permute.xlu0 %2065
        %2067 = vrot.lane.b32.xlu0 %v1552, 64
        %v2068 = vpop.permute.xlu0 %2067
        %2069 = vrot.lane.b32.xlu0 %v1555, 64
        %v2070 = vpop.permute.xlu0 %2069
        %2071 = vrot.lane.b32.xlu0 %v1560, 64
        %v2072 = vpop.permute.xlu0 %2071
        %2073 = vrot.lane.b32.xlu0 %v1563, 64
        %v2074 = vpop.permute.xlu0 %2073
        %2075 = vrot.lane.b32.xlu0 %v1568, 64
        %v2076 = vpop.permute.xlu0 %2075
        %2077 = vrot.lane.b32.xlu0 %v1571, 64
        %v2078 = vpop.permute.xlu0 %2077
        %2079 = vrot.lane.b32.xlu0 %v1576, 64
        %v2080 = vpop.permute.xlu0 %2079
        %2081 = vrot.lane.b32.xlu0 %v1579, 64
        %v2082 = vpop.permute.xlu0 %2081
        %2083 = vrot.lane.b32.xlu0 %v1584, 64
        %v2084 = vpop.permute.xlu0 %2083
        %2085 = vrot.lane.b32.xlu0 %v1587, 64
        %v2086 = vpop.permute.xlu0 %2085
        %2087 = vrot.lane.b32.xlu0 %v1592, 64
        %v2088 = vpop.permute.xlu0 %2087
        %2089 = vrot.lane.b32.xlu0 %v1595, 64
        %v2090 = vpop.permute.xlu0 %2089
        %2091 = vrot.lane.b32.xlu0 %v1600, 64
        %v2092 = vpop.permute.xlu0 %2091
        %2093 = vrot.lane.b32.xlu0 %v1603, 64
        %v2094 = vpop.permute.xlu0 %2093
        %v2127 = vadd.f32 %v1777, %v2032
        %v2128 = vadd.f32 %v1780, %v2034
        %v2129 = vadd.f32 %v1785, %v2036
        %v2130 = vadd.f32 %v1788, %v2038
        %v2131 = vadd.f32 %v1793, %v2040
        %v2132 = vadd.f32 %v1796, %v2042
        %v2133 = vadd.f32 %v1801, %v2044
        %v2134 = vadd.f32 %v1804, %v2046
        %v2135 = vadd.f32 %v1809, %v2048
        %v2136 = vadd.f32 %v1812, %v2050
        %v2137 = vadd.f32 %v1817, %v2052
        %v2138 = vadd.f32 %v1820, %v2054
        %v2139 = vadd.f32 %v1825, %v2056
        %v2140 = vadd.f32 %v1828, %v2058
        %v2141 = vadd.f32 %v1833, %v2060
        %v2142 = vadd.f32 %v1836, %v2062
        %v2143 = vadd.f32 %v1841, %v2064
        %v2144 = vadd.f32 %v1844, %v2066
        %v2145 = vadd.f32 %v1849, %v2068
        %v2146 = vadd.f32 %v1852, %v2070
        %v2147 = vadd.f32 %v1857, %v2072
        %v2148 = vadd.f32 %v1860, %v2074
        %v2149 = vadd.f32 %v1865, %v2076
        %v2150 = vadd.f32 %v1868, %v2078
        %v2151 = vadd.f32 %v1873, %v2080
        %v2152 = vadd.f32 %v1876, %v2082
        %v2153 = vadd.f32 %v1881, %v2084
        %v2154 = vadd.f32 %v1884, %v2086
        %v2155 = vadd.f32 %v1889, %v2088
        %v2156 = vadd.f32 %v1892, %v2090
        %v2157 = vadd.f32 %v1897, %v2092
        %v2158 = vadd.f32 %v1900, %v2094
        %vm2159 = vcmask 1048064
        %2160 = vst.msk [vmem:[#allocation2] sm:$0xff] %vm2159, %v2127
        %2161 = vst.msk [vmem:[#allocation2 + $0x8] sm:$0xff] %vm2159, %v2128
        %2162 = vst.msk [vmem:[#allocation2 + $0x10] sm:$0xff] %vm2159, %v2129
        %2163 = vst.msk [vmem:[#allocation2 + $0x18] sm:$0xff] %vm2159, %v2130
        %2164 = vst.msk [vmem:[#allocation2 + $0x20] sm:$0xff] %vm2159, %v2131
        %2165 = vst.msk [vmem:[#allocation2 + $0x28] sm:$0xff] %vm2159, %v2132
        %2166 = vst.msk [vmem:[#allocation2 + $0x30] sm:$0xff] %vm2159, %v2133
        %2167 = vst.msk [vmem:[#allocation2 + $0x38] sm:$0xff] %vm2159, %v2134
        %2168 = vst.msk [vmem:[#allocation2 + $0x40] sm:$0xff] %vm2159, %v2135
        %2169 = vst.msk [vmem:[#allocation2 + $0x48] sm:$0xff] %vm2159, %v2136
        %2170 = vst.msk [vmem:[#allocation2 + $0x50] sm:$0xff] %vm2159, %v2137
        %2171 = vst.msk [vmem:[#allocation2 + $0x58] sm:$0xff] %vm2159, %v2138
        %2172 = vst.msk [vmem:[#allocation2 + $0x60] sm:$0xff] %vm2159, %v2139
        %2173 = vst.msk [vmem:[#allocation2 + $0x68] sm:$0xff] %vm2159, %v2140
        %2174 = vst.msk [vmem:[#allocation2 + $0x70] sm:$0xff] %vm2159, %v2141
        %2175 = vst.msk [vmem:[#allocation2 + $0x78] sm:$0xff] %vm2159, %v2142
        %2176 = vst.msk [vmem:[#allocation2 + $0x80] sm:$0xff] %vm2159, %v2143
        %2177 = vst.msk [vmem:[#allocation2 + $0x88] sm:$0xff] %vm2159, %v2144
        %2178 = vst.msk [vmem:[#allocation2 + $0x90] sm:$0xff] %vm2159, %v2145
        %2179 = vst.msk [vmem:[#allocation2 + $0x98] sm:$0xff] %vm2159, %v2146
        %2180 = vst.msk [vmem:[#allocation2 + $0xa0] sm:$0xff] %vm2159, %v2147
        %2181 = vst.msk [vmem:[#allocation2 + $0xa8] sm:$0xff] %vm2159, %v2148
        %2182 = vst.msk [vmem:[#allocation2 + $0xb0] sm:$0xff] %vm2159, %v2149
        %2183 = vst.msk [vmem:[#allocation2 + $0xb8] sm:$0xff] %vm2159, %v2150
        %2184 = vst.msk [vmem:[#allocation2 + $0xc0] sm:$0xff] %vm2159, %v2151
        %2185 = vst.msk [vmem:[#allocation2 + $0xc8] sm:$0xff] %vm2159, %v2152
        %2186 = vst.msk [vmem:[#allocation2 + $0xd0] sm:$0xff] %vm2159, %v2153
        %2187 = vst.msk [vmem:[#allocation2 + $0xd8] sm:$0xff] %vm2159, %v2154
        %2188 = vst.msk [vmem:[#allocation2 + $0xe0] sm:$0xff] %vm2159, %v2155
        %2189 = vst.msk [vmem:[#allocation2 + $0xe8] sm:$0xff] %vm2159, %v2156
        %2190 = vst.msk [vmem:[#allocation2 + $0xf0] sm:$0xff] %vm2159, %v2157
        %2191 = vst.msk [vmem:[#allocation2 + $0xf8] sm:$0xff] %vm2159, %v2158
        %v2192 = vld [vmem:[#allocation2] sm:$0xff]
        %v2193 = vld [vmem:[#allocation2 + $0x8] sm:$0xff]
        %v2194 = vld [vmem:[#allocation2 + $0x10] sm:$0xff]
        %v2195 = vld [vmem:[#allocation2 + $0x18] sm:$0xff]
        %v2196 = vld [vmem:[#allocation2 + $0x20] sm:$0xff]
        %v2197 = vld [vmem:[#allocation2 + $0x28] sm:$0xff]
        %v2198 = vld [vmem:[#allocation2 + $0x30] sm:$0xff]
        %v2199 = vld [vmem:[#allocation2 + $0x38] sm:$0xff]
        %v2200 = vld [vmem:[#allocation2 + $0x40] sm:$0xff]
        %v2201 = vld [vmem:[#allocation2 + $0x48] sm:$0xff]
        %v2202 = vld [vmem:[#allocation2 + $0x50] sm:$0xff]
        %v2203 = vld [vmem:[#allocation2 + $0x58] sm:$0xff]
        %v2204 = vld [vmem:[#allocation2 + $0x60] sm:$0xff]
        %v2205 = vld [vmem:[#allocation2 + $0x68] sm:$0xff]
        %v2206 = vld [vmem:[#allocation2 + $0x70] sm:$0xff]
        %v2207 = vld [vmem:[#allocation2 + $0x78] sm:$0xff]
        %v2208 = vld [vmem:[#allocation2 + $0x80] sm:$0xff]
        %v2209 = vld [vmem:[#allocation2 + $0x88] sm:$0xff]
        %v2210 = vld [vmem:[#allocation2 + $0x90] sm:$0xff]
        %v2211 = vld [vmem:[#allocation2 + $0x98] sm:$0xff]
        %v2212 = vld [vmem:[#allocation2 + $0xa0] sm:$0xff]
        %v2213 = vld [vmem:[#allocation2 + $0xa8] sm:$0xff]
        %v2214 = vld [vmem:[#allocation2 + $0xb0] sm:$0xff]
        %v2215 = vld [vmem:[#allocation2 + $0xb8] sm:$0xff]
        %v2216 = vld [vmem:[#allocation2 + $0xc0] sm:$0xff]
        %v2217 = vld [vmem:[#allocation2 + $0xc8] sm:$0xff]
        %v2218 = vld [vmem:[#allocation2 + $0xd0] sm:$0xff]
        %v2219 = vld [vmem:[#allocation2 + $0xd8] sm:$0xff]
        %v2220 = vld [vmem:[#allocation2 + $0xe0] sm:$0xff]
        %v2221 = vld [vmem:[#allocation2 + $0xe8] sm:$0xff]
        %v2222 = vld [vmem:[#allocation2 + $0xf0] sm:$0xff]
        %v2223 = vld [vmem:[#allocation2 + $0xf8] sm:$0xff]
        %v2224 = vpack.c.bf16 %v2193, %v2192
        %v2225 = vpack.c.bf16 %v2195, %v2194
        %v2226 = vpack.c.bf16 %v2197, %v2196
        %v2227 = vpack.c.bf16 %v2199, %v2198
        %v2228 = vpack.c.bf16 %v2201, %v2200
        %v2229 = vpack.c.bf16 %v2203, %v2202
        %v2230 = vpack.c.bf16 %v2205, %v2204
        %v2231 = vpack.c.bf16 %v2207, %v2206
        %v2232 = vpack.c.bf16 %v2209, %v2208
        %v2233 = vpack.c.bf16 %v2211, %v2210
        %v2234 = vpack.c.bf16 %v2213, %v2212
        %v2235 = vpack.c.bf16 %v2215, %v2214
        %v2236 = vpack.c.bf16 %v2217, %v2216
        %v2237 = vpack.c.bf16 %v2219, %v2218
        %v2238 = vpack.c.bf16 %v2221, %v2220
        %v2239 = vpack.c.bf16 %v2223, %v2222
        %v2240 = vld [vmem:[%s12] sm:$0xf]
        %v2241 = vld [vmem:[%s12 + $0x4] sm:$0xf]
        %v2242 = vld [vmem:[%s12 + $0x8] sm:$0xf]
        %v2243 = vld [vmem:[%s12 + $0xc] sm:$0xf]
        %v2244 = vld [vmem:[%s12 + $0x10] sm:$0xf]
        %v2245 = vld [vmem:[%s12 + $0x14] sm:$0xf]
        %v2246 = vld [vmem:[%s12 + $0x18] sm:$0xf]
        %v2247 = vld [vmem:[%s12 + $0x1c] sm:$0xf]
        %v2248 = vld [vmem:[%s12 + $0x20] sm:$0xf]
        %v2249 = vld [vmem:[%s12 + $0x24] sm:$0xf]
        %v2250 = vld [vmem:[%s12 + $0x28] sm:$0xf]
        %v2251 = vld [vmem:[%s12 + $0x2c] sm:$0xf]
        %v2252 = vld [vmem:[%s12 + $0x30] sm:$0xf]
        %v2253 = vld [vmem:[%s12 + $0x34] sm:$0xf]
        %v2254 = vld [vmem:[%s12 + $0x38] sm:$0xf]
        %v2255 = vld [vmem:[%s12 + $0x3c] sm:$0xf]
        %v2272 = vunpack.c.l.b16 %v2240
        %v2273 = vunpack.c.l.b16 %v2241
        %v2274 = vunpack.c.l.b16 %v2242
        %v2275 = vunpack.c.l.b16 %v2243
        %v2276 = vunpack.c.l.b16 %v2244
        %v2277 = vunpack.c.l.b16 %v2245
        %v2278 = vunpack.c.l.b16 %v2246
        %v2279 = vunpack.c.l.b16 %v2247
        %v2280 = vunpack.c.l.b16 %v2248
        %v2281 = vunpack.c.l.b16 %v2249
        %v2282 = vunpack.c.l.b16 %v2250
        %v2283 = vunpack.c.l.b16 %v2251
        %v2284 = vunpack.c.l.b16 %v2252
        %v2285 = vunpack.c.l.b16 %v2253
        %v2286 = vunpack.c.l.b16 %v2254
        %v2287 = vunpack.c.l.b16 %v2255
        %v2288 = vpack.c.b16 %v2273, %v2272
        %v2289 = vpack.c.b16 %v2275, %v2274
        %v2290 = vpack.c.b16 %v2277, %v2276
        %v2291 = vpack.c.b16 %v2279, %v2278
        %v2292 = vpack.c.b16 %v2281, %v2280
        %v2293 = vpack.c.b16 %v2283, %v2282
        %v2294 = vpack.c.b16 %v2285, %v2284
        %v2295 = vpack.c.b16 %v2287, %v2286
        %2304 = vmatprep.subr.bf16.mxu0 0
        %2305 = vmatpush1.bf16.msra.mxu0 %v2295
        %2306 = vmatprep.subr.bf16.mxu0 0
        %2307 = vmatpush1.bf16.msra.mxu0 %v2294
        %2308 = vmatprep.subr.bf16.mxu0 0
        %2309 = vmatpush1.bf16.msra.mxu0 %v2293
        %2310 = vmatprep.subr.bf16.mxu0 0
        %2311 = vmatpush1.bf16.msra.mxu0 %v2292
        %2312 = vmatprep.subr.bf16.mxu0 0
        %2313 = vmatpush1.bf16.msra.mxu0 %v2291
        %2314 = vmatprep.subr.bf16.mxu0 0
        %2315 = vmatpush1.bf16.msra.mxu0 %v2290
        %2316 = vmatprep.subr.bf16.mxu0 0
        %2317 = vmatpush1.bf16.msra.mxu0 %v2289
        %2318 = vmatprep.subr.bf16.mxu0 0
        %2319 = vmatpush1.bf16.msra.mxu0 %v2288
        %2320 = vmatprep.subr.bf16.mxu0 0
        %2321 = vmatpush2.bf16.msra.mxu0 0
        %2322 = vmatprep.subr.bf16.mxu0 0
        %2323 = vmatpush2.bf16.msra.mxu0 0
        %2324 = vmatprep.subr.bf16.mxu0 0
        %2325 = vmatpush2.bf16.msra.mxu0 0
        %2326 = vmatprep.subr.bf16.mxu0 0
        %2327 = vmatpush2.bf16.msra.mxu0 0
        %2328 = vmatprep.subr.bf16.mxu0 0
        %2329 = vmatpush2.bf16.msra.mxu0 0
        %2330 = vmatprep.subr.bf16.mxu0 0
        %2331 = vmatpush2.bf16.msra.mxu0 0
        %2332 = vmatprep.subr.bf16.mxu0 0
        %2333 = vmatpush2.bf16.msra.mxu0 0
        %2334 = vmatprep.subr.bf16.mxu0 0
        %2335 = vmatpush2.bf16.msra.mxu0 0
        %2336 = vmatprep.mubr.bf16.mxu0 0
        %2337 = vmatmul.mubr.bf16.gmra.mxu0 %v2224
        %v2338 = vpop.f32.mrf.mxu0
        %v2339 = vadd.f32 0.0, %v2338
        %v2340 = vpop.f32.mrf.mxu0
        %v2341 = vpop.f32.mrf.mxu0
        %v2342 = vadd.f32 0.0, %v2341
        %v2343 = vpop.f32.mrf.mxu0
        %2344 = vmatprep.mubr.bf16.mxu0 0
        %2345 = vmatmul.mubr.bf16.gmra.mxu0 %v2225
        %v2346 = vpop.f32.mrf.mxu0
        %v2347 = vadd.f32 0.0, %v2346
        %v2348 = vpop.f32.mrf.mxu0
        %v2349 = vpop.f32.mrf.mxu0
        %v2350 = vadd.f32 0.0, %v2349
        %v2351 = vpop.f32.mrf.mxu0
        %2352 = vmatprep.mubr.bf16.mxu0 0
        %2353 = vmatmul.mubr.bf16.gmra.mxu0 %v2226
        %v2354 = vpop.f32.mrf.mxu0
        %v2355 = vadd.f32 0.0, %v2354
        %v2356 = vpop.f32.mrf.mxu0
        %v2357 = vpop.f32.mrf.mxu0
        %v2358 = vadd.f32 0.0, %v2357
        %v2359 = vpop.f32.mrf.mxu0
        %2360 = vmatprep.mubr.bf16.mxu0 0
        %2361 = vmatmul.mubr.bf16.gmra.mxu0 %v2227
        %v2362 = vpop.f32.mrf.mxu0
        %v2363 = vadd.f32 0.0, %v2362
        %v2364 = vpop.f32.mrf.mxu0
        %v2365 = vpop.f32.mrf.mxu0
        %v2366 = vadd.f32 0.0, %v2365
        %v2367 = vpop.f32.mrf.mxu0
        %2368 = vmatprep.mubr.bf16.mxu0 0
        %2369 = vmatmul.mubr.bf16.gmra.mxu0 %v2228
        %v2370 = vpop.f32.mrf.mxu0
        %v2371 = vadd.f32 0.0, %v2370
        %v2372 = vpop.f32.mrf.mxu0
        %v2373 = vpop.f32.mrf.mxu0
        %v2374 = vadd.f32 0.0, %v2373
        %v2375 = vpop.f32.mrf.mxu0
        %2376 = vmatprep.mubr.bf16.mxu0 0
        %2377 = vmatmul.mubr.bf16.gmra.mxu0 %v2229
        %v2378 = vpop.f32.mrf.mxu0
        %v2379 = vadd.f32 0.0, %v2378
        %v2380 = vpop.f32.mrf.mxu0
        %v2381 = vpop.f32.mrf.mxu0
        %v2382 = vadd.f32 0.0, %v2381
        %v2383 = vpop.f32.mrf.mxu0
        %2384 = vmatprep.mubr.bf16.mxu0 0
        %2385 = vmatmul.mubr.bf16.gmra.mxu0 %v2230
        %v2386 = vpop.f32.mrf.mxu0
        %v2387 = vadd.f32 0.0, %v2386
        %v2388 = vpop.f32.mrf.mxu0
        %v2389 = vpop.f32.mrf.mxu0
        %v2390 = vadd.f32 0.0, %v2389
        %v2391 = vpop.f32.mrf.mxu0
        %2392 = vmatprep.mubr.bf16.mxu0 0
        %2393 = vmatmul.mubr.bf16.gmra.mxu0 %v2231
        %v2394 = vpop.f32.mrf.mxu0
        %v2395 = vadd.f32 0.0, %v2394
        %v2396 = vpop.f32.mrf.mxu0
        %v2397 = vpop.f32.mrf.mxu0
        %v2398 = vadd.f32 0.0, %v2397
        %v2399 = vpop.f32.mrf.mxu0
        %2400 = vmatprep.mubr.bf16.mxu0 0
        %2401 = vmatmul.mubr.bf16.gmra.mxu0 %v2232
        %v2402 = vpop.f32.mrf.mxu0
        %v2403 = vadd.f32 0.0, %v2402
        %v2404 = vpop.f32.mrf.mxu0
        %v2405 = vpop.f32.mrf.mxu0
        %v2406 = vadd.f32 0.0, %v2405
        %v2407 = vpop.f32.mrf.mxu0
        %2408 = vmatprep.mubr.bf16.mxu0 0
        %2409 = vmatmul.mubr.bf16.gmra.mxu0 %v2233
        %v2410 = vpop.f32.mrf.mxu0
        %v2411 = vadd.f32 0.0, %v2410
        %v2412 = vpop.f32.mrf.mxu0
        %v2413 = vpop.f32.mrf.mxu0
        %v2414 = vadd.f32 0.0, %v2413
        %v2415 = vpop.f32.mrf.mxu0
        %2416 = vmatprep.mubr.bf16.mxu0 0
        %2417 = vmatmul.mubr.bf16.gmra.mxu0 %v2234
        %v2418 = vpop.f32.mrf.mxu0
        %v2419 = vadd.f32 0.0, %v2418
        %v2420 = vpop.f32.mrf.mxu0
        %v2421 = vpop.f32.mrf.mxu0
        %v2422 = vadd.f32 0.0, %v2421
        %v2423 = vpop.f32.mrf.mxu0
        %2424 = vmatprep.mubr.bf16.mxu0 0
        %2425 = vmatmul.mubr.bf16.gmra.mxu0 %v2235
        %v2426 = vpop.f32.mrf.mxu0
        %v2427 = vadd.f32 0.0, %v2426
        %v2428 = vpop.f32.mrf.mxu0
        %v2429 = vpop.f32.mrf.mxu0
        %v2430 = vadd.f32 0.0, %v2429
        %v2431 = vpop.f32.mrf.mxu0
        %2432 = vmatprep.mubr.bf16.mxu0 0
        %2433 = vmatmul.mubr.bf16.gmra.mxu0 %v2236
        %v2434 = vpop.f32.mrf.mxu0
        %v2435 = vadd.f32 0.0, %v2434
        %v2436 = vpop.f32.mrf.mxu0
        %v2437 = vpop.f32.mrf.mxu0
        %v2438 = vadd.f32 0.0, %v2437
        %v2439 = vpop.f32.mrf.mxu0
        %2440 = vmatprep.mubr.bf16.mxu0 0
        %2441 = vmatmul.mubr.bf16.gmra.mxu0 %v2237
        %v2442 = vpop.f32.mrf.mxu0
        %v2443 = vadd.f32 0.0, %v2442
        %v2444 = vpop.f32.mrf.mxu0
        %v2445 = vpop.f32.mrf.mxu0
        %v2446 = vadd.f32 0.0, %v2445
        %v2447 = vpop.f32.mrf.mxu0
        %2448 = vmatprep.mubr.bf16.mxu0 0
        %2449 = vmatmul.mubr.bf16.gmra.mxu0 %v2238
        %v2450 = vpop.f32.mrf.mxu0
        %v2451 = vadd.f32 0.0, %v2450
        %v2452 = vpop.f32.mrf.mxu0
        %v2453 = vpop.f32.mrf.mxu0
        %v2454 = vadd.f32 0.0, %v2453
        %v2455 = vpop.f32.mrf.mxu0
        %2456 = vmatprep.mubr.bf16.mxu0 0
        %2457 = vmatmul.mubr.bf16.gmra.mxu0 %v2239
        %v2458 = vpop.f32.mrf.mxu0
        %v2459 = vadd.f32 0.0, %v2458
        %v2460 = vpop.f32.mrf.mxu0
        %v2461 = vpop.f32.mrf.mxu0
        %v2462 = vadd.f32 0.0, %v2461
        %v2463 = vpop.f32.mrf.mxu0
        %2464 = vdwg.mxu0
        %v2465 = vld [vmem:[%s14] sm:$0xff]
        %v2466 = vld [vmem:[%s14 + $0x8] sm:$0xff]
        %v2467 = vld [vmem:[%s14 + $0x10] sm:$0xff]
        %v2468 = vld [vmem:[%s14 + $0x18] sm:$0xff]
        %v2469 = vld [vmem:[%s14 + $0x20] sm:$0xff]
        %v2470 = vld [vmem:[%s14 + $0x28] sm:$0xff]
        %v2471 = vld [vmem:[%s14 + $0x30] sm:$0xff]
        %v2472 = vld [vmem:[%s14 + $0x38] sm:$0xff]
        %v2481 = vunpack.c.l.b16 %v2465
        %v2482 = vunpack.c.h.b16 %v2465
        %v2483 = vunpack.c.l.b16 %v2466
        %v2484 = vunpack.c.h.b16 %v2466
        %v2485 = vunpack.c.l.b16 %v2467
        %v2486 = vunpack.c.h.b16 %v2467
        %v2487 = vunpack.c.l.b16 %v2468
        %v2488 = vunpack.c.h.b16 %v2468
        %v2489 = vunpack.c.l.b16 %v2469
        %v2490 = vunpack.c.h.b16 %v2469
        %v2491 = vunpack.c.l.b16 %v2470
        %v2492 = vunpack.c.h.b16 %v2470
        %v2493 = vunpack.c.l.b16 %v2471
        %v2494 = vunpack.c.h.b16 %v2471
        %v2495 = vunpack.c.l.b16 %v2472
        %v2496 = vunpack.c.h.b16 %v2472
        %v2497 = vpack.c.b16 %v2483, %v2481
        %v2498 = vpack.c.b16 %v2484, %v2482
        %v2499 = vpack.c.b16 %v2487, %v2485
        %v2500 = vpack.c.b16 %v2488, %v2486
        %v2501 = vpack.c.b16 %v2491, %v2489
        %v2502 = vpack.c.b16 %v2492, %v2490
        %v2503 = vpack.c.b16 %v2495, %v2493
        %v2504 = vpack.c.b16 %v2496, %v2494
        %2513 = vmatprep.subr.bf16.mxu0 0
        %2514 = vmatpush1.bf16.msra.mxu0 %v2231
        %2515 = vmatprep.subr.bf16.mxu0 0
        %2516 = vmatpush1.bf16.msra.mxu0 %v2230
        %2517 = vmatprep.subr.bf16.mxu0 0
        %2518 = vmatpush1.bf16.msra.mxu0 %v2229
        %2519 = vmatprep.subr.bf16.mxu0 0
        %2520 = vmatpush1.bf16.msra.mxu0 %v2228
        %2521 = vmatprep.subr.bf16.mxu0 0
        %2522 = vmatpush1.bf16.msra.mxu0 %v2227
        %2523 = vmatprep.subr.bf16.mxu0 0
        %2524 = vmatpush1.bf16.msra.mxu0 %v2226
        %2525 = vmatprep.subr.bf16.mxu0 0
        %2526 = vmatpush1.bf16.msra.mxu0 %v2225
        %2527 = vmatprep.subr.bf16.mxu0 0
        %2528 = vmatpush1.bf16.msra.mxu0 %v2224
        %2529 = vmatprep.subr.bf16.mxu0 0
        %2530 = vmatpush2.bf16.msra.mxu0 %v2239
        %2531 = vmatprep.subr.bf16.mxu0 0
        %2532 = vmatpush2.bf16.msra.mxu0 %v2238
        %2533 = vmatprep.subr.bf16.mxu0 0
        %2534 = vmatpush2.bf16.msra.mxu0 %v2237
        %2535 = vmatprep.subr.bf16.mxu0 0
        %2536 = vmatpush2.bf16.msra.mxu0 %v2236
        %2537 = vmatprep.subr.bf16.mxu0 0
        %2538 = vmatpush2.bf16.msra.mxu0 %v2235
        %2539 = vmatprep.subr.bf16.mxu0 0
        %2540 = vmatpush2.bf16.msra.mxu0 %v2234
        %2541 = vmatprep.subr.bf16.mxu0 0
        %2542 = vmatpush2.bf16.msra.mxu0 %v2233
        %2543 = vmatprep.subr.bf16.mxu0 0
        %2544 = vmatpush2.bf16.msra.mxu0 %v2232
        %2545 = vmatprep.mubr.bf16.mxu0 %v2498
        %2546 = vmatmul.mubr.bf16.gmra.mxu0 %v2497
        %v2547 = vpop.f32.mrf.mxu0
        %v2548 = vadd.f32 0.0, %v2547
        %v2549 = vpop.f32.mrf.mxu0
        %v2550 = vpop.f32.mrf.mxu0
        %v2551 = vadd.f32 0.0, %v2550
        %v2552 = vpop.f32.mrf.mxu0
        %2553 = vmatprep.mubr.bf16.mxu0 %v2500
        %2554 = vmatmul.mubr.bf16.gmra.mxu0 %v2499
        %v2555 = vpop.f32.mrf.mxu0
        %v2556 = vadd.f32 0.0, %v2555
        %v2557 = vpop.f32.mrf.mxu0
        %v2558 = vpop.f32.mrf.mxu0
        %v2559 = vadd.f32 0.0, %v2558
        %v2560 = vpop.f32.mrf.mxu0
        %2561 = vmatprep.mubr.bf16.mxu0 %v2502
        %2562 = vmatmul.mubr.bf16.gmra.mxu0 %v2501
        %v2563 = vpop.f32.mrf.mxu0
        %v2564 = vadd.f32 0.0, %v2563
        %v2565 = vpop.f32.mrf.mxu0
        %v2566 = vpop.f32.mrf.mxu0
        %v2567 = vadd.f32 0.0, %v2566
        %v2568 = vpop.f32.mrf.mxu0
        %2569 = vmatprep.mubr.bf16.mxu0 %v2504
        %2570 = vmatmul.mubr.bf16.gmra.mxu0 %v2503
        %v2571 = vpop.f32.mrf.mxu0
        %v2572 = vadd.f32 0.0, %v2571
        %v2573 = vpop.f32.mrf.mxu0
        %v2574 = vpop.f32.mrf.mxu0
        %v2575 = vadd.f32 0.0, %v2574
        %v2576 = vpop.f32.mrf.mxu0
        %2577 = vdwg.mxu0
        %v2578 = vpack.c.bf16 %v2551, %v2548
        %v2579 = vpack.c.bf16 %v2559, %v2556
        %v2580 = vpack.c.bf16 %v2567, %v2564
        %v2581 = vpack.c.bf16 %v2575, %v2572
        %v2582 = vld [vmem:[%s13] sm:$0xf]
        %v2583 = vld [vmem:[%s13 + $0x4] sm:$0xf]
        %v2584 = vld [vmem:[%s13 + $0x8] sm:$0xf]
        %v2585 = vld [vmem:[%s13 + $0xc] sm:$0xf]
        %v2586 = vld [vmem:[%s13 + $0x10] sm:$0xf]
        %v2587 = vld [vmem:[%s13 + $0x14] sm:$0xf]
        %v2588 = vld [vmem:[%s13 + $0x18] sm:$0xf]
        %v2589 = vld [vmem:[%s13 + $0x1c] sm:$0xf]
        %v2590 = vld [vmem:[%s13 + $0x20] sm:$0xf]
        %v2591 = vld [vmem:[%s13 + $0x24] sm:$0xf]
        %v2592 = vld [vmem:[%s13 + $0x28] sm:$0xf]
        %v2593 = vld [vmem:[%s13 + $0x2c] sm:$0xf]
        %v2594 = vld [vmem:[%s13 + $0x30] sm:$0xf]
        %v2595 = vld [vmem:[%s13 + $0x34] sm:$0xf]
        %v2596 = vld [vmem:[%s13 + $0x38] sm:$0xf]
        %v2597 = vld [vmem:[%s13 + $0x3c] sm:$0xf]
        %v2614 = vunpack.c.l.b16 %v2582
        %v2615 = vunpack.c.l.b16 %v2583
        %v2616 = vunpack.c.l.b16 %v2584
        %v2617 = vunpack.c.l.b16 %v2585
        %v2618 = vunpack.c.l.b16 %v2586
        %v2619 = vunpack.c.l.b16 %v2587
        %v2620 = vunpack.c.l.b16 %v2588
        %v2621 = vunpack.c.l.b16 %v2589
        %v2622 = vunpack.c.l.b16 %v2590
        %v2623 = vunpack.c.l.b16 %v2591
        %v2624 = vunpack.c.l.b16 %v2592
        %v2625 = vunpack.c.l.b16 %v2593
        %v2626 = vunpack.c.l.b16 %v2594
        %v2627 = vunpack.c.l.b16 %v2595
        %v2628 = vunpack.c.l.b16 %v2596
        %v2629 = vunpack.c.l.b16 %v2597
        %v2630 = vpack.c.b16 %v2615, %v2614
        %v2631 = vpack.c.b16 %v2617, %v2616
        %v2632 = vpack.c.b16 %v2619, %v2618
        %v2633 = vpack.c.b16 %v2621, %v2620
        %v2634 = vpack.c.b16 %v2623, %v2622
        %v2635 = vpack.c.b16 %v2625, %v2624
        %v2636 = vpack.c.b16 %v2627, %v2626
        %v2637 = vpack.c.b16 %v2629, %v2628
        %2646 = vmatprep.subr.bf16.mxu0 0
        %2647 = vmatpush1.bf16.msra.mxu0 %v2637
        %2648 = vmatprep.subr.bf16.mxu0 0
        %2649 = vmatpush1.bf16.msra.mxu0 %v2636
        %2650 = vmatprep.subr.bf16.mxu0 0
        %2651 = vmatpush1.bf16.msra.mxu0 %v2635
        %2652 = vmatprep.subr.bf16.mxu0 0
        %2653 = vmatpush1.bf16.msra.mxu0 %v2634
        %2654 = vmatprep.subr.bf16.mxu0 0
        %2655 = vmatpush1.bf16.msra.mxu0 %v2633
        %2656 = vmatprep.subr.bf16.mxu0 0
        %2657 = vmatpush1.bf16.msra.mxu0 %v2632
        %2658 = vmatprep.subr.bf16.mxu0 0
        %2659 = vmatpush1.bf16.msra.mxu0 %v2631
        %2660 = vmatprep.subr.bf16.mxu0 0
        %2661 = vmatpush1.bf16.msra.mxu0 %v2630
        %2662 = vmatprep.subr.bf16.mxu0 0
        %2663 = vmatpush2.bf16.msra.mxu0 0
        %2664 = vmatprep.subr.bf16.mxu0 0
        %2665 = vmatpush2.bf16.msra.mxu0 0
        %2666 = vmatprep.subr.bf16.mxu0 0
        %2667 = vmatpush2.bf16.msra.mxu0 0
        %2668 = vmatprep.subr.bf16.mxu0 0
        %2669 = vmatpush2.bf16.msra.mxu0 0
        %2670 = vmatprep.subr.bf16.mxu0 0
        %2671 = vmatpush2.bf16.msra.mxu0 0
        %2672 = vmatprep.subr.bf16.mxu0 0
        %2673 = vmatpush2.bf16.msra.mxu0 0
        %2674 = vmatprep.subr.bf16.mxu0 0
        %2675 = vmatpush2.bf16.msra.mxu0 0
        %2676 = vmatprep.subr.bf16.mxu0 0
        %2677 = vmatpush2.bf16.msra.mxu0 0
        %2678 = vmatprep.mubr.bf16.mxu0 0
        %2679 = vmatmul.mubr.bf16.gmra.mxu0 %v2578
        %v2680 = vpop.f32.mrf.mxu0
        %v2681 = vadd.f32 0.0, %v2680
        %v2682 = vpop.f32.mrf.mxu0
        %v2683 = vpop.f32.mrf.mxu0
        %v2684 = vadd.f32 0.0, %v2683
        %v2685 = vpop.f32.mrf.mxu0
        %2686 = vmatprep.mubr.bf16.mxu0 0
        %2687 = vmatmul.mubr.bf16.gmra.mxu0 %v2579
        %v2688 = vpop.f32.mrf.mxu0
        %v2689 = vadd.f32 0.0, %v2688
        %v2690 = vpop.f32.mrf.mxu0
        %v2691 = vpop.f32.mrf.mxu0
        %v2692 = vadd.f32 0.0, %v2691
        %v2693 = vpop.f32.mrf.mxu0
        %2694 = vmatprep.mubr.bf16.mxu0 0
        %2695 = vmatmul.mubr.bf16.gmra.mxu0 %v2580
        %v2696 = vpop.f32.mrf.mxu0
        %v2697 = vadd.f32 0.0, %v2696
        %v2698 = vpop.f32.mrf.mxu0
        %v2699 = vpop.f32.mrf.mxu0
        %v2700 = vadd.f32 0.0, %v2699
        %v2701 = vpop.f32.mrf.mxu0
        %2702 = vmatprep.mubr.bf16.mxu0 0
        %2703 = vmatmul.mubr.bf16.gmra.mxu0 %v2581
        %v2704 = vpop.f32.mrf.mxu0
        %v2705 = vadd.f32 0.0, %v2704
        %v2706 = vpop.f32.mrf.mxu0
        %v2707 = vpop.f32.mrf.mxu0
        %v2708 = vadd.f32 0.0, %v2707
        %v2709 = vpop.f32.mrf.mxu0
        %2710 = vdwg.mxu0
        %v2711 = vpack.c.bf16 %v2342, %v2339
        %v2712 = vpack.c.bf16 %v2350, %v2347
        %v2713 = vpack.c.bf16 %v2358, %v2355
        %v2714 = vpack.c.bf16 %v2366, %v2363
        %v2715 = vpack.c.bf16 %v2374, %v2371
        %v2716 = vpack.c.bf16 %v2382, %v2379
        %v2717 = vpack.c.bf16 %v2390, %v2387
        %v2718 = vpack.c.bf16 %v2398, %v2395
        %v2719 = vpack.c.bf16 %v2684, %v2681
        %v2720 = vpack.c.bf16 %v2692, %v2689
        %v2721 = vpack.c.bf16 %v2406, %v2403
        %v2722 = vpack.c.bf16 %v2414, %v2411
        %v2723 = vpack.c.bf16 %v2422, %v2419
        %v2724 = vpack.c.bf16 %v2430, %v2427
        %v2725 = vpack.c.bf16 %v2438, %v2435
        %v2726 = vpack.c.bf16 %v2446, %v2443
        %v2727 = vpack.c.bf16 %v2454, %v2451
        %v2728 = vpack.c.bf16 %v2462, %v2459
        %v2729 = vpack.c.bf16 %v2700, %v2697
        %v2730 = vpack.c.bf16 %v2708, %v2705
        %v2732 = vsel %vm1693, %v2721, 0
        %v2735 = vsel %vm1693, %v2722, 0
        %v2738 = vsel %vm1693, %v2723, 0
        %v2741 = vsel %vm1693, %v2724, 0
        %v2744 = vsel %vm1693, %v2725, 0
        %v2747 = vsel %vm1693, %v2726, 0
        %v2750 = vsel %vm1693, %v2727, 0
        %v2753 = vsel %vm1693, %v2728, 0
        %v2756 = vsel %vm1693, %v2729, 0
        %v2759 = vsel %vm1693, %v2730, 0
        %2761 = vmatprep.subr.bf16.mxu0 0
        %2762 = vmatpush1.bf16.xpose.msra.mxu0 0
        %2763 = vmatprep.subr.bf16.mxu0 0
        %2764 = vmatpush1.bf16.xpose.msra.mxu0 0
        %2765 = vmatprep.subr.bf16.mxu0 0
        %2766 = vmatpush1.bf16.xpose.msra.mxu0 0
        %2767 = vmatprep.subr.bf16.mxu0 0
        %2768 = vmatpush1.bf16.xpose.msra.mxu0 0
        %2769 = vmatprep.subr.bf16.mxu0 0
        %2770 = vmatpush1.bf16.xpose.msra.mxu0 0
        %2771 = vmatprep.subr.bf16.mxu0 0
        %2772 = vmatpush1.bf16.xpose.msra.mxu0 0
        %2773 = vmatprep.subr.bf16.mxu0 0
        %2774 = vmatpush1.bf16.xpose.msra.mxu0 %v2759
        %2775 = vmatprep.subr.bf16.mxu0 0
        %2776 = vmatpush1.bf16.xpose.msra.mxu0 %v2756
        %2777 = vmatprep.subr.bf16.mxu0 0
        %2778 = vmatpush2.bf16.xpose.msra.mxu0 0
        %2779 = vmatprep.subr.bf16.mxu0 0
        %2780 = vmatpush2.bf16.xpose.msra.mxu0 0
        %2781 = vmatprep.subr.bf16.mxu0 0
        %2782 = vmatpush2.bf16.xpose.msra.mxu0 0
        %2783 = vmatprep.subr.bf16.mxu0 0
        %2784 = vmatpush2.bf16.xpose.msra.mxu0 0
        %2785 = vmatprep.subr.bf16.mxu0 0
        %2786 = vmatpush2.bf16.xpose.msra.mxu0 0
        %2787 = vmatprep.subr.bf16.mxu0 0
        %2788 = vmatpush2.bf16.xpose.msra.mxu0 0
        %2789 = vmatprep.subr.bf16.mxu0 0
        %2790 = vmatpush2.bf16.xpose.msra.mxu0 0
        %2791 = vmatprep.subr.bf16.mxu0 0
        %2792 = vmatpush2.bf16.xpose.msra.mxu0 0
        %2793 = vmatprep.mubr.bf16.mxu0 0
        %2794 = vmatmul.mubr.bf16.gmra.mxu0 %v2732
        %v2795 = vpop.f32.mrf.mxu0
        %v2796 = vadd.f32 0.0, %v2795
        %v2797 = vpop.f32.mrf.mxu0
        %v2798 = vpop.f32.mrf.mxu0
        %v2799 = vadd.f32 0.0, %v2798
        %v2800 = vpop.f32.mrf.mxu0
        %2801 = vmatprep.mubr.bf16.mxu0 0
        %2802 = vmatmul.mubr.bf16.gmra.mxu0 %v2735
        %v2803 = vpop.f32.mrf.mxu0
        %v2804 = vadd.f32 0.0, %v2803
        %v2805 = vpop.f32.mrf.mxu0
        %v2806 = vpop.f32.mrf.mxu0
        %v2807 = vadd.f32 0.0, %v2806
        %v2808 = vpop.f32.mrf.mxu0
        %2809 = vmatprep.mubr.bf16.mxu0 0
        %2810 = vmatmul.mubr.bf16.gmra.mxu0 %v2738
        %v2811 = vpop.f32.mrf.mxu0
        %v2812 = vadd.f32 0.0, %v2811
        %v2813 = vpop.f32.mrf.mxu0
        %v2814 = vpop.f32.mrf.mxu0
        %v2815 = vadd.f32 0.0, %v2814
        %v2816 = vpop.f32.mrf.mxu0
        %2817 = vmatprep.mubr.bf16.mxu0 0
        %2818 = vmatmul.mubr.bf16.gmra.mxu0 %v2741
        %v2819 = vpop.f32.mrf.mxu0
        %v2820 = vadd.f32 0.0, %v2819
        %v2821 = vpop.f32.mrf.mxu0
        %v2822 = vpop.f32.mrf.mxu0
        %v2823 = vadd.f32 0.0, %v2822
        %v2824 = vpop.f32.mrf.mxu0
        %2825 = vmatprep.mubr.bf16.mxu0 0
        %2826 = vmatmul.mubr.bf16.gmra.mxu0 %v2744
        %v2827 = vpop.f32.mrf.mxu0
        %v2828 = vadd.f32 0.0, %v2827
        %v2829 = vpop.f32.mrf.mxu0
        %v2830 = vpop.f32.mrf.mxu0
        %v2831 = vadd.f32 0.0, %v2830
        %v2832 = vpop.f32.mrf.mxu0
        %2833 = vmatprep.mubr.bf16.mxu0 0
        %2834 = vmatmul.mubr.bf16.gmra.mxu0 %v2747
        %v2835 = vpop.f32.mrf.mxu0
        %v2836 = vadd.f32 0.0, %v2835
        %v2837 = vpop.f32.mrf.mxu0
        %v2838 = vpop.f32.mrf.mxu0
        %v2839 = vadd.f32 0.0, %v2838
        %v2840 = vpop.f32.mrf.mxu0
        %2841 = vmatprep.mubr.bf16.mxu0 0
        %2842 = vmatmul.mubr.bf16.gmra.mxu0 %v2750
        %v2843 = vpop.f32.mrf.mxu0
        %v2844 = vadd.f32 0.0, %v2843
        %v2845 = vpop.f32.mrf.mxu0
        %v2846 = vpop.f32.mrf.mxu0
        %v2847 = vadd.f32 0.0, %v2846
        %v2848 = vpop.f32.mrf.mxu0
        %2849 = vmatprep.mubr.bf16.mxu0 0
        %2850 = vmatmul.mubr.bf16.gmra.mxu0 %v2753
        %v2851 = vpop.f32.mrf.mxu0
        %v2852 = vadd.f32 0.0, %v2851
        %v2853 = vpop.f32.mrf.mxu0
        %v2854 = vpop.f32.mrf.mxu0
        %v2855 = vadd.f32 0.0, %v2854
        %v2856 = vpop.f32.mrf.mxu0
        %2857 = vdwg.mxu0
        %v2859 = vsel %vm1693, %v2711, 0
        %v2862 = vsel %vm1693, %v2712, 0
        %v2865 = vsel %vm1693, %v2713, 0
        %v2868 = vsel %vm1693, %v2714, 0
        %v2871 = vsel %vm1693, %v2715, 0
        %v2874 = vsel %vm1693, %v2716, 0
        %v2877 = vsel %vm1693, %v2717, 0
        %v2880 = vsel %vm1693, %v2718, 0
        %v2883 = vsel %vm1693, %v2719, 0
        %v2886 = vsel %vm1693, %v2720, 0
        %2888 = vmatprep.subr.bf16.mxu0 0
        %2889 = vmatpush1.bf16.xpose.msra.mxu0 0
        %2890 = vmatprep.subr.bf16.mxu0 0
        %2891 = vmatpush1.bf16.xpose.msra.mxu0 0
        %2892 = vmatprep.subr.bf16.mxu0 0
        %2893 = vmatpush1.bf16.xpose.msra.mxu0 0
        %2894 = vmatprep.subr.bf16.mxu0 0
        %2895 = vmatpush1.bf16.xpose.msra.mxu0 0
        %2896 = vmatprep.subr.bf16.mxu0 0
        %2897 = vmatpush1.bf16.xpose.msra.mxu0 0
        %2898 = vmatprep.subr.bf16.mxu0 0
        %2899 = vmatpush1.bf16.xpose.msra.mxu0 0
        %2900 = vmatprep.subr.bf16.mxu0 0
        %2901 = vmatpush1.bf16.xpose.msra.mxu0 %v2886
        %2902 = vmatprep.subr.bf16.mxu0 0
        %2903 = vmatpush1.bf16.xpose.msra.mxu0 %v2883
        %2904 = vmatprep.subr.bf16.mxu0 0
        %2905 = vmatpush2.bf16.xpose.msra.mxu0 0
        %2906 = vmatprep.subr.bf16.mxu0 0
        %2907 = vmatpush2.bf16.xpose.msra.mxu0 0
        %2908 = vmatprep.subr.bf16.mxu0 0
        %2909 = vmatpush2.bf16.xpose.msra.mxu0 0
        %2910 = vmatprep.subr.bf16.mxu0 0
        %2911 = vmatpush2.bf16.xpose.msra.mxu0 0
        %2912 = vmatprep.subr.bf16.mxu0 0
        %2913 = vmatpush2.bf16.xpose.msra.mxu0 0
        %2914 = vmatprep.subr.bf16.mxu0 0
        %2915 = vmatpush2.bf16.xpose.msra.mxu0 0
        %2916 = vmatprep.subr.bf16.mxu0 0
        %2917 = vmatpush2.bf16.xpose.msra.mxu0 0
        %2918 = vmatprep.subr.bf16.mxu0 0
        %2919 = vmatpush2.bf16.xpose.msra.mxu0 0
        %2920 = vmatprep.mubr.bf16.mxu0 0
        %2921 = vmatmul.mubr.bf16.gmra.mxu0 %v2859
        %v2922 = vpop.f32.mrf.mxu0
        %v2923 = vadd.f32 %v2796, %v2922
        %v2924 = vpop.f32.mrf.mxu0
        %v2925 = vpop.f32.mrf.mxu0
        %v2926 = vadd.f32 %v2799, %v2925
        %v2927 = vpop.f32.mrf.mxu0
        %2928 = vmatprep.mubr.bf16.mxu0 0
        %2929 = vmatmul.mubr.bf16.gmra.mxu0 %v2862
        %v2930 = vpop.f32.mrf.mxu0
        %v2931 = vadd.f32 %v2804, %v2930
        %v2932 = vpop.f32.mrf.mxu0
        %v2933 = vpop.f32.mrf.mxu0
        %v2934 = vadd.f32 %v2807, %v2933
        %v2935 = vpop.f32.mrf.mxu0
        %2936 = vmatprep.mubr.bf16.mxu0 0
        %2937 = vmatmul.mubr.bf16.gmra.mxu0 %v2865
        %v2938 = vpop.f32.mrf.mxu0
        %v2939 = vadd.f32 %v2812, %v2938
        %v2940 = vpop.f32.mrf.mxu0
        %v2941 = vpop.f32.mrf.mxu0
        %v2942 = vadd.f32 %v2815, %v2941
        %v2943 = vpop.f32.mrf.mxu0
        %2944 = vmatprep.mubr.bf16.mxu0 0
        %2945 = vmatmul.mubr.bf16.gmra.mxu0 %v2868
        %v2946 = vpop.f32.mrf.mxu0
        %v2947 = vadd.f32 %v2820, %v2946
        %v2948 = vpop.f32.mrf.mxu0
        %v2949 = vpop.f32.mrf.mxu0
        %v2950 = vadd.f32 %v2823, %v2949
        %v2951 = vpop.f32.mrf.mxu0
        %2952 = vmatprep.mubr.bf16.mxu0 0
        %2953 = vmatmul.mubr.bf16.gmra.mxu0 %v2871
        %v2954 = vpop.f32.mrf.mxu0
        %v2955 = vadd.f32 %v2828, %v2954
        %v2956 = vpop.f32.mrf.mxu0
        %v2957 = vpop.f32.mrf.mxu0
        %v2958 = vadd.f32 %v2831, %v2957
        %v2959 = vpop.f32.mrf.mxu0
        %2960 = vmatprep.mubr.bf16.mxu0 0
        %2961 = vmatmul.mubr.bf16.gmra.mxu0 %v2874
        %v2962 = vpop.f32.mrf.mxu0
        %v2963 = vadd.f32 %v2836, %v2962
        %v2964 = vpop.f32.mrf.mxu0
        %v2965 = vpop.f32.mrf.mxu0
        %v2966 = vadd.f32 %v2839, %v2965
        %v2967 = vpop.f32.mrf.mxu0
        %2968 = vmatprep.mubr.bf16.mxu0 0
        %2969 = vmatmul.mubr.bf16.gmra.mxu0 %v2877
        %v2970 = vpop.f32.mrf.mxu0
        %v2971 = vadd.f32 %v2844, %v2970
        %v2972 = vpop.f32.mrf.mxu0
        %v2973 = vpop.f32.mrf.mxu0
        %v2974 = vadd.f32 %v2847, %v2973
        %v2975 = vpop.f32.mrf.mxu0
        %2976 = vmatprep.mubr.bf16.mxu0 0
        %2977 = vmatmul.mubr.bf16.gmra.mxu0 %v2880
        %v2978 = vpop.f32.mrf.mxu0
        %v2979 = vadd.f32 %v2852, %v2978
        %v2980 = vpop.f32.mrf.mxu0
        %v2981 = vpop.f32.mrf.mxu0
        %v2982 = vadd.f32 %v2855, %v2981
        %v2983 = vpop.f32.mrf.mxu0
        %2984 = vdwg.mxu0
        %vm2985 = vcmask 261120
        %v2986 = vsel %vm2985, %v2923, -inf
        %v2987 = vsel %vm2985, %v2926, -inf
        %v2988 = vsel %vm2985, %v2931, -inf
        %v2989 = vsel %vm2985, %v2934, -inf
        %v2990 = vsel %vm2985, %v2939, -inf
        %v2991 = vmax.f32 %v2986, %v2990
        %v2992 = vsel %vm2985, %v2942, -inf
        %v2993 = vmax.f32 %v2987, %v2992
        %v2994 = vsel %vm2985, %v2947, -inf
        %v2995 = vmax.f32 %v2988, %v2994
        %v2996 = vsel %vm2985, %v2950, -inf
        %v2997 = vmax.f32 %v2989, %v2996
        %v2998 = vsel %vm2985, %v2955, -inf
        %v2999 = vmax.f32 %v2991, %v2998
        %v3000 = vsel %vm2985, %v2958, -inf
        %v3001 = vmax.f32 %v2993, %v3000
        %v3002 = vsel %vm2985, %v2963, -inf
        %v3003 = vmax.f32 %v2995, %v3002
        %v3004 = vsel %vm2985, %v2966, -inf
        %v3005 = vmax.f32 %v2997, %v3004
        %v3006 = vsel %vm2985, %v2971, -inf
        %v3007 = vmax.f32 %v2999, %v3006
        %v3008 = vsel %vm2985, %v2974, -inf
        %v3009 = vmax.f32 %v3001, %v3008
        %v3010 = vsel %vm2985, %v2979, -inf
        %v3011 = vmax.f32 %v3003, %v3010
        %v3012 = vsel %vm2985, %v2982, -inf
        %v3013 = vmax.f32 %v3005, %v3012
        %v3014 = vmax.f32 %v3007, %v3009
        %v3015 = vmax.f32 %v3011, %v3013
        %v3016 = vmax.f32 %v3014, %v3015
        %v3017 = vrot.slane %v3016, 4
        %v3018 = vmax.f32 %v3016, %v3017
        %v3019 = vrot.slane %v3018, 2
        %v3020 = vmax.f32 %v3018, %v3019
        %v3021 = vrot.slane %v3020, 1
        %v3022 = vmax.f32 %v3020, %v3021
        %v3023 = vsub.f32 %v2923, %v3022
        %v3024 = vsub.f32 %v2926, %v3022
        %v3025 = vsub.f32 %v2931, %v3022
        %v3026 = vsub.f32 %v2934, %v3022
        %v3027 = vsub.f32 %v2939, %v3022
        %v3028 = vsub.f32 %v2942, %v3022
        %v3029 = vsub.f32 %v2947, %v3022
        %v3030 = vsub.f32 %v2950, %v3022
        %v3031 = vsub.f32 %v2955, %v3022
        %v3032 = vsub.f32 %v2958, %v3022
        %v3033 = vsub.f32 %v2963, %v3022
        %v3034 = vsub.f32 %v2966, %v3022
        %v3035 = vsub.f32 %v2971, %v3022
        %v3036 = vsub.f32 %v2974, %v3022
        %v3037 = vsub.f32 %v2979, %v3022
        %v3038 = vsub.f32 %v2982, %v3022
        %v3039 = vmul.f32 %v3023, 1.442695
        %v3040 = vpow.pop %v3039
        %v3041 = vmul.f32 %v3024, 1.442695
        %v3042 = vpow.pop %v3041
        %v3043 = vmul.f32 %v3025, 1.442695
        %v3044 = vpow.pop %v3043
        %v3045 = vmul.f32 %v3026, 1.442695
        %v3046 = vpow.pop %v3045
        %v3047 = vmul.f32 %v3027, 1.442695
        %v3048 = vpow.pop %v3047
        %v3049 = vmul.f32 %v3028, 1.442695
        %v3050 = vpow.pop %v3049
        %v3051 = vmul.f32 %v3029, 1.442695
        %v3052 = vpow.pop %v3051
        %v3053 = vmul.f32 %v3030, 1.442695
        %v3054 = vpow.pop %v3053
        %v3055 = vmul.f32 %v3031, 1.442695
        %v3056 = vpow.pop %v3055
        %v3057 = vmul.f32 %v3032, 1.442695
        %v3058 = vpow.pop %v3057
        %v3059 = vmul.f32 %v3033, 1.442695
        %v3060 = vpow.pop %v3059
        %v3061 = vmul.f32 %v3034, 1.442695
        %v3062 = vpow.pop %v3061
        %v3063 = vmul.f32 %v3035, 1.442695
        %v3064 = vpow.pop %v3063
        %v3065 = vmul.f32 %v3036, 1.442695
        %v3066 = vpow.pop %v3065
        %v3067 = vmul.f32 %v3037, 1.442695
        %v3068 = vpow.pop %v3067
        %v3069 = vmul.f32 %v3038, 1.442695
        %v3070 = vpow.pop %v3069
        %v3071 = vsel %vm2985, %v3040, 0.0
        %v3072 = vsel %vm2985, %v3042, 0.0
        %v3073 = vadd.f32 %v3071, %v3072
        %v3074 = vsel %vm2985, %v3044, 0.0
        %v3075 = vadd.f32 %v3073, %v3074
        %v3076 = vsel %vm2985, %v3046, 0.0
        %v3077 = vadd.f32 %v3075, %v3076
        %v3078 = vsel %vm2985, %v3048, 0.0
        %v3079 = vadd.f32 %v3077, %v3078
        %v3080 = vsel %vm2985, %v3050, 0.0
        %v3081 = vadd.f32 %v3079, %v3080
        %v3082 = vsel %vm2985, %v3052, 0.0
        %v3083 = vadd.f32 %v3081, %v3082
        %v3084 = vsel %vm2985, %v3054, 0.0
        %v3085 = vadd.f32 %v3083, %v3084
        %v3086 = vsel %vm2985, %v3056, 0.0
        %v3087 = vadd.f32 %v3085, %v3086
        %v3088 = vsel %vm2985, %v3058, 0.0
        %v3089 = vadd.f32 %v3087, %v3088
        %v3090 = vsel %vm2985, %v3060, 0.0
        %v3091 = vadd.f32 %v3089, %v3090
        %v3092 = vsel %vm2985, %v3062, 0.0
        %v3093 = vadd.f32 %v3091, %v3092
        %v3094 = vsel %vm2985, %v3064, 0.0
        %v3095 = vadd.f32 %v3093, %v3094
        %v3096 = vsel %vm2985, %v3066, 0.0
        %v3097 = vadd.f32 %v3095, %v3096
        %v3098 = vsel %vm2985, %v3068, 0.0
        %v3099 = vadd.f32 %v3097, %v3098
        %v3100 = vsel %vm2985, %v3070, 0.0
        %v3101 = vadd.f32 %v3099, %v3100
        %v3102 = vrot.slane %v3101, 4
        %v3103 = vadd.f32 %v3101, %v3102
        %v3104 = vrot.slane %v3103, 2
        %v3105 = vadd.f32 %v3103, %v3104
        %v3106 = vrot.slane %v3105, 1
        %v3107 = vadd.f32 %v3105, %v3106
        %v3108 = vrcp.pop %v3107
        %v3109 = vmul.f32 %v3040, %v3108
        %v3110 = vmul.f32 %v3042, %v3108
        %v3111 = vmul.f32 %v3044, %v3108
        %v3112 = vmul.f32 %v3046, %v3108
        %v3113 = vmul.f32 %v3048, %v3108
        %v3114 = vmul.f32 %v3050, %v3108
        %v3115 = vmul.f32 %v3052, %v3108
        %v3116 = vmul.f32 %v3054, %v3108
        %v3117 = vmul.f32 %v3056, %v3108
        %v3118 = vmul.f32 %v3058, %v3108
        %v3119 = vmul.f32 %v3060, %v3108
        %v3120 = vmul.f32 %v3062, %v3108
        %v3121 = vmul.f32 %v3064, %v3108
        %v3122 = vmul.f32 %v3066, %v3108
        %v3123 = vmul.f32 %v3068, %v3108
        %v3124 = vmul.f32 %v3070, %v3108
        %v3125 = vpack.c.bf16 %v3110, %v3109
        %v3126 = vpack.c.bf16 %v3112, %v3111
        %v3127 = vpack.c.bf16 %v3114, %v3113
        %v3128 = vpack.c.bf16 %v3116, %v3115
        %v3129 = vpack.c.bf16 %v3118, %v3117
        %v3130 = vpack.c.bf16 %v3120, %v3119
        %v3131 = vpack.c.bf16 %v3122, %v3121
        %v3132 = vpack.c.bf16 %v3124, %v3123
        %3135 = vrot.lane.b32.xlu0 %v2719, 64
        %v3136 = vpop.permute.xlu0 %3135
        %3137 = vrot.lane.b32.xlu0 %v2720, 64
        %v3138 = vpop.permute.xlu0 %3137
        %v3142 = vsel %vm2985, %v3125, 0
        %v3145 = vsel %vm2985, %v3126, 0
        %v3148 = vsel %vm2985, %v3127, 0
        %v3151 = vsel %vm2985, %v3128, 0
        %v3154 = vsel %vm2985, %v3129, 0
        %v3157 = vsel %vm2985, %v3130, 0
        %v3160 = vsel %vm2985, %v3131, 0
        %v3163 = vsel %vm2985, %v3132, 0
        %3165 = vmatprep.subr.bf16.mxu0 0
        %3166 = vmatpush1.bf16.msra.mxu0 0
        %3167 = vmatprep.subr.bf16.mxu0 0
        %3168 = vmatpush1.bf16.msra.mxu0 0
        %3169 = vmatprep.subr.bf16.mxu0 0
        %3170 = vmatpush1.bf16.msra.mxu0 0
        %3171 = vmatprep.subr.bf16.mxu0 0
        %3172 = vmatpush1.bf16.msra.mxu0 0
        %3173 = vmatprep.subr.bf16.mxu0 0
        %3174 = vmatpush1.bf16.msra.mxu0 0
        %3175 = vmatprep.subr.bf16.mxu0 0
        %3176 = vmatpush1.bf16.msra.mxu0 0
        %3177 = vmatprep.subr.bf16.mxu0 0
        %3178 = vmatpush1.bf16.msra.mxu0 %v3138
        %3179 = vmatprep.subr.bf16.mxu0 0
        %3180 = vmatpush1.bf16.msra.mxu0 %v3136
        %3181 = vmatprep.subr.bf16.mxu0 0
        %3182 = vmatpush2.bf16.msra.mxu0 0
        %3183 = vmatprep.subr.bf16.mxu0 0
        %3184 = vmatpush2.bf16.msra.mxu0 0
        %3185 = vmatprep.subr.bf16.mxu0 0
        %3186 = vmatpush2.bf16.msra.mxu0 0
        %3187 = vmatprep.subr.bf16.mxu0 0
        %3188 = vmatpush2.bf16.msra.mxu0 0
        %3189 = vmatprep.subr.bf16.mxu0 0
        %3190 = vmatpush2.bf16.msra.mxu0 0
        %3191 = vmatprep.subr.bf16.mxu0 0
        %3192 = vmatpush2.bf16.msra.mxu0 0
        %3193 = vmatprep.subr.bf16.mxu0 0
        %3194 = vmatpush2.bf16.msra.mxu0 0
        %3195 = vmatprep.subr.bf16.mxu0 0
        %3196 = vmatpush2.bf16.msra.mxu0 0
        %3197 = vmatprep.mubr.bf16.mxu0 0
        %3198 = vmatmul.mubr.bf16.gmra.mxu0 %v3142
        %v3199 = vpop.f32.mrf.mxu0
        %v3200 = vadd.f32 0.0, %v3199
        %v3201 = vpop.f32.mrf.mxu0
        %v3202 = vpop.f32.mrf.mxu0
        %v3203 = vadd.f32 0.0, %v3202
        %v3204 = vpop.f32.mrf.mxu0
        %3205 = vmatprep.mubr.bf16.mxu0 0
        %3206 = vmatmul.mubr.bf16.gmra.mxu0 %v3145
        %v3207 = vpop.f32.mrf.mxu0
        %v3208 = vadd.f32 0.0, %v3207
        %v3209 = vpop.f32.mrf.mxu0
        %v3210 = vpop.f32.mrf.mxu0
        %v3211 = vadd.f32 0.0, %v3210
        %v3212 = vpop.f32.mrf.mxu0
        %3213 = vmatprep.mubr.bf16.mxu0 0
        %3214 = vmatmul.mubr.bf16.gmra.mxu0 %v3148
        %v3215 = vpop.f32.mrf.mxu0
        %v3216 = vadd.f32 0.0, %v3215
        %v3217 = vpop.f32.mrf.mxu0
        %v3218 = vpop.f32.mrf.mxu0
        %v3219 = vadd.f32 0.0, %v3218
        %v3220 = vpop.f32.mrf.mxu0
        %3221 = vmatprep.mubr.bf16.mxu0 0
        %3222 = vmatmul.mubr.bf16.gmra.mxu0 %v3151
        %v3223 = vpop.f32.mrf.mxu0
        %v3224 = vadd.f32 0.0, %v3223
        %v3225 = vpop.f32.mrf.mxu0
        %v3226 = vpop.f32.mrf.mxu0
        %v3227 = vadd.f32 0.0, %v3226
        %v3228 = vpop.f32.mrf.mxu0
        %3229 = vmatprep.mubr.bf16.mxu0 0
        %3230 = vmatmul.mubr.bf16.gmra.mxu0 %v3154
        %v3231 = vpop.f32.mrf.mxu0
        %v3232 = vadd.f32 0.0, %v3231
        %v3233 = vpop.f32.mrf.mxu0
        %v3234 = vpop.f32.mrf.mxu0
        %v3235 = vadd.f32 0.0, %v3234
        %v3236 = vpop.f32.mrf.mxu0
        %3237 = vmatprep.mubr.bf16.mxu0 0
        %3238 = vmatmul.mubr.bf16.gmra.mxu0 %v3157
        %v3239 = vpop.f32.mrf.mxu0
        %v3240 = vadd.f32 0.0, %v3239
        %v3241 = vpop.f32.mrf.mxu0
        %v3242 = vpop.f32.mrf.mxu0
        %v3243 = vadd.f32 0.0, %v3242
        %v3244 = vpop.f32.mrf.mxu0
        %3245 = vmatprep.mubr.bf16.mxu0 0
        %3246 = vmatmul.mubr.bf16.gmra.mxu0 %v3160
        %v3247 = vpop.f32.mrf.mxu0
        %v3248 = vadd.f32 0.0, %v3247
        %v3249 = vpop.f32.mrf.mxu0
        %v3250 = vpop.f32.mrf.mxu0
        %v3251 = vadd.f32 0.0, %v3250
        %v3252 = vpop.f32.mrf.mxu0
        %3253 = vmatprep.mubr.bf16.mxu0 0
        %3254 = vmatmul.mubr.bf16.gmra.mxu0 %v3163
        %v3255 = vpop.f32.mrf.mxu0
        %v3256 = vadd.f32 0.0, %v3255
        %v3257 = vpop.f32.mrf.mxu0
        %v3258 = vpop.f32.mrf.mxu0
        %v3259 = vadd.f32 0.0, %v3258
        %v3260 = vpop.f32.mrf.mxu0
        %3261 = vdwg.mxu0
        %3264 = vrot.lane.b32.xlu0 %v2729, 64
        %v3265 = vpop.permute.xlu0 %3264
        %3266 = vrot.lane.b32.xlu0 %v2730, 64
        %v3267 = vpop.permute.xlu0 %3266
        %3270 = vmatprep.subr.bf16.mxu0 0
        %3271 = vmatpush1.bf16.msra.mxu0 0
        %3272 = vmatprep.subr.bf16.mxu0 0
        %3273 = vmatpush1.bf16.msra.mxu0 0
        %3274 = vmatprep.subr.bf16.mxu0 0
        %3275 = vmatpush1.bf16.msra.mxu0 0
        %3276 = vmatprep.subr.bf16.mxu0 0
        %3277 = vmatpush1.bf16.msra.mxu0 0
        %3278 = vmatprep.subr.bf16.mxu0 0
        %3279 = vmatpush1.bf16.msra.mxu0 0
        %3280 = vmatprep.subr.bf16.mxu0 0
        %3281 = vmatpush1.bf16.msra.mxu0 0
        %3282 = vmatprep.subr.bf16.mxu0 0
        %3283 = vmatpush1.bf16.msra.mxu0 %v3267
        %3284 = vmatprep.subr.bf16.mxu0 0
        %3285 = vmatpush1.bf16.msra.mxu0 %v3265
        %3286 = vmatprep.subr.bf16.mxu0 0
        %3287 = vmatpush2.bf16.msra.mxu0 0
        %3288 = vmatprep.subr.bf16.mxu0 0
        %3289 = vmatpush2.bf16.msra.mxu0 0
        %3290 = vmatprep.subr.bf16.mxu0 0
        %3291 = vmatpush2.bf16.msra.mxu0 0
        %3292 = vmatprep.subr.bf16.mxu0 0
        %3293 = vmatpush2.bf16.msra.mxu0 0
        %3294 = vmatprep.subr.bf16.mxu0 0
        %3295 = vmatpush2.bf16.msra.mxu0 0
        %3296 = vmatprep.subr.bf16.mxu0 0
        %3297 = vmatpush2.bf16.msra.mxu0 0
        %3298 = vmatprep.subr.bf16.mxu0 0
        %3299 = vmatpush2.bf16.msra.mxu0 0
        %3300 = vmatprep.subr.bf16.mxu0 0
        %3301 = vmatpush2.bf16.msra.mxu0 0
        %3302 = vmatprep.mubr.bf16.mxu0 0
        %3303 = vmatmul.mubr.bf16.gmra.mxu0 %v3142
        %v3304 = vpop.f32.mrf.mxu0
        %v3305 = vadd.f32 0.0, %v3304
        %v3306 = vpop.f32.mrf.mxu0
        %v3307 = vpop.f32.mrf.mxu0
        %v3308 = vadd.f32 0.0, %v3307
        %v3309 = vpop.f32.mrf.mxu0
        %3310 = vmatprep.mubr.bf16.mxu0 0
        %3311 = vmatmul.mubr.bf16.gmra.mxu0 %v3145
        %v3312 = vpop.f32.mrf.mxu0
        %v3313 = vadd.f32 0.0, %v3312
        %v3314 = vpop.f32.mrf.mxu0
        %v3315 = vpop.f32.mrf.mxu0
        %v3316 = vadd.f32 0.0, %v3315
        %v3317 = vpop.f32.mrf.mxu0
        %3318 = vmatprep.mubr.bf16.mxu0 0
        %3319 = vmatmul.mubr.bf16.gmra.mxu0 %v3148
        %v3320 = vpop.f32.mrf.mxu0
        %v3321 = vadd.f32 0.0, %v3320
        %v3322 = vpop.f32.mrf.mxu0
        %v3323 = vpop.f32.mrf.mxu0
        %v3324 = vadd.f32 0.0, %v3323
        %v3325 = vpop.f32.mrf.mxu0
        %3326 = vmatprep.mubr.bf16.mxu0 0
        %3327 = vmatmul.mubr.bf16.gmra.mxu0 %v3151
        %v3328 = vpop.f32.mrf.mxu0
        %v3329 = vadd.f32 0.0, %v3328
        %v3330 = vpop.f32.mrf.mxu0
        %v3331 = vpop.f32.mrf.mxu0
        %v3332 = vadd.f32 0.0, %v3331
        %v3333 = vpop.f32.mrf.mxu0
        %3334 = vmatprep.mubr.bf16.mxu0 0
        %3335 = vmatmul.mubr.bf16.gmra.mxu0 %v3154
        %v3336 = vpop.f32.mrf.mxu0
        %v3337 = vadd.f32 0.0, %v3336
        %v3338 = vpop.f32.mrf.mxu0
        %v3339 = vpop.f32.mrf.mxu0
        %v3340 = vadd.f32 0.0, %v3339
        %v3341 = vpop.f32.mrf.mxu0
        %3342 = vmatprep.mubr.bf16.mxu0 0
        %3343 = vmatmul.mubr.bf16.gmra.mxu0 %v3157
        %v3344 = vpop.f32.mrf.mxu0
        %v3345 = vadd.f32 0.0, %v3344
        %v3346 = vpop.f32.mrf.mxu0
        %v3347 = vpop.f32.mrf.mxu0
        %v3348 = vadd.f32 0.0, %v3347
        %v3349 = vpop.f32.mrf.mxu0
        %3350 = vmatprep.mubr.bf16.mxu0 0
        %3351 = vmatmul.mubr.bf16.gmra.mxu0 %v3160
        %v3352 = vpop.f32.mrf.mxu0
        %v3353 = vadd.f32 0.0, %v3352
        %v3354 = vpop.f32.mrf.mxu0
        %v3355 = vpop.f32.mrf.mxu0
        %v3356 = vadd.f32 0.0, %v3355
        %v3357 = vpop.f32.mrf.mxu0
        %3358 = vmatprep.mubr.bf16.mxu0 0
        %3359 = vmatmul.mubr.bf16.gmra.mxu0 %v3163
        %v3360 = vpop.f32.mrf.mxu0
        %v3361 = vadd.f32 0.0, %v3360
        %v3362 = vpop.f32.mrf.mxu0
        %v3363 = vpop.f32.mrf.mxu0
        %v3364 = vadd.f32 0.0, %v3363
        %v3365 = vpop.f32.mrf.mxu0
        %3366 = vdwg.mxu0
        %v3367 = vpack.c.bf16 %v3203, %v3200
        %v3368 = vpack.c.bf16 %v3211, %v3208
        %v3369 = vpack.c.bf16 %v3219, %v3216
        %v3370 = vpack.c.bf16 %v3227, %v3224
        %v3371 = vpack.c.bf16 %v3235, %v3232
        %v3372 = vpack.c.bf16 %v3243, %v3240
        %v3373 = vpack.c.bf16 %v3251, %v3248
        %v3374 = vpack.c.bf16 %v3259, %v3256
        %v3375 = vld [vmem:[%s15] sm:$0xf]
        %v3376 = vld [vmem:[%s15 + $0x4] sm:$0xf]
        %v3377 = vld [vmem:[%s15 + $0x8] sm:$0xf]
        %v3378 = vld [vmem:[%s15 + $0xc] sm:$0xf]
        %v3379 = vld [vmem:[%s15 + $0x10] sm:$0xf]
        %v3380 = vld [vmem:[%s15 + $0x14] sm:$0xf]
        %v3381 = vld [vmem:[%s15 + $0x18] sm:$0xf]
        %v3382 = vld [vmem:[%s15 + $0x1c] sm:$0xf]
        %v3383 = vld [vmem:[#allocation2] sm:$0xff]
        %v3384 = vld [vmem:[#allocation2 + $0x8] sm:$0xff]
        %v3385 = vld [vmem:[#allocation2 + $0x10] sm:$0xff]
        %v3386 = vld [vmem:[#allocation2 + $0x18] sm:$0xff]
        %v3387 = vld [vmem:[#allocation2 + $0x20] sm:$0xff]
        %v3388 = vld [vmem:[#allocation2 + $0x28] sm:$0xff]
        %v3389 = vld [vmem:[#allocation2 + $0x30] sm:$0xff]
        %v3390 = vld [vmem:[#allocation2 + $0x38] sm:$0xff]
        %v3391 = vld [vmem:[#allocation2 + $0x40] sm:$0xff]
        %v3392 = vld [vmem:[#allocation2 + $0x48] sm:$0xff]
        %v3393 = vld [vmem:[#allocation2 + $0x50] sm:$0xff]
        %v3394 = vld [vmem:[#allocation2 + $0x58] sm:$0xff]
        %v3395 = vld [vmem:[#allocation2 + $0x60] sm:$0xff]
        %v3396 = vld [vmem:[#allocation2 + $0x68] sm:$0xff]
        %v3397 = vld [vmem:[#allocation2 + $0x70] sm:$0xff]
        %v3398 = vld [vmem:[#allocation2 + $0x78] sm:$0xff]
        %v3407 = vunpack.c.l.b16 %v3375
        %v3408 = vunpack.c.l.b16 %v3376
        %v3409 = vunpack.c.l.b16 %v3377
        %v3410 = vunpack.c.l.b16 %v3378
        %v3411 = vunpack.c.l.b16 %v3379
        %v3412 = vunpack.c.l.b16 %v3380
        %v3413 = vunpack.c.l.b16 %v3381
        %v3414 = vunpack.c.l.b16 %v3382
        %v3415 = vpack.c.b16 %v3408, %v3407
        %v3416 = vpack.c.b16 %v3410, %v3409
        %v3417 = vpack.c.b16 %v3412, %v3411
        %v3418 = vpack.c.b16 %v3414, %v3413
        %v3424 = vsel %vm1693, %v3367, 0
        %v3427 = vsel %vm1693, %v3368, 0
        %v3430 = vsel %vm1693, %v3369, 0
        %v3433 = vsel %vm1693, %v3370, 0
        %v3436 = vsel %vm1693, %v3371, 0
        %v3439 = vsel %vm1693, %v3372, 0
        %v3442 = vsel %vm1693, %v3373, 0
        %v3445 = vsel %vm1693, %v3374, 0
        %3447 = vmatprep.subr.bf16.mxu0 0
        %3448 = vmatpush1.bf16.msra.mxu0 0
        %3449 = vmatprep.subr.bf16.mxu0 0
        %3450 = vmatpush1.bf16.msra.mxu0 0
        %3451 = vmatprep.subr.bf16.mxu0 0
        %3452 = vmatpush1.bf16.msra.mxu0 0
        %3453 = vmatprep.subr.bf16.mxu0 0
        %3454 = vmatpush1.bf16.msra.mxu0 0
        %3455 = vmatprep.subr.bf16.mxu0 0
        %3456 = vmatpush1.bf16.msra.mxu0 %v3418
        %3457 = vmatprep.subr.bf16.mxu0 0
        %3458 = vmatpush1.bf16.msra.mxu0 %v3417
        %3459 = vmatprep.subr.bf16.mxu0 0
        %3460 = vmatpush1.bf16.msra.mxu0 %v3416
        %3461 = vmatprep.subr.bf16.mxu0 0
        %3462 = vmatpush1.bf16.msra.mxu0 %v3415
        %3463 = vmatprep.subr.bf16.mxu0 0
        %3464 = vmatpush2.bf16.msra.mxu0 0
        %3465 = vmatprep.subr.bf16.mxu0 0
        %3466 = vmatpush2.bf16.msra.mxu0 0
        %3467 = vmatprep.subr.bf16.mxu0 0
        %3468 = vmatpush2.bf16.msra.mxu0 0
        %3469 = vmatprep.subr.bf16.mxu0 0
        %3470 = vmatpush2.bf16.msra.mxu0 0
        %3471 = vmatprep.subr.bf16.mxu0 0
        %3472 = vmatpush2.bf16.msra.mxu0 0
        %3473 = vmatprep.subr.bf16.mxu0 0
        %3474 = vmatpush2.bf16.msra.mxu0 0
        %3475 = vmatprep.subr.bf16.mxu0 0
        %3476 = vmatpush2.bf16.msra.mxu0 0
        %3477 = vmatprep.subr.bf16.mxu0 0
        %3478 = vmatpush2.bf16.msra.mxu0 0
        %3479 = vmatprep.mubr.bf16.mxu0 0
        %3480 = vmatmul.mubr.bf16.gmra.mxu0 %v3424
        %v3481 = vpop.f32.mrf.mxu0
        %v3482 = vadd.f32 %v3383, %v3481
        %v3483 = vpop.f32.mrf.mxu0
        %v3484 = vpop.f32.mrf.mxu0
        %v3485 = vadd.f32 %v3384, %v3484
        %v3486 = vpop.f32.mrf.mxu0
        %3487 = vmatprep.mubr.bf16.mxu0 0
        %3488 = vmatmul.mubr.bf16.gmra.mxu0 %v3427
        %v3489 = vpop.f32.mrf.mxu0
        %v3490 = vadd.f32 %v3385, %v3489
        %v3491 = vpop.f32.mrf.mxu0
        %v3492 = vpop.f32.mrf.mxu0
        %v3493 = vadd.f32 %v3386, %v3492
        %v3494 = vpop.f32.mrf.mxu0
        %3495 = vmatprep.mubr.bf16.mxu0 0
        %3496 = vmatmul.mubr.bf16.gmra.mxu0 %v3430
        %v3497 = vpop.f32.mrf.mxu0
        %v3498 = vadd.f32 %v3387, %v3497
        %v3499 = vpop.f32.mrf.mxu0
        %v3500 = vpop.f32.mrf.mxu0
        %v3501 = vadd.f32 %v3388, %v3500
        %v3502 = vpop.f32.mrf.mxu0
        %3503 = vmatprep.mubr.bf16.mxu0 0
        %3504 = vmatmul.mubr.bf16.gmra.mxu0 %v3433
        %v3505 = vpop.f32.mrf.mxu0
        %v3506 = vadd.f32 %v3389, %v3505
        %v3507 = vpop.f32.mrf.mxu0
        %v3508 = vpop.f32.mrf.mxu0
        %v3509 = vadd.f32 %v3390, %v3508
        %v3510 = vpop.f32.mrf.mxu0
        %3511 = vmatprep.mubr.bf16.mxu0 0
        %3512 = vmatmul.mubr.bf16.gmra.mxu0 %v3436
        %v3513 = vpop.f32.mrf.mxu0
        %v3514 = vadd.f32 %v3391, %v3513
        %v3515 = vpop.f32.mrf.mxu0
        %v3516 = vpop.f32.mrf.mxu0
        %v3517 = vadd.f32 %v3392, %v3516
        %v3518 = vpop.f32.mrf.mxu0
        %3519 = vmatprep.mubr.bf16.mxu0 0
        %3520 = vmatmul.mubr.bf16.gmra.mxu0 %v3439
        %v3521 = vpop.f32.mrf.mxu0
        %v3522 = vadd.f32 %v3393, %v3521
        %v3523 = vpop.f32.mrf.mxu0
        %v3524 = vpop.f32.mrf.mxu0
        %v3525 = vadd.f32 %v3394, %v3524
        %v3526 = vpop.f32.mrf.mxu0
        %3527 = vmatprep.mubr.bf16.mxu0 0
        %3528 = vmatmul.mubr.bf16.gmra.mxu0 %v3442
        %v3529 = vpop.f32.mrf.mxu0
        %v3530 = vadd.f32 %v3395, %v3529
        %v3531 = vpop.f32.mrf.mxu0
        %v3532 = vpop.f32.mrf.mxu0
        %v3533 = vadd.f32 %v3396, %v3532
        %v3534 = vpop.f32.mrf.mxu0
        %3535 = vmatprep.mubr.bf16.mxu0 0
        %3536 = vmatmul.mubr.bf16.gmra.mxu0 %v3445
        %v3537 = vpop.f32.mrf.mxu0
        %v3538 = vadd.f32 %v3397, %v3537
        %v3539 = vpop.f32.mrf.mxu0
        %v3540 = vpop.f32.mrf.mxu0
        %v3541 = vadd.f32 %v3398, %v3540
        %v3542 = vpop.f32.mrf.mxu0
        %3543 = vdwg.mxu0
        %v3544 = vpack.c.bf16 %v3308, %v3305
        %v3545 = vpack.c.bf16 %v3316, %v3313
        %v3546 = vpack.c.bf16 %v3324, %v3321
        %v3547 = vpack.c.bf16 %v3332, %v3329
        %v3548 = vpack.c.bf16 %v3340, %v3337
        %v3549 = vpack.c.bf16 %v3348, %v3345
        %v3550 = vpack.c.bf16 %v3356, %v3353
        %v3551 = vpack.c.bf16 %v3364, %v3361
        %v3553 = vsel %vm1693, %v3544, 0
        %v3556 = vsel %vm1693, %v3545, 0
        %v3559 = vsel %vm1693, %v3546, 0
        %v3562 = vsel %vm1693, %v3547, 0
        %v3565 = vsel %vm1693, %v3548, 0
        %v3568 = vsel %vm1693, %v3549, 0
        %v3571 = vsel %vm1693, %v3550, 0
        %v3574 = vsel %vm1693, %v3551, 0
        %3576 = vmatprep.subr.bf16.mxu0 0
        %3577 = vmatpush1.bf16.msra.mxu0 0
        %3578 = vmatprep.subr.bf16.mxu0 0
        %3579 = vmatpush1.bf16.msra.mxu0 0
        %3580 = vmatprep.subr.bf16.mxu0 0
        %3581 = vmatpush1.bf16.msra.mxu0 0
        %3582 = vmatprep.subr.bf16.mxu0 0
        %3583 = vmatpush1.bf16.msra.mxu0 0
        %3584 = vmatprep.subr.bf16.mxu0 0
        %3585 = vmatpush1.bf16.msra.mxu0 %v3418
        %3586 = vmatprep.subr.bf16.mxu0 0
        %3587 = vmatpush1.bf16.msra.mxu0 %v3417
        %3588 = vmatprep.subr.bf16.mxu0 0
        %3589 = vmatpush1.bf16.msra.mxu0 %v3416
        %3590 = vmatprep.subr.bf16.mxu0 0
        %3591 = vmatpush1.bf16.msra.mxu0 %v3415
        %3592 = vmatprep.subr.bf16.mxu0 0
        %3593 = vmatpush2.bf16.msra.mxu0 0
        %3594 = vmatprep.subr.bf16.mxu0 0
        %3595 = vmatpush2.bf16.msra.mxu0 0
        %3596 = vmatprep.subr.bf16.mxu0 0
        %3597 = vmatpush2.bf16.msra.mxu0 0
        %3598 = vmatprep.subr.bf16.mxu0 0
        %3599 = vmatpush2.bf16.msra.mxu0 0
        %3600 = vmatprep.subr.bf16.mxu0 0
        %3601 = vmatpush2.bf16.msra.mxu0 0
        %3602 = vmatprep.subr.bf16.mxu0 0
        %3603 = vmatpush2.bf16.msra.mxu0 0
        %3604 = vmatprep.subr.bf16.mxu0 0
        %3605 = vmatpush2.bf16.msra.mxu0 0
        %3606 = vmatprep.subr.bf16.mxu0 0
        %3607 = vmatpush2.bf16.msra.mxu0 0
        %3608 = vmatprep.mubr.bf16.mxu0 0
        %3609 = vmatmul.mubr.bf16.gmra.mxu0 %v3553
        %v3610 = vpop.f32.mrf.mxu0
        %v3611 = vadd.f32 %v2208, %v3610
        %v3612 = vpop.f32.mrf.mxu0
        %v3613 = vpop.f32.mrf.mxu0
        %v3614 = vadd.f32 %v2209, %v3613
        %v3615 = vpop.f32.mrf.mxu0
        %3616 = vmatprep.mubr.bf16.mxu0 0
        %3617 = vmatmul.mubr.bf16.gmra.mxu0 %v3556
        %v3618 = vpop.f32.mrf.mxu0
        %v3619 = vadd.f32 %v2210, %v3618
        %v3620 = vpop.f32.mrf.mxu0
        %v3621 = vpop.f32.mrf.mxu0
        %v3622 = vadd.f32 %v2211, %v3621
        %v3623 = vpop.f32.mrf.mxu0
        %3624 = vmatprep.mubr.bf16.mxu0 0
        %3625 = vmatmul.mubr.bf16.gmra.mxu0 %v3559
        %v3626 = vpop.f32.mrf.mxu0
        %v3627 = vadd.f32 %v2212, %v3626
        %v3628 = vpop.f32.mrf.mxu0
        %v3629 = vpop.f32.mrf.mxu0
        %v3630 = vadd.f32 %v2213, %v3629
        %v3631 = vpop.f32.mrf.mxu0
        %3632 = vmatprep.mubr.bf16.mxu0 0
        %3633 = vmatmul.mubr.bf16.gmra.mxu0 %v3562
        %v3634 = vpop.f32.mrf.mxu0
        %v3635 = vadd.f32 %v2214, %v3634
        %v3636 = vpop.f32.mrf.mxu0
        %v3637 = vpop.f32.mrf.mxu0
        %v3638 = vadd.f32 %v2215, %v3637
        %v3639 = vpop.f32.mrf.mxu0
        %3640 = vmatprep.mubr.bf16.mxu0 0
        %3641 = vmatmul.mubr.bf16.gmra.mxu0 %v3565
        %v3642 = vpop.f32.mrf.mxu0
        %v3643 = vadd.f32 %v2216, %v3642
        %v3644 = vpop.f32.mrf.mxu0
        %v3645 = vpop.f32.mrf.mxu0
        %v3646 = vadd.f32 %v2217, %v3645
        %v3647 = vpop.f32.mrf.mxu0
        %3648 = vmatprep.mubr.bf16.mxu0 0
        %3649 = vmatmul.mubr.bf16.gmra.mxu0 %v3568
        %v3650 = vpop.f32.mrf.mxu0
        %v3651 = vadd.f32 %v2218, %v3650
        %v3652 = vpop.f32.mrf.mxu0
        %v3653 = vpop.f32.mrf.mxu0
        %v3654 = vadd.f32 %v2219, %v3653
        %v3655 = vpop.f32.mrf.mxu0
        %3656 = vmatprep.mubr.bf16.mxu0 0
        %3657 = vmatmul.mubr.bf16.gmra.mxu0 %v3571
        %v3658 = vpop.f32.mrf.mxu0
        %v3659 = vadd.f32 %v2220, %v3658
        %v3660 = vpop.f32.mrf.mxu0
        %v3661 = vpop.f32.mrf.mxu0
        %v3662 = vadd.f32 %v2221, %v3661
        %v3663 = vpop.f32.mrf.mxu0
        %3664 = vmatprep.mubr.bf16.mxu0 0
        %3665 = vmatmul.mubr.bf16.gmra.mxu0 %v3574
        %v3666 = vpop.f32.mrf.mxu0
        %v3667 = vadd.f32 %v2222, %v3666
        %v3668 = vpop.f32.mrf.mxu0
        %v3669 = vpop.f32.mrf.mxu0
        %v3670 = vadd.f32 %v2223, %v3669
        %v3671 = vpop.f32.mrf.mxu0
        %3672 = vdwg.mxu0
        %v3673 = vmax.f32 %v3482, 0.0
        %v3674 = vmax.f32 %v3485, 0.0
        %v3675 = vmax.f32 %v3490, 0.0
        %v3676 = vmax.f32 %v3493, 0.0
        %v3677 = vmax.f32 %v3498, 0.0
        %v3678 = vmax.f32 %v3501, 0.0
        %v3679 = vmax.f32 %v3506, 0.0
        %v3680 = vmax.f32 %v3509, 0.0
        %v3681 = vmax.f32 %v3514, 0.0
        %v3682 = vmax.f32 %v3517, 0.0
        %v3683 = vmax.f32 %v3522, 0.0
        %v3684 = vmax.f32 %v3525, 0.0
        %v3685 = vmax.f32 %v3530, 0.0
        %v3686 = vmax.f32 %v3533, 0.0
        %v3687 = vmax.f32 %v3538, 0.0
        %v3688 = vmax.f32 %v3541, 0.0
        %3689 = vst [vmem:[%s544] sm:$0xff] %v3673
        %3690 = vst [vmem:[%s544 + $0x8] sm:$0xff] %v3674
        %3691 = vst [vmem:[%s544 + $0x10] sm:$0xff] %v3675
        %3692 = vst [vmem:[%s544 + $0x18] sm:$0xff] %v3676
        %3693 = vst [vmem:[%s544 + $0x20] sm:$0xff] %v3677
        %3694 = vst [vmem:[%s544 + $0x28] sm:$0xff] %v3678
        %3695 = vst [vmem:[%s544 + $0x30] sm:$0xff] %v3679
        %3696 = vst [vmem:[%s544 + $0x38] sm:$0xff] %v3680
        %3697 = vst [vmem:[%s544 + $0x40] sm:$0xff] %v3681
        %3698 = vst [vmem:[%s544 + $0x48] sm:$0xff] %v3682
        %3699 = vst [vmem:[%s544 + $0x50] sm:$0xff] %v3683
        %3700 = vst [vmem:[%s544 + $0x58] sm:$0xff] %v3684
        %3701 = vst [vmem:[%s544 + $0x60] sm:$0xff] %v3685
        %3702 = vst [vmem:[%s544 + $0x68] sm:$0xff] %v3686
        %3703 = vst [vmem:[%s544 + $0x70] sm:$0xff] %v3687
        %3704 = vst [vmem:[%s544 + $0x78] sm:$0xff] %v3688
        %v3705 = vmax.f32 %v3611, 0.0
        %v3706 = vmax.f32 %v3614, 0.0
        %v3707 = vmax.f32 %v3619, 0.0
        %v3708 = vmax.f32 %v3622, 0.0
        %v3709 = vmax.f32 %v3627, 0.0
        %v3710 = vmax.f32 %v3630, 0.0
        %v3711 = vmax.f32 %v3635, 0.0
        %v3712 = vmax.f32 %v3638, 0.0
        %v3713 = vmax.f32 %v3643, 0.0
        %v3714 = vmax.f32 %v3646, 0.0
        %v3715 = vmax.f32 %v3651, 0.0
        %v3716 = vmax.f32 %v3654, 0.0
        %v3717 = vmax.f32 %v3659, 0.0
        %v3718 = vmax.f32 %v3662, 0.0
        %v3719 = vmax.f32 %v3667, 0.0
        %v3720 = vmax.f32 %v3670, 0.0
        %3721 = vst [vmem:[%s544 + $0x80] sm:$0xff] %v3705
        %3722 = vst [vmem:[%s544 + $0x88] sm:$0xff] %v3706
        %3723 = vst [vmem:[%s544 + $0x90] sm:$0xff] %v3707
        %3724 = vst [vmem:[%s544 + $0x98] sm:$0xff] %v3708
        %3725 = vst [vmem:[%s544 + $0xa0] sm:$0xff] %v3709
        %3726 = vst [vmem:[%s544 + $0xa8] sm:$0xff] %v3710
        %3727 = vst [vmem:[%s544 + $0xb0] sm:$0xff] %v3711
        %3728 = vst [vmem:[%s544 + $0xb8] sm:$0xff] %v3712
        %3729 = vst [vmem:[%s544 + $0xc0] sm:$0xff] %v3713
        %3730 = vst [vmem:[%s544 + $0xc8] sm:$0xff] %v3714
        %3731 = vst [vmem:[%s544 + $0xd0] sm:$0xff] %v3715
        %3732 = vst [vmem:[%s544 + $0xd8] sm:$0xff] %v3716
        %3733 = vst [vmem:[%s544 + $0xe0] sm:$0xff] %v3717
        %3734 = vst [vmem:[%s544 + $0xe8] sm:$0xff] %v3718
        %3735 = vst [vmem:[%s544 + $0xf0] sm:$0xff] %v3719
        %3736 = vst [vmem:[%s544 + $0xf8] sm:$0xff] %v3720
        %s3737 = sand.u32 %s389, 1
        %s3738 = scalar_lea.sflag [#allocation4], %s3737
        %s3739 = sand.u32 %s389, 1
        %s3740 = smul.addr %s3739, 256
        %s3741 = scalar_lea.vmem [#allocation3], %s3740
        // Predicated region
        $region85: #{_lambda_.1} parent=83 // pred_check
          %p3742 = pneg %p399
        $region86: #{_lambda_.1} parent=83 // pred_check_branch
          %3744 = sbr.rel (%p3742) target = $region88
        $region87: #{_lambda_.1} parent=83 // pred_region
          %s3746 = ssub.s32 4096, 4096
          %3747 = vsyncadd %s3738, %s3746
          %s3748 = smul.addr %s30, 32
          %s3749 = smul.addr %s3748, 128
          %s3750 = scalar_lea.hbm %s16, %s3749
          %s3751 = sshll.u32 %s3741, 4
          %s3752 = int_to_ptr.vmem [resolvable:$true] %s3751
          %3757 = dma.vmem_to_hbm [thread:$0]  %s3752, 4096, %s3750, %s3738, 128, 128, 8
        $region88: #{_lambda_.1} parent=83 // pred_fallthru
          _
      $region84: #{_lambda_.1} parent=5 // pred_fallthru
        _
      %p3758 = scmp.le.s32.totalorder 2, %s25
      // Predicated region
      $region89: #{_lambda_.1} parent=5 // pred_check
        %p3759 = pneg %p3758
      $region90: #{_lambda_.1} parent=5 // pred_check_branch
        %3761 = sbr.rel (%p3759) target = $region92
      $region91: #{_lambda_.1} parent=5 // pred_region
        %s3762 = ssub.s32 %s25, 2
        // Predicated region
        $region93: #{_lambda_.1} parent=91 // pred_check
          %p3763 = pneg %p405
        $region94: #{_lambda_.1} parent=91 // pred_check_branch
          %3765 = sbr.rel (%p3763) target = $region96
        $region95: #{_lambda_.1} parent=91 // pred_region
          %s3766 = sand.u32 %s390, 1
          %s3767 = scalar_lea.sflag [#allocation4], %s3766
          %s3768 = sand.u32 %s390, 1
          %s3769 = smul.addr %s3768, 256
          %s3770 = scalar_lea.vmem [#allocation3], %s3769
          %3771 = dma.done %s3767, 4096
        $region96: #{_lambda_.1} parent=91 // pred_fallthru
          _
      $region92: #{_lambda_.1} parent=5 // pred_fallthru
        _
    $region6: #{_lambda_.1} parent=1 // loop_footer
      %s29 = sadd.s32 1, %s25
    $region7: #{_lambda_.1} parent=1 // loop_footer_branch
      %24 = sbr.rel target = $region3
    $region8: #{_lambda_.1} parent=1 // loop_exit
      _
    %3772 = vsyncpa [#allocation4], 1
    %s3773 = scalar_lea.sflag [#allocation4], 1
    %3774 = vsyncpa %s3773, 1

</llo_original>
